<compile_context>
chip_gen: v7x
topology: tpu7x:2x2x1
jax: 0.10.0
libtpu: 0.0.40
codegen_flags: <defaults>
</compile_context>

<pallas_src>
import jax
import jax.numpy as jnp
from jax import lax
from jax.experimental import pallas as pl
from jax.experimental.pallas import tpu as pltpu

EPS = 1e-5


def ibasic_block_kernel(x_ref, w1_ref, w2_ref, vec_ref, o_ref,
                        pad_ref, col_ref):
    """One batch element per grid step. fp32, NHWC, channels padded to CP."""
    H, W, CP = x_ref.shape[1], x_ref.shape[2], x_ref.shape[3]
    HW = H * W

    vecs = vec_ref[...]                       # (8, CP) packed per-channel vecs
    s1 = vecs[0:1, :]                         # bn1 scale
    b1 = vecs[1:2, :]                         # bn1 shift
    b2 = vecs[2:3, :]                         # bn2 shift (scale folded into w1)
    alpha = vecs[3:4, :]                      # PReLU slope
    b3 = vecs[4:5, :]                         # bn3 shift (scale folded into w2)

    # Zero only the 1-pixel border of the padded scratch (corners written
    # once). The interior is fully overwritten before each conv and the
    # border is never written, so this covers both convs of this grid step.
    # Done every step (not only step 0) so it stays correct when the batch
    # axis is sharded across TensorCores (each core has its own scratch).
    pad_ref[0:1, :, :] = jnp.zeros((1, W + 2, CP), jnp.float32)
    pad_ref[H + 1:H + 2, :, :] = jnp.zeros((1, W + 2, CP), jnp.float32)
    pad_ref[1:H + 1, 0:1, :] = jnp.zeros((H, 1, CP), jnp.float32)
    pad_ref[1:H + 1, W + 1:W + 2, :] = jnp.zeros((H, 1, CP), jnp.float32)

    x2 = x_ref[0].reshape(HW, CP)             # identity branch (pre-bn1)

    # --- bn1 (inference affine form) ---
    t = x2 * s1 + b1

    def conv3x3(t2, w_ref):
        # Write the interior of the zero-bordered padded plane.
        pad_ref[1:H + 1, 1:W + 1, :] = t2.reshape(H, W, CP)
        # Build im2col; column blocks ordered (dy, dx, ci) to match the
        # reshaped HWIO weights. Column-block stores are lane-aligned
        # (offsets are multiples of 128); only the 3 per-dx slices are
        # sublane-unaligned, and each is reused for all 3 dy values.
        for dx in range(3):
            s_dx = pad_ref[:, dx:dx + W, :]               # (H+2, W, CP)
            for dy in range(3):
                j = 3 * dy + dx
                col_ref[:, j * CP:(j + 1) * CP] = (
                    s_dx[dy:dy + H].reshape(HW, CP))
        # Single K = 9*CP matmul on the MXU (accumulation stays inside MXU).
        # TODO(synk): casting im2col + weights to bf16 (f32 accumulate) would
        # ~2x MXU throughput on v6e/v7x but exceeds the 1e-3 correctness
        # tolerance vs the f32 reference; kept f32.
        return jnp.dot(col_ref[...], w_ref[...],
                       preferred_element_type=jnp.float32)

    # --- conv1 (bn2 scale pre-folded) + bn2 shift + PReLU ---
    t = conv3x3(t, w1_ref) + b2
    t = jnp.where(t >= 0, t, alpha * t)

    # --- conv2 (bn3 scale pre-folded) + bn3 shift + residual add ---
    t = conv3x3(t, w2_ref) + b3 + x2

    o_ref[0] = t.reshape(H, W, CP)


def ibasic_block(x_nchw, params):
    """x_nchw: (N, C, H, W) float32 (PyTorch layout). Returns same layout."""
    # TODO(synk): stride>1 / downsample branch of IBasicBlock not implemented
    # (default config: stride=1, downsample=None, inplanes == planes).
    x = jnp.transpose(x_nchw, (0, 2, 3, 1)).astype(jnp.float32)   # NHWC
    N, H, W, C = x.shape
    CP = max(128, -(-C // 128) * 128)          # lane-dense channel padding

    def bn_affine(g, b, m, v):
        scale = g / jnp.sqrt(v + EPS)
        shift = b - m * scale
        return scale, shift

    s1, b1 = bn_affine(*params["bn1"])
    s2, b2 = bn_affine(*params["bn2"])
    s3, b3 = bn_affine(*params["bn3"])
    alpha = params["alpha"]

    # Fold bn2 / bn3 scales into the conv weights along Cout (shifts stay
    # in-kernel; bn1 stays a full affine in-kernel because the conv's zero
    # padding must see exact zeros at the border).
    w1 = params["w1"] * s2[None, None, None, :]      # (3, 3, C, C) HWIO
    w2 = params["w2"] * s3[None, None, None, :]

    def prep_w(w):                                   # -> (9*CP, CP)
        wp = jnp.pad(w, ((0, 0), (0, 0), (0, CP - C), (0, CP - C)))
        return wp.reshape(9 * CP, CP)                # rows ordered (dy, dx, ci)

    w1m, w2m = prep_w(w1), prep_w(w2)

    def padv(v):
        return jnp.pad(v, (0, CP - C))

    vecs = jnp.zeros((8, CP), jnp.float32)
    vecs = (vecs.at[0].set(padv(s1)).at[1].set(padv(b1)).at[2].set(padv(b2))
                .at[3].set(padv(alpha)).at[4].set(padv(b3)))

    xp = jnp.pad(x, ((0, 0), (0, 0), (0, 0), (0, CP - C)))

    out = pl.pallas_call(
        ibasic_block_kernel,
        out_shape=jax.ShapeDtypeStruct((N, H, W, CP), jnp.float32),
        grid_spec=pltpu.PrefetchScalarGridSpec(
            num_scalar_prefetch=0,
            grid=(N,),
            in_specs=[
                pl.BlockSpec((1, H, W, CP), lambda n: (n, 0, 0, 0)),
                pl.BlockSpec((9 * CP, CP), lambda n: (0, 0)),   # resident
                pl.BlockSpec((9 * CP, CP), lambda n: (0, 0)),   # resident
                pl.BlockSpec((8, CP), lambda n: (0, 0)),        # resident
            ],
            out_specs=pl.BlockSpec((1, H, W, CP), lambda n: (n, 0, 0, 0)),
            scratch_shapes=[
                pltpu.VMEM((H + 2, W + 2, CP), jnp.float32),   # padded plane
                pltpu.VMEM((H * W, 9 * CP), jnp.float32),      # im2col buffer
            ],
        ),
        compiler_params=pltpu.CompilerParams(
            dimension_semantics=("parallel",)),   # batch elems independent
    )(xp, w1m, w2m, vecs)

    return jnp.transpose(out[..., :C], (0, 3, 1, 2))   # back to NCHW


def reference(x_nchw, params):
    """Pure-JAX reference (NHWC internally) for correctness checking."""
    x = jnp.transpose(x_nchw, (0, 2, 3, 1)).astype(jnp.float32)

    def bn(t, g, b, m, v):
        return (t - m) / jnp.sqrt(v + EPS) * g + b

    def conv(t, w):
        return lax.conv_general_dilated(
            t, w, window_strides=(1, 1), padding=((1, 1), (1, 1)),
            dimension_numbers=("NHWC", "HWIO", "NHWC"))

    out = bn(x, *params["bn1"])
    out = conv(out, params["w1"])
    out = bn(out, *params["bn2"])
    out = jnp.where(out >= 0, out, params["alpha"] * out)
    out = conv(out, params["w2"])
    out = bn(out, *params["bn3"])
    out = out + x
    return jnp.transpose(out, (0, 3, 1, 2))


def make_params(key, inplanes, planes):
    assert inplanes == planes, "default IBasicBlock config: downsample=None"
    ks = jax.random.split(key, 12)
    C = planes

    def bn_params(k0, k1, k2, k3, n):
        gamma = 1.0 + 0.1 * jax.random.normal(k0, (n,), jnp.float32)
        beta = 0.1 * jax.random.normal(k1, (n,), jnp.float32)
        mean = 0.1 * jax.random.normal(k2, (n,), jnp.float32)
        var = 0.5 + jnp.abs(jax.random.normal(k3, (n,), jnp.float32))
        return (gamma, beta, mean, var)

    params = {
        "bn1": bn_params(ks[0], ks[1], ks[2], ks[3], inplanes),
        "bn2": bn_params(ks[4], ks[5], ks[6], ks[7], C),
        "bn3": bn_params(ks[8], ks[9], ks[10], ks[11], C),
        # HWIO conv weights (PyTorch OIHW transposed (2, 3, 1, 0))
        "w1": 0.2 * jax.random.normal(jax.random.fold_in(key, 100),
                                      (3, 3, inplanes, C), jnp.float32),
        "w2": 0.2 * jax.random.normal(jax.random.fold_in(key, 101),
                                      (3, 3, C, C), jnp.float32),
        "alpha": jnp.full((C,), 0.25, jnp.float32),   # PReLU default init
    }
    return params


if __name__ == "__main__":
    key = jax.random.PRNGKey(0)
    N, C, H, W = 2, 8, 16, 16                      # inplanes = planes = 8
    x = jax.random.normal(jax.random.fold_in(key, 0), (N, C, H, W), jnp.float32)
    params = make_params(jax.random.fold_in(key, 1), C, C)

    out = jax.block_until_ready(ibasic_block(x, params))
    ref = jax.block_until_ready(reference(x, params))

    assert out.shape == (N, C, H, W) and out.dtype == jnp.float32
    assert jnp.allclose(out, ref, atol=1e-3, rtol=1e-3), (
        float(jnp.max(jnp.abs(out - ref))))
    print("KERNEL_OK")
</pallas_src>

<mosaic_0001>
module attributes {stable_mosaic.version = 11 : i64} {
  func.func @ibasic_block_kernel(%arg0: i32, %arg1: memref<1x16x16x128xf32, #tpu.memory_space<vmem>>, %arg2: memref<1152x128xf32, #tpu.memory_space<vmem>>, %arg3: memref<1152x128xf32, #tpu.memory_space<vmem>>, %arg4: memref<8x128xf32, #tpu.memory_space<vmem>>, %arg5: memref<1x16x16x128xf32, #tpu.memory_space<vmem>>, %arg6: memref<18x18x128xf32, #tpu.memory_space<vmem>>, %arg7: memref<256x1152xf32, #tpu.memory_space<vmem>>) attributes {dimension_semantics = [#tpu.dimension_semantics<parallel>], iteration_bounds = array<i64: 2>, scalar_prefetch = 0 : i64, scratch_operands = 2 : i64, tpu.core_type = #tpu.core_type<tc>, window_params = [{transform_indices = @transform_0, window_bounds = array<i64: 1, 16, 16, 128>}, {pipeline_mode = #tpu.pipeline_mode<synchronous>, transform_indices = @transform_1, window_bounds = array<i64: 1152, 128>}, {pipeline_mode = #tpu.pipeline_mode<synchronous>, transform_indices = @transform_2, window_bounds = array<i64: 1152, 128>}, {pipeline_mode = #tpu.pipeline_mode<synchronous>, transform_indices = @transform_3, window_bounds = array<i64: 8, 128>}, {transform_indices = @transform_4, window_bounds = array<i64: 1, 16, 16, 128>}]} {
    %c0 = arith.constant 0 : index
    %c0_0 = arith.constant 0 : index
    %0 = vector.load %arg4[%c0, %c0_0] : memref<8x128xf32, #tpu.memory_space<vmem>>, vector<8x128xf32>
    %1 = vector.extract_strided_slice %0 {offsets = [0, 0], sizes = [1, 128], strides = [1, 1]} : vector<8x128xf32> to vector<1x128xf32>
    %2 = vector.extract_strided_slice %0 {offsets = [1, 0], sizes = [1, 128], strides = [1, 1]} : vector<8x128xf32> to vector<1x128xf32>
    %3 = vector.extract_strided_slice %0 {offsets = [2, 0], sizes = [1, 128], strides = [1, 1]} : vector<8x128xf32> to vector<1x128xf32>
    %4 = vector.extract_strided_slice %0 {offsets = [3, 0], sizes = [1, 128], strides = [1, 1]} : vector<8x128xf32> to vector<1x128xf32>
    %5 = vector.extract_strided_slice %0 {offsets = [4, 0], sizes = [1, 128], strides = [1, 1]} : vector<8x128xf32> to vector<1x128xf32>
    %cst = arith.constant 0.000000e+00 : f32
    %6 = vector.broadcast %cst : f32 to vector<1x18x128xf32>
    %c0_1 = arith.constant 0 : index
    %c0_2 = arith.constant 0 : index
    %c0_3 = arith.constant 0 : index
    %7 = vector.load %arg6[%c0_1, %c0_2, %c0_3] : memref<18x18x128xf32, #tpu.memory_space<vmem>>, vector<1x18x128xf32>
    tpu.vector_store %arg6[%c0_1, %c0_2, %c0_3], %6 {strides = array<i32>} : memref<18x18x128xf32, #tpu.memory_space<vmem>>, vector<1x18x128xf32>,
    %cst_4 = arith.constant 0.000000e+00 : f32
    %8 = vector.broadcast %cst_4 : f32 to vector<1x18x128xf32>
    %c17 = arith.constant 17 : index
    %c0_5 = arith.constant 0 : index
    %c0_6 = arith.constant 0 : index
    %9 = vector.load %arg6[%c17, %c0_5, %c0_6] : memref<18x18x128xf32, #tpu.memory_space<vmem>>, vector<1x18x128xf32>
    tpu.vector_store %arg6[%c17, %c0_5, %c0_6], %8 {strides = array<i32>} : memref<18x18x128xf32, #tpu.memory_space<vmem>>, vector<1x18x128xf32>,
    %cst_7 = arith.constant 0.000000e+00 : f32
    %10 = vector.broadcast %cst_7 : f32 to vector<16x1x128xf32>
    %c1 = arith.constant 1 : index
    %c0_8 = arith.constant 0 : index
    %c0_9 = arith.constant 0 : index
    %11 = vector.load %arg6[%c1, %c0_8, %c0_9] : memref<18x18x128xf32, #tpu.memory_space<vmem>>, vector<16x1x128xf32>
    tpu.vector_store %arg6[%c1, %c0_8, %c0_9], %10 {strides = array<i32>} : memref<18x18x128xf32, #tpu.memory_space<vmem>>, vector<16x1x128xf32>,
    %cst_10 = arith.constant 0.000000e+00 : f32
    %12 = vector.broadcast %cst_10 : f32 to vector<16x1x128xf32>
    %c1_11 = arith.constant 1 : index
    %c17_12 = arith.constant 17 : index
    %c0_13 = arith.constant 0 : index
    %13 = vector.load %arg6[%c1_11, %c17_12, %c0_13] : memref<18x18x128xf32, #tpu.memory_space<vmem>>, vector<16x1x128xf32>
    tpu.vector_store %arg6[%c1_11, %c17_12, %c0_13], %12 {strides = array<i32>} : memref<18x18x128xf32, #tpu.memory_space<vmem>>, vector<16x1x128xf32>,
    %c0_14 = arith.constant 0 : index
    %c0_15 = arith.constant 0 : index
    %c0_16 = arith.constant 0 : index
    %c0_17 = arith.constant 0 : index
    %14 = vector.load %arg1[%c0_14, %c0_15, %c0_16, %c0_17] : memref<1x16x16x128xf32, #tpu.memory_space<vmem>>, vector<1x16x16x128xf32>
    %15 = vector.shape_cast %14 : vector<1x16x16x128xf32> to vector<16x16x128xf32>
    %16 = vector.shape_cast %15 : vector<16x16x128xf32> to vector<256x128xf32>
    %17 = vector.broadcast %1 : vector<1x128xf32> to vector<256x128xf32>
    %18 = arith.mulf %16, %17 : vector<256x128xf32>
    %19 = vector.broadcast %2 : vector<1x128xf32> to vector<256x128xf32>
    %20 = arith.addf %18, %19 : vector<256x128xf32>
    %21 = vector.shape_cast %20 : vector<256x128xf32> to vector<16x16x128xf32>
    %c1_18 = arith.constant 1 : index
    %c1_19 = arith.constant 1 : index
    %c0_20 = arith.constant 0 : index
    %22 = vector.load %arg6[%c1_18, %c1_19, %c0_20] : memref<18x18x128xf32, #tpu.memory_space<vmem>>, vector<16x16x128xf32>
    tpu.vector_store %arg6[%c1_18, %c1_19, %c0_20], %21 {strides = array<i32>} : memref<18x18x128xf32, #tpu.memory_space<vmem>>, vector<16x16x128xf32>,
    %c0_21 = arith.constant 0 : index
    %c0_22 = arith.constant 0 : index
    %c0_23 = arith.constant 0 : index
    %23 = vector.load %arg6[%c0_21, %c0_22, %c0_23] : memref<18x18x128xf32, #tpu.memory_space<vmem>>, vector<18x16x128xf32>
    %24 = vector.extract_strided_slice %23 {offsets = [0, 0, 0], sizes = [16, 16, 128], strides = [1, 1, 1]} : vector<18x16x128xf32> to vector<16x16x128xf32>
    %25 = vector.shape_cast %24 : vector<16x16x128xf32> to vector<256x128xf32>
    %c0_24 = arith.constant 0 : index
    %c0_25 = arith.constant 0 : index
    %26 = vector.load %arg7[%c0_24, %c0_25] : memref<256x1152xf32, #tpu.memory_space<vmem>>, vector<256x128xf32>
    tpu.vector_store %arg7[%c0_24, %c0_25], %25 {strides = array<i32>} : memref<256x1152xf32, #tpu.memory_space<vmem>>, vector<256x128xf32>,
    %27 = vector.extract_strided_slice %23 {offsets = [1, 0, 0], sizes = [16, 16, 128], strides = [1, 1, 1]} : vector<18x16x128xf32> to vector<16x16x128xf32>
    %28 = vector.shape_cast %27 : vector<16x16x128xf32> to vector<256x128xf32>
    %c0_26 = arith.constant 0 : index
    %c384 = arith.constant 384 : index
    %29 = vector.load %arg7[%c0_26, %c384] : memref<256x1152xf32, #tpu.memory_space<vmem>>, vector<256x128xf32>
    tpu.vector_store %arg7[%c0_26, %c384], %28 {strides = array<i32>} : memref<256x1152xf32, #tpu.memory_space<vmem>>, vector<256x128xf32>,
    %30 = vector.extract_strided_slice %23 {offsets = [2, 0, 0], sizes = [16, 16, 128], strides = [1, 1, 1]} : vector<18x16x128xf32> to vector<16x16x128xf32>
    %31 = vector.shape_cast %30 : vector<16x16x128xf32> to vector<256x128xf32>
    %c0_27 = arith.constant 0 : index
    %c768 = arith.constant 768 : index
    %32 = vector.load %arg7[%c0_27, %c768] : memref<256x1152xf32, #tpu.memory_space<vmem>>, vector<256x128xf32>
    tpu.vector_store %arg7[%c0_27, %c768], %31 {strides = array<i32>} : memref<256x1152xf32, #tpu.memory_space<vmem>>, vector<256x128xf32>,
    %c0_28 = arith.constant 0 : index
    %c1_29 = arith.constant 1 : index
    %c0_30 = arith.constant 0 : index
    %33 = vector.load %arg6[%c0_28, %c1_29, %c0_30] : memref<18x18x128xf32, #tpu.memory_space<vmem>>, vector<18x16x128xf32>
    %34 = vector.extract_strided_slice %33 {offsets = [0, 0, 0], sizes = [16, 16, 128], strides = [1, 1, 1]} : vector<18x16x128xf32> to vector<16x16x128xf32>
    %35 = vector.shape_cast %34 : vector<16x16x128xf32> to vector<256x128xf32>
    %c0_31 = arith.constant 0 : index
    %c128 = arith.constant 128 : index
    %36 = vector.load %arg7[%c0_31, %c128] : memref<256x1152xf32, #tpu.memory_space<vmem>>, vector<256x128xf32>
    tpu.vector_store %arg7[%c0_31, %c128], %35 {strides = array<i32>} : memref<256x1152xf32, #tpu.memory_space<vmem>>, vector<256x128xf32>,
    %37 = vector.extract_strided_slice %33 {offsets = [1, 0, 0], sizes = [16, 16, 128], strides = [1, 1, 1]} : vector<18x16x128xf32> to vector<16x16x128xf32>
    %38 = vector.shape_cast %37 : vector<16x16x128xf32> to vector<256x128xf32>
    %c0_32 = arith.constant 0 : index
    %c512 = arith.constant 512 : index
    %39 = vector.load %arg7[%c0_32, %c512] : memref<256x1152xf32, #tpu.memory_space<vmem>>, vector<256x128xf32>
    tpu.vector_store %arg7[%c0_32, %c512], %38 {strides = array<i32>} : memref<256x1152xf32, #tpu.memory_space<vmem>>, vector<256x128xf32>,
    %40 = vector.extract_strided_slice %33 {offsets = [2, 0, 0], sizes = [16, 16, 128], strides = [1, 1, 1]} : vector<18x16x128xf32> to vector<16x16x128xf32>
    %41 = vector.shape_cast %40 : vector<16x16x128xf32> to vector<256x128xf32>
    %c0_33 = arith.constant 0 : index
    %c896 = arith.constant 896 : index
    %42 = vector.load %arg7[%c0_33, %c896] : memref<256x1152xf32, #tpu.memory_space<vmem>>, vector<256x128xf32>
    tpu.vector_store %arg7[%c0_33, %c896], %41 {strides = array<i32>} : memref<256x1152xf32, #tpu.memory_space<vmem>>, vector<256x128xf32>,
    %c0_34 = arith.constant 0 : index
    %c2 = arith.constant 2 : index
    %c0_35 = arith.constant 0 : index
    %43 = vector.load %arg6[%c0_34, %c2, %c0_35] : memref<18x18x128xf32, #tpu.memory_space<vmem>>, vector<18x16x128xf32>
    %44 = vector.extract_strided_slice %43 {offsets = [0, 0, 0], sizes = [16, 16, 128], strides = [1, 1, 1]} : vector<18x16x128xf32> to vector<16x16x128xf32>
    %45 = vector.shape_cast %44 : vector<16x16x128xf32> to vector<256x128xf32>
    %c0_36 = arith.constant 0 : index
    %c256 = arith.constant 256 : index
    %46 = vector.load %arg7[%c0_36, %c256] : memref<256x1152xf32, #tpu.memory_space<vmem>>, vector<256x128xf32>
    tpu.vector_store %arg7[%c0_36, %c256], %45 {strides = array<i32>} : memref<256x1152xf32, #tpu.memory_space<vmem>>, vector<256x128xf32>,
    %47 = vector.extract_strided_slice %43 {offsets = [1, 0, 0], sizes = [16, 16, 128], strides = [1, 1, 1]} : vector<18x16x128xf32> to vector<16x16x128xf32>
    %48 = vector.shape_cast %47 : vector<16x16x128xf32> to vector<256x128xf32>
    %c0_37 = arith.constant 0 : index
    %c640 = arith.constant 640 : index
    %49 = vector.load %arg7[%c0_37, %c640] : memref<256x1152xf32, #tpu.memory_space<vmem>>, vector<256x128xf32>
    tpu.vector_store %arg7[%c0_37, %c640], %48 {strides = array<i32>} : memref<256x1152xf32, #tpu.memory_space<vmem>>, vector<256x128xf32>,
    %50 = vector.extract_strided_slice %43 {offsets = [2, 0, 0], sizes = [16, 16, 128], strides = [1, 1, 1]} : vector<18x16x128xf32> to vector<16x16x128xf32>
    %51 = vector.shape_cast %50 : vector<16x16x128xf32> to vector<256x128xf32>
    %c0_38 = arith.constant 0 : index
    %c1024 = arith.constant 1024 : index
    %52 = vector.load %arg7[%c0_38, %c1024] : memref<256x1152xf32, #tpu.memory_space<vmem>>, vector<256x128xf32>
    tpu.vector_store %arg7[%c0_38, %c1024], %51 {strides = array<i32>} : memref<256x1152xf32, #tpu.memory_space<vmem>>, vector<256x128xf32>,
    %c0_39 = arith.constant 0 : index
    %c0_40 = arith.constant 0 : index
    %53 = vector.load %arg7[%c0_39, %c0_40] : memref<256x1152xf32, #tpu.memory_space<vmem>>, vector<256x1152xf32>
    %c0_41 = arith.constant 0 : index
    %c0_42 = arith.constant 0 : index
    %54 = vector.load %arg2[%c0_41, %c0_42] : memref<1152x128xf32, #tpu.memory_space<vmem>>, vector<1152x128xf32>
    %cst_43 = arith.constant dense<0.000000e+00> : vector<256x128xf32>
    %55 = tpu.matmul %53, %54, %cst_43 {dimension_numbers = #tpu.dot_dimension_numbers<[1], [0], [0], [1], [0, 0, 1, 1], [], []>} : vector<256x1152xf32>, vector<1152x128xf32>, vector<256x128xf32> -> vector<256x128xf32>
    %56 = vector.broadcast %3 : vector<1x128xf32> to vector<256x128xf32>
    %57 = arith.addf %55, %56 : vector<256x128xf32>
    %cst_44 = arith.constant 0.000000e+00 : f32
    %58 = vector.broadcast %cst_44 : f32 to vector<256x128xf32>
    %59 = arith.cmpf oge, %57, %58 : vector<256x128xf32>
    %60 = vector.broadcast %4 : vector<1x128xf32> to vector<256x128xf32>
    %61 = arith.mulf %60, %57 : vector<256x128xf32>
    %62 = arith.select %59, %57, %61 : vector<256x128xi1>, vector<256x128xf32>
    %63 = vector.shape_cast %62 : vector<256x128xf32> to vector<16x16x128xf32>
    %c1_45 = arith.constant 1 : index
    %c1_46 = arith.constant 1 : index
    %c0_47 = arith.constant 0 : index
    %64 = vector.load %arg6[%c1_45, %c1_46, %c0_47] : memref<18x18x128xf32, #tpu.memory_space<vmem>>, vector<16x16x128xf32>
    tpu.vector_store %arg6[%c1_45, %c1_46, %c0_47], %63 {strides = array<i32>} : memref<18x18x128xf32, #tpu.memory_space<vmem>>, vector<16x16x128xf32>,
    %c0_48 = arith.constant 0 : index
    %c0_49 = arith.constant 0 : index
    %c0_50 = arith.constant 0 : index
    %65 = vector.load %arg6[%c0_48, %c0_49, %c0_50] : memref<18x18x128xf32, #tpu.memory_space<vmem>>, vector<18x16x128xf32>
    %66 = vector.extract_strided_slice %65 {offsets = [0, 0, 0], sizes = [16, 16, 128], strides = [1, 1, 1]} : vector<18x16x128xf32> to vector<16x16x128xf32>
    %67 = vector.shape_cast %66 : vector<16x16x128xf32> to vector<256x128xf32>
    %c0_51 = arith.constant 0 : index
    %c0_52 = arith.constant 0 : index
    %68 = vector.load %arg7[%c0_51, %c0_52] : memref<256x1152xf32, #tpu.memory_space<vmem>>, vector<256x128xf32>
    tpu.vector_store %arg7[%c0_51, %c0_52], %67 {strides = array<i32>} : memref<256x1152xf32, #tpu.memory_space<vmem>>, vector<256x128xf32>,
    %69 = vector.extract_strided_slice %65 {offsets = [1, 0, 0], sizes = [16, 16, 128], strides = [1, 1, 1]} : vector<18x16x128xf32> to vector<16x16x128xf32>
    %70 = vector.shape_cast %69 : vector<16x16x128xf32> to vector<256x128xf32>
    %c0_53 = arith.constant 0 : index
    %c384_54 = arith.constant 384 : index
    %71 = vector.load %arg7[%c0_53, %c384_54] : memref<256x1152xf32, #tpu.memory_space<vmem>>, vector<256x128xf32>
    tpu.vector_store %arg7[%c0_53, %c384_54], %70 {strides = array<i32>} : memref<256x1152xf32, #tpu.memory_space<vmem>>, vector<256x128xf32>,
    %72 = vector.extract_strided_slice %65 {offsets = [2, 0, 0], sizes = [16, 16, 128], strides = [1, 1, 1]} : vector<18x16x128xf32> to vector<16x16x128xf32>
    %73 = vector.shape_cast %72 : vector<16x16x128xf32> to vector<256x128xf32>
    %c0_55 = arith.constant 0 : index
    %c768_56 = arith.constant 768 : index
    %74 = vector.load %arg7[%c0_55, %c768_56] : memref<256x1152xf32, #tpu.memory_space<vmem>>, vector<256x128xf32>
    tpu.vector_store %arg7[%c0_55, %c768_56], %73 {strides = array<i32>} : memref<256x1152xf32, #tpu.memory_space<vmem>>, vector<256x128xf32>,
    %c0_57 = arith.constant 0 : index
    %c1_58 = arith.constant 1 : index
    %c0_59 = arith.constant 0 : index
    %75 = vector.load %arg6[%c0_57, %c1_58, %c0_59] : memref<18x18x128xf32, #tpu.memory_space<vmem>>, vector<18x16x128xf32>
    %76 = vector.extract_strided_slice %75 {offsets = [0, 0, 0], sizes = [16, 16, 128], strides = [1, 1, 1]} : vector<18x16x128xf32> to vector<16x16x128xf32>
    %77 = vector.shape_cast %76 : vector<16x16x128xf32> to vector<256x128xf32>
    %c0_60 = arith.constant 0 : index
    %c128_61 = arith.constant 128 : index
    %78 = vector.load %arg7[%c0_60, %c128_61] : memref<256x1152xf32, #tpu.memory_space<vmem>>, vector<256x128xf32>
    tpu.vector_store %arg7[%c0_60, %c128_61], %77 {strides = array<i32>} : memref<256x1152xf32, #tpu.memory_space<vmem>>, vector<256x128xf32>,
    %79 = vector.extract_strided_slice %75 {offsets = [1, 0, 0], sizes = [16, 16, 128], strides = [1, 1, 1]} : vector<18x16x128xf32> to vector<16x16x128xf32>
    %80 = vector.shape_cast %79 : vector<16x16x128xf32> to vector<256x128xf32>
    %c0_62 = arith.constant 0 : index
    %c512_63 = arith.constant 512 : index
    %81 = vector.load %arg7[%c0_62, %c512_63] : memref<256x1152xf32, #tpu.memory_space<vmem>>, vector<256x128xf32>
    tpu.vector_store %arg7[%c0_62, %c512_63], %80 {strides = array<i32>} : memref<256x1152xf32, #tpu.memory_space<vmem>>, vector<256x128xf32>,
    %82 = vector.extract_strided_slice %75 {offsets = [2, 0, 0], sizes = [16, 16, 128], strides = [1, 1, 1]} : vector<18x16x128xf32> to vector<16x16x128xf32>
    %83 = vector.shape_cast %82 : vector<16x16x128xf32> to vector<256x128xf32>
    %c0_64 = arith.constant 0 : index
    %c896_65 = arith.constant 896 : index
    %84 = vector.load %arg7[%c0_64, %c896_65] : memref<256x1152xf32, #tpu.memory_space<vmem>>, vector<256x128xf32>
    tpu.vector_store %arg7[%c0_64, %c896_65], %83 {strides = array<i32>} : memref<256x1152xf32, #tpu.memory_space<vmem>>, vector<256x128xf32>,
    %c0_66 = arith.constant 0 : index
    %c2_67 = arith.constant 2 : index
    %c0_68 = arith.constant 0 : index
    %85 = vector.load %arg6[%c0_66, %c2_67, %c0_68] : memref<18x18x128xf32, #tpu.memory_space<vmem>>, vector<18x16x128xf32>
    %86 = vector.extract_strided_slice %85 {offsets = [0, 0, 0], sizes = [16, 16, 128], strides = [1, 1, 1]} : vector<18x16x128xf32> to vector<16x16x128xf32>
    %87 = vector.shape_cast %86 : vector<16x16x128xf32> to vector<256x128xf32>
    %c0_69 = arith.constant 0 : index
    %c256_70 = arith.constant 256 : index
    %88 = vector.load %arg7[%c0_69, %c256_70] : memref<256x1152xf32, #tpu.memory_space<vmem>>, vector<256x128xf32>
    tpu.vector_store %arg7[%c0_69, %c256_70], %87 {strides = array<i32>} : memref<256x1152xf32, #tpu.memory_space<vmem>>, vector<256x128xf32>,
    %89 = vector.extract_strided_slice %85 {offsets = [1, 0, 0], sizes = [16, 16, 128], strides = [1, 1, 1]} : vector<18x16x128xf32> to vector<16x16x128xf32>
    %90 = vector.shape_cast %89 : vector<16x16x128xf32> to vector<256x128xf32>
    %c0_71 = arith.constant 0 : index
    %c640_72 = arith.constant 640 : index
    %91 = vector.load %arg7[%c0_71, %c640_72] : memref<256x1152xf32, #tpu.memory_space<vmem>>, vector<256x128xf32>
    tpu.vector_store %arg7[%c0_71, %c640_72], %90 {strides = array<i32>} : memref<256x1152xf32, #tpu.memory_space<vmem>>, vector<256x128xf32>,
    %92 = vector.extract_strided_slice %85 {offsets = [2, 0, 0], sizes = [16, 16, 128], strides = [1, 1, 1]} : vector<18x16x128xf32> to vector<16x16x128xf32>
    %93 = vector.shape_cast %92 : vector<16x16x128xf32> to vector<256x128xf32>
    %c0_73 = arith.constant 0 : index
    %c1024_74 = arith.constant 1024 : index
    %94 = vector.load %arg7[%c0_73, %c1024_74] : memref<256x1152xf32, #tpu.memory_space<vmem>>, vector<256x128xf32>
    tpu.vector_store %arg7[%c0_73, %c1024_74], %93 {strides = array<i32>} : memref<256x1152xf32, #tpu.memory_space<vmem>>, vector<256x128xf32>,
    %c0_75 = arith.constant 0 : index
    %c0_76 = arith.constant 0 : index
    %95 = vector.load %arg7[%c0_75, %c0_76] : memref<256x1152xf32, #tpu.memory_space<vmem>>, vector<256x1152xf32>
    %c0_77 = arith.constant 0 : index
    %c0_78 = arith.constant 0 : index
    %96 = vector.load %arg3[%c0_77, %c0_78] : memref<1152x128xf32, #tpu.memory_space<vmem>>, vector<1152x128xf32>
    %cst_79 = arith.constant dense<0.000000e+00> : vector<256x128xf32>
    %97 = tpu.matmul %95, %96, %cst_79 {dimension_numbers = #tpu.dot_dimension_numbers<[1], [0], [0], [1], [0, 0, 1, 1], [], []>} : vector<256x1152xf32>, vector<1152x128xf32>, vector<256x128xf32> -> vector<256x128xf32>
    %98 = vector.broadcast %5 : vector<1x128xf32> to vector<256x128xf32>
    %99 = arith.addf %97, %98 : vector<256x128xf32>
    %100 = arith.addf %99, %16 : vector<256x128xf32>
    %101 = vector.shape_cast %100 : vector<256x128xf32> to vector<16x16x128xf32>
    %c0_80 = arith.constant 0 : index
    %c0_81 = arith.constant 0 : index
    %c0_82 = arith.constant 0 : index
    %c0_83 = arith.constant 0 : index
    %102 = vector.load %arg5[%c0_80, %c0_81, %c0_82, %c0_83] : memref<1x16x16x128xf32, #tpu.memory_space<vmem>>, vector<1x16x16x128xf32>
    %103 = vector.shape_cast %102 : vector<1x16x16x128xf32> to vector<16x16x128xf32>
    %104 = vector.shape_cast %101 : vector<16x16x128xf32> to vector<1x16x16x128xf32>
    tpu.vector_store %arg5[%c0_80, %c0_81, %c0_82, %c0_83], %104 {strides = array<i32>} : memref<1x16x16x128xf32, #tpu.memory_space<vmem>>, vector<1x16x16x128xf32>,
    return
  }
  func.func @transform_0(%arg0: i32) -> (i32, i32, i32, i32) {
    %c0_i32 = arith.constant 0 : i32
    %c0_i32_0 = arith.constant 0 : i32
    %c0_i32_1 = arith.constant 0 : i32
    %c0_i32_2 = arith.constant 0 : i32
    return %arg0, %c0_i32, %c0_i32_0, %c0_i32_1 : i32, i32, i32, i32
  }
  func.func @transform_1(%arg0: i32) -> (i32, i32) {
    %c0_i32 = arith.constant 0 : i32
    %c0_i32_0 = arith.constant 0 : i32
    %c0_i32_1 = arith.constant 0 : i32
    return %c0_i32, %c0_i32_0 : i32, i32
  }
  func.func @transform_2(%arg0: i32) -> (i32, i32) {
    %c0_i32 = arith.constant 0 : i32
    %c0_i32_0 = arith.constant 0 : i32
    %c0_i32_1 = arith.constant 0 : i32
    return %c0_i32, %c0_i32_0 : i32, i32
  }
  func.func @transform_3(%arg0: i32) -> (i32, i32) {
    %c0_i32 = arith.constant 0 : i32
    %c0_i32_0 = arith.constant 0 : i32
    %c0_i32_1 = arith.constant 0 : i32
    return %c0_i32, %c0_i32_0 : i32, i32
  }
  func.func @transform_4(%arg0: i32) -> (i32, i32, i32, i32) {
    %c0_i32 = arith.constant 0 : i32
    %c0_i32_0 = arith.constant 0 : i32
    %c0_i32_1 = arith.constant 0 : i32
    %c0_i32_2 = arith.constant 0 : i32
    return %arg0, %c0_i32, %c0_i32_0, %c0_i32_1 : i32, i32, i32, i32
  }
}

</mosaic_0001>

<llo_original>
// kernel: tpu_custom_call.1
$region0: #{tpu_custom_call.1}
  #allocation0 [shape = 'u32[]', space=smem, size = 0x4, offset = 0x4, fixed_abs, tag = 'smem constant byte address 0x4 - core index']
  #allocation1 [shape = 'u32[144,128]{1,0:T(1,128)}', space=vmem, size = 0x12000, scoped, tag = 'internal scratch']
  #allocation2 [shape = 'f32[18,18,128]{2,1,0:T(8,128)}', space=vmem, size = 0x36000, scoped, tag = 'scratch operand']
  #allocation3 [shape = 'f32[256,1152]{1,0:T(8,128)}', space=vmem, size = 0x120000, scoped, tag = 'scratch operand']
  %s0 = inlined_call_operand.hbm [shape: f32[2,16,16,128], index: 0, kind: input, shape index: {}]
  %s1 = inlined_call_operand.hbm [shape: f32[1152,128], index: 1, kind: input, shape index: {}]
  %s2 = inlined_call_operand.hbm [shape: f32[1152,128], index: 2, kind: input, shape index: {}]
  %s3 = inlined_call_operand.vmem [shape: f32[8,128], index: 3, kind: input, shape index: {}]
  %s4 = inlined_call_operand.hbm [shape: f32[2,16,16,128], index: 4, kind: output, shape index: {}]
  %s5 = sld [smem:[#allocation0]]
  $region61: #{tpu_custom_call.1} parent=0
    _
  %s7 = ssub.s32 1, %s5
  %s8 = scalar_select 0, %s7, %s5
  $region1: #{tpu_custom_call.1} parent=0
    #allocation4 [shape = 'u8[262144]{0}', space=vmem, size = 0x40000, scoped, tag = 'input window, operand 0']
    #allocation5 [shape = 's32[2]{0}', space=sflag, size = 0x8, scoped, tag = 'scoped memory for tpu_custom_call.1']
    #allocation6 [shape = 's32[2]{0}', space=sflag, size = 0x8, scoped, tag = 'scoped memory for tpu_custom_call.1']
    #allocation7 [shape = 'u8[589824]{0}', space=vmem, size = 0x90000, scoped, tag = 'input window, operand 1, single buffered']
    #allocation8 [shape = 's32[1]{0}', space=sflag, size = 0x4, scoped, tag = 'scoped memory for tpu_custom_call.1']
    #allocation9 [shape = 'u8[589824]{0}', space=vmem, size = 0x90000, scoped, tag = 'input window, operand 2, single buffered']
    #allocation10 [shape = 'u8[262144]{0}', space=vmem, size = 0x40000, scoped, tag = 'output window, operand 0']
    %9 = vsyncpa [#allocation5], 0
    %s10 = scalar_lea.sflag [#allocation5], 1
    %11 = vsyncpa %s10, 0
    %12 = vsyncpa [#allocation8], 0
    %13 = vsyncpa [#allocation6], 0
    %s14 = scalar_lea.sflag [#allocation6], 1
    %15 = vsyncpa %s14, 0
    loop: start=0, step=1, limit=4
    $region2: #{tpu_custom_call.1} parent=1 // loop_pre_header
      _
    $region3: #{tpu_custom_call.1} parent=1 // loop_header
      %s17 = sphi 0, %s21
      %p18 = scmp.ge.s32.totalorder %s17, 4
      %s27 = sphi 0, %s29
      %s30 = sphi 0, %s27
      %s31 = sphi 0, %s30
      %s47 = sphi 0, %s31
      %s51 = sphi 0, %s51
      %s53 = sphi 0, %s51
      %s54 = sphi 0, %s53
      %s68 = sphi 0, %s54
      %s72 = sphi 0, %s72
      %s74 = sphi 0, %s72
      %s75 = sphi 0, %s74
      %s89 = sphi 0, %s75
      %s93 = sphi 0, %s93
      %s95 = sphi 0, %s93
      %s96 = sphi 0, %s95
      %s110 = sphi 0, %s96
      %s116 = sphi 0, %s118
      %s119 = sphi 0, %s116
      %s120 = sphi 0, %s119
      %s136 = sphi 0, %s120
    $region4: #{tpu_custom_call.1} parent=1 // loop_header_branch
      %20 = sbr.rel (%p18) target = $region8
    $region5: #{tpu_custom_call.1} parent=1 // loop_body
      %s22 = ssub.s32 %s17, 1
      %s23 = ssub.s32 %s17, 2
      %s24 = sadd.s32 %s17, 1
      %s25 = ssub.s32 %s17, %s24
      %p26 = scmp.eq.s32.totalorder %s25, 0
      %s28 = sadd.s32 %s27, 1
      %s29 = scalar_select %p26, %s27, %s28
      %p32 = pneg %p26
      %p33 = scmp.eq.s32.totalorder %s17, 1
      %p34 = por %p32, %p33
      %p35 = scmp.ne.s32.totalorder %s27, %s30
      %p36 = scmp.eq.s32.totalorder %s17, 0
      %p37 = por %p35, %p36
      %p38 = scmp.ne.s32.totalorder %s27, %s30
      %p39 = scmp.eq.s32.totalorder %s22, 1
      %p40 = por %p38, %p39
      %p41 = scmp.ne.s32.totalorder %s30, %s31
      %p42 = scmp.eq.s32.totalorder %s22, 0
      %p43 = por %p41, %p42
      %p44 = scmp.ne.s32.totalorder %s30, %s31
      %p45 = scmp.eq.s32.totalorder %s23, 1
      %p46 = por %p44, %p45
      %p48 = scmp.ne.s32.totalorder %s31, %s47
      %p49 = scmp.eq.s32.totalorder %s23, 0
      %p50 = por %p48, %p49
      %s52 = sadd.s32 %s51, 1
      %p55 = scmp.eq.s32.totalorder %s17, 1
      %p56 = scmp.ne.s32.totalorder %s51, %s53
      %p57 = scmp.eq.s32.totalorder %s17, 0
      %p58 = por %p56, %p57
      %p59 = scmp.ne.s32.totalorder %s51, %s53
      %p60 = scmp.eq.s32.totalorder %s22, 1
      %p61 = por %p59, %p60
      %p62 = scmp.ne.s32.totalorder %s53, %s54
      %p63 = scmp.eq.s32.totalorder %s22, 0
      %p64 = por %p62, %p63
      %p65 = scmp.ne.s32.totalorder %s53, %s54
      %p66 = scmp.eq.s32.totalorder %s23, 1
      %p67 = por %p65, %p66
      %p69 = scmp.ne.s32.totalorder %s54, %s68
      %p70 = scmp.eq.s32.totalorder %s23, 0
      %p71 = por %p69, %p70
      %s73 = sadd.s32 %s72, 1
      %p76 = scmp.eq.s32.totalorder %s17, 1
      %p77 = scmp.ne.s32.totalorder %s72, %s74
      %p78 = scmp.eq.s32.totalorder %s17, 0
      %p79 = por %p77, %p78
      %p80 = scmp.ne.s32.totalorder %s72, %s74
      %p81 = scmp.eq.s32.totalorder %s22, 1
      %p82 = por %p80, %p81
      %p83 = scmp.ne.s32.totalorder %s74, %s75
      %p84 = scmp.eq.s32.totalorder %s22, 0
      %p85 = por %p83, %p84
      %p86 = scmp.ne.s32.totalorder %s74, %s75
      %p87 = scmp.eq.s32.totalorder %s23, 1
      %p88 = por %p86, %p87
      %p90 = scmp.ne.s32.totalorder %s75, %s89
      %p91 = scmp.eq.s32.totalorder %s23, 0
      %p92 = por %p90, %p91
      %s94 = sadd.s32 %s93, 1
      %p97 = scmp.eq.s32.totalorder %s17, 1
      %p98 = scmp.ne.s32.totalorder %s93, %s95
      %p99 = scmp.eq.s32.totalorder %s17, 0
      %p100 = por %p98, %p99
      %p101 = scmp.ne.s32.totalorder %s93, %s95
      %p102 = scmp.eq.s32.totalorder %s22, 1
      %p103 = por %p101, %p102
      %p104 = scmp.ne.s32.totalorder %s95, %s96
      %p105 = scmp.eq.s32.totalorder %s22, 0
      %p106 = por %p104, %p105
      %p107 = scmp.ne.s32.totalorder %s95, %s96
      %p108 = scmp.eq.s32.totalorder %s23, 1
      %p109 = por %p107, %p108
      %p111 = scmp.ne.s32.totalorder %s96, %s110
      %p112 = scmp.eq.s32.totalorder %s23, 0
      %p113 = por %p111, %p112
      %s114 = ssub.s32 %s17, %s24
      %p115 = scmp.eq.s32.totalorder %s114, 0
      %s117 = sadd.s32 %s116, 1
      %s118 = scalar_select %p115, %s116, %s117
      %p121 = pneg %p115
      %p122 = scmp.eq.s32.totalorder %s17, 1
      %p123 = por %p121, %p122
      %p124 = scmp.ne.s32.totalorder %s116, %s119
      %p125 = scmp.eq.s32.totalorder %s17, 0
      %p126 = por %p124, %p125
      %p127 = scmp.ne.s32.totalorder %s116, %s119
      %p128 = scmp.eq.s32.totalorder %s22, 1
      %p129 = por %p127, %p128
      %p130 = scmp.ne.s32.totalorder %s119, %s120
      %p131 = scmp.eq.s32.totalorder %s22, 0
      %p132 = por %p130, %p131
      %p133 = scmp.ne.s32.totalorder %s119, %s120
      %p134 = scmp.eq.s32.totalorder %s23, 1
      %p135 = por %p133, %p134
      %p137 = scmp.ne.s32.totalorder %s120, %s136
      %p138 = scmp.eq.s32.totalorder %s23, 0
      %p139 = por %p137, %p138
      %p140 = scmp.le.s32.totalorder 1, %s17
      %p141 = scmp.lt.s32.totalorder %s17, 3
      %p142 = pnand %p140, %p141
      %p143 = pneg %p142
      // Predicated region
      $region9: #{tpu_custom_call.1} parent=5 // pred_check
        _
      $region10: #{tpu_custom_call.1} parent=5 // pred_check_branch
        %145 = sbr.rel (%p142) target = $region12
      $region11: #{tpu_custom_call.1} parent=5 // pred_region
        %s146 = ssub.s32 %s17, 1
        // Predicated region
        $region13: #{tpu_custom_call.1} parent=11 // pred_check
          %p147 = pneg %p64
        $region14: #{tpu_custom_call.1} parent=11 // pred_check_branch
          %149 = sbr.rel (%p147) target = $region16
        $region15: #{tpu_custom_call.1} parent=11 // pred_region
          %s151 = ssub.s32 18432, 18432
          %152 = vsyncadd [#allocation8], %s151
          %s153 = sshll.u32 [#allocation7], 4
          %s154 = int_to_ptr.vmem [resolvable:$true] %s153
          %159 = dma.hbm_to_vmem [thread:$0]  %s1, 18432, %s154, [#allocation8], 128, 128, 8
        $region16: #{tpu_custom_call.1} parent=11 // pred_fallthru
          _
        // Predicated region
        $region17: #{tpu_custom_call.1} parent=11 // pred_check
          %p160 = pneg %p85
        $region18: #{tpu_custom_call.1} parent=11 // pred_check_branch
          %162 = sbr.rel (%p160) target = $region20
        $region19: #{tpu_custom_call.1} parent=11 // pred_region
          %s164 = ssub.s32 18432, 18432
          %165 = vsyncadd [#allocation8], %s164
          %s166 = sshll.u32 [#allocation9], 4
          %s167 = int_to_ptr.vmem [resolvable:$true] %s166
          %172 = dma.hbm_to_vmem [thread:$0]  %s2, 18432, %s167, [#allocation8], 128, 128, 8
        $region20: #{tpu_custom_call.1} parent=11 // pred_fallthru
          _
        // Predicated region
        $region21: #{tpu_custom_call.1} parent=11 // pred_check
          %p173 = pneg %p106
        $region22: #{tpu_custom_call.1} parent=11 // pred_check_branch
          %175 = sbr.rel (%p173) target = $region24
        $region23: #{tpu_custom_call.1} parent=11 // pred_region
          _
        $region24: #{tpu_custom_call.1} parent=11 // pred_fallthru
          _
      $region12: #{tpu_custom_call.1} parent=5 // pred_fallthru
        _
      %p176 = scmp.lt.s32.totalorder %s17, 2
      // Predicated region
      $region25: #{tpu_custom_call.1} parent=5 // pred_check
        %p177 = pneg %p176
      $region26: #{tpu_custom_call.1} parent=5 // pred_check_branch
        %179 = sbr.rel (%p177) target = $region28
      $region27: #{tpu_custom_call.1} parent=5 // pred_region
        // Predicated region
        $region29: #{tpu_custom_call.1} parent=27 // pred_check
          %p180 = pneg %p37
        $region30: #{tpu_custom_call.1} parent=27 // pred_check_branch
          %182 = sbr.rel (%p180) target = $region32
        $region31: #{tpu_custom_call.1} parent=27 // pred_region
          %s183 = sand.u32 %s27, 1
          %s184 = scalar_lea.sflag [#allocation5], %s183
          %s185 = sand.u32 %s27, 1
          %s186 = smul.addr %s185, 256
          %s187 = scalar_lea.vmem [#allocation4], %s186
          %s189 = ssub.s32 4096, 4096
          %190 = vsyncadd %s184, %s189
          %s191 = smul.addr %s17, 32
          %s192 = smul.addr %s191, 128
          %s193 = scalar_lea.hbm %s0, %s192
          %s194 = sshll.u32 %s187, 4
          %s195 = int_to_ptr.vmem [resolvable:$true] %s194
          %200 = dma.hbm_to_vmem [thread:$0]  %s193, 4096, %s195, %s184, 128, 128, 8
        $region32: #{tpu_custom_call.1} parent=27 // pred_fallthru
          _
      $region28: #{tpu_custom_call.1} parent=5 // pred_fallthru
        _
      %p201 = scmp.le.s32.totalorder 1, %s17
      %p202 = scmp.lt.s32.totalorder %s17, 3
      %p203 = pnand %p201, %p202
      %p204 = pneg %p203
      // Predicated region
      $region33: #{tpu_custom_call.1} parent=5 // pred_check
        _
      $region34: #{tpu_custom_call.1} parent=5 // pred_check_branch
        %206 = sbr.rel (%p203) target = $region36
      $region35: #{tpu_custom_call.1} parent=5 // pred_region
        %s207 = ssub.s32 %s17, 1
        %s208 = sand.u32 %s30, 1
        %s209 = scalar_lea.sflag [#allocation5], %s208
        %s210 = sand.u32 %s30, 1
        %s211 = smul.addr %s210, 256
        %s212 = scalar_lea.vmem [#allocation4], %s211
        // Predicated region
        $region37: #{tpu_custom_call.1} parent=35 // pred_check
          %p213 = pneg %p43
        $region38: #{tpu_custom_call.1} parent=35 // pred_check_branch
          %215 = sbr.rel (%p213) target = $region40
        $region39: #{tpu_custom_call.1} parent=35 // pred_region
          %216 = dma.done %s209, 4096
        $region40: #{tpu_custom_call.1} parent=35 // pred_fallthru
          _
        // Predicated region
        $region41: #{tpu_custom_call.1} parent=35 // pred_check
          %p217 = pneg %p64
        $region42: #{tpu_custom_call.1} parent=35 // pred_check_branch
          %219 = sbr.rel (%p217) target = $region44
        $region43: #{tpu_custom_call.1} parent=35 // pred_region
          %220 = dma.done [#allocation8], 18432
        $region44: #{tpu_custom_call.1} parent=35 // pred_fallthru
          _
        // Predicated region
        $region45: #{tpu_custom_call.1} parent=35 // pred_check
          %p221 = pneg %p85
        $region46: #{tpu_custom_call.1} parent=35 // pred_check_branch
          %223 = sbr.rel (%p221) target = $region48
        $region47: #{tpu_custom_call.1} parent=35 // pred_region
          %224 = dma.done [#allocation8], 18432
        $region48: #{tpu_custom_call.1} parent=35 // pred_fallthru
          _
        %s225 = sand.u32 %s30, 1
        %s226 = scalar_lea.sflag [#allocation5], %s225
        %s227 = sand.u32 %s30, 1
        %s228 = smul.addr %s227, 256
        %s229 = scalar_lea.vmem [#allocation4], %s228
        %p230 = pneg %p43
        %p231 = pneg %p40
        %p232 = pneg %p64
        %p233 = pneg %p61
        %p234 = pneg %p85
        %p235 = pneg %p82
        %p236 = pneg %p106
        %p237 = pneg %p103
        %p238 = pneg %p132
        %p239 = pneg %p129
        %s240 = sand.u32 %s119, 1
        %s241 = scalar_lea.sflag [#allocation6], %s240
        %s242 = sand.u32 %s119, 1
        %s243 = smul.addr %s242, 256
        %s244 = scalar_lea.vmem [#allocation10], %s243
        %v245 = vld [vmem:[%s3] sm:$0xff]
        %246 = vst [vmem:[#allocation2] sm:$0xff] 0.0
        %247 = vst [vmem:[#allocation2 + $0x8] sm:$0xff] 0.0
        %248 = vst [vmem:[#allocation2 + $0x10] sm:$0x3] 0.0
        %s249 = scalar_lea.vmem [#allocation2], 408
        %250 = vst [vmem:[%s249] sm:$0xff] 0.0
        %251 = vst [vmem:[%s249 + $0x8] sm:$0xff] 0.0
        %252 = vst [vmem:[%s249 + $0x10] sm:$0x3] 0.0
        %s253 = scalar_lea.vmem [#allocation2], 24
        %254 = vst [vmem:[%s253] sm:$0x1] 0.0
        %255 = vst [vmem:[%s253 + $0x18] sm:$0x1] 0.0
        %256 = vst [vmem:[%s253 + $0x30] sm:$0x1] 0.0
        %257 = vst [vmem:[%s253 + $0x48] sm:$0x1] 0.0
        %258 = vst [vmem:[%s253 + $0x60] sm:$0x1] 0.0
        %259 = vst [vmem:[%s253 + $0x78] sm:$0x1] 0.0
        %260 = vst [vmem:[%s253 + $0x90] sm:$0x1] 0.0
        %261 = vst [vmem:[%s253 + $0xa8] sm:$0x1] 0.0
        %262 = vst [vmem:[%s253 + $0xc0] sm:$0x1] 0.0
        %263 = vst [vmem:[%s253 + $0xd8] sm:$0x1] 0.0
        %264 = vst [vmem:[%s253 + $0xf0] sm:$0x1] 0.0
        %265 = vst [vmem:[%s253 + $0x108] sm:$0x1] 0.0
        %266 = vst [vmem:[%s253 + $0x120] sm:$0x1] 0.0
        %267 = vst [vmem:[%s253 + $0x138] sm:$0x1] 0.0
        %268 = vst [vmem:[%s253 + $0x150] sm:$0x1] 0.0
        %269 = vst [vmem:[%s253 + $0x168] sm:$0x1] 0.0
        %270 = vst [vmem:[%s253 + $0x11] sm:$0x1] 0.0
        %271 = vst [vmem:[%s253 + $0x29] sm:$0x1] 0.0
        %272 = vst [vmem:[%s253 + $0x41] sm:$0x1] 0.0
        %273 = vst [vmem:[%s253 + $0x59] sm:$0x1] 0.0
        %274 = vst [vmem:[%s253 + $0x71] sm:$0x1] 0.0
        %275 = vst [vmem:[%s253 + $0x89] sm:$0x1] 0.0
        %276 = vst [vmem:[%s253 + $0xa1] sm:$0x1] 0.0
        %277 = vst [vmem:[%s253 + $0xb9] sm:$0x1] 0.0
        %278 = vst [vmem:[%s253 + $0xd1] sm:$0x1] 0.0
        %279 = vst [vmem:[%s253 + $0xe9] sm:$0x1] 0.0
        %280 = vst [vmem:[%s253 + $0x101] sm:$0x1] 0.0
        %281 = vst [vmem:[%s253 + $0x119] sm:$0x1] 0.0
        %282 = vst [vmem:[%s253 + $0x131] sm:$0x1] 0.0
        %283 = vst [vmem:[%s253 + $0x149] sm:$0x1] 0.0
        %284 = vst [vmem:[%s253 + $0x161] sm:$0x1] 0.0
        %285 = vst [vmem:[%s253 + $0x179] sm:$0x1] 0.0
        %v286 = vld [vmem:[%s212] sm:$0xff]
        %v287 = vld [vmem:[%s212 + $0x8] sm:$0xff]
        %v288 = vld [vmem:[%s212 + $0x10] sm:$0xff]
        %v289 = vld [vmem:[%s212 + $0x18] sm:$0xff]
        %v290 = vld [vmem:[%s212 + $0x20] sm:$0xff]
        %v291 = vld [vmem:[%s212 + $0x28] sm:$0xff]
        %v292 = vld [vmem:[%s212 + $0x30] sm:$0xff]
        %v293 = vld [vmem:[%s212 + $0x38] sm:$0xff]
        %v294 = vld [vmem:[%s212 + $0x40] sm:$0xff]
        %v295 = vld [vmem:[%s212 + $0x48] sm:$0xff]
        %v296 = vld [vmem:[%s212 + $0x50] sm:$0xff]
        %v297 = vld [vmem:[%s212 + $0x58] sm:$0xff]
        %v298 = vld [vmem:[%s212 + $0x60] sm:$0xff]
        %v299 = vld [vmem:[%s212 + $0x68] sm:$0xff]
        %v300 = vld [vmem:[%s212 + $0x70] sm:$0xff]
        %v301 = vld [vmem:[%s212 + $0x78] sm:$0xff]
        %v302 = vld [vmem:[%s212 + $0x80] sm:$0xff]
        %v303 = vld [vmem:[%s212 + $0x88] sm:$0xff]
        %v304 = vld [vmem:[%s212 + $0x90] sm:$0xff]
        %v305 = vld [vmem:[%s212 + $0x98] sm:$0xff]
        %v306 = vld [vmem:[%s212 + $0xa0] sm:$0xff]
        %v307 = vld [vmem:[%s212 + $0xa8] sm:$0xff]
        %v308 = vld [vmem:[%s212 + $0xb0] sm:$0xff]
        %v309 = vld [vmem:[%s212 + $0xb8] sm:$0xff]
        %v310 = vld [vmem:[%s212 + $0xc0] sm:$0xff]
        %v311 = vld [vmem:[%s212 + $0xc8] sm:$0xff]
        %v312 = vld [vmem:[%s212 + $0xd0] sm:$0xff]
        %v313 = vld [vmem:[%s212 + $0xd8] sm:$0xff]
        %v314 = vld [vmem:[%s212 + $0xe0] sm:$0xff]
        %v315 = vld [vmem:[%s212 + $0xe8] sm:$0xff]
        %v316 = vld [vmem:[%s212 + $0xf0] sm:$0xff]
        %v317 = vld [vmem:[%s212 + $0xf8] sm:$0xff]
        %v318 = vlaneseq
        %v319 = vshrl.u32 %v318, 7
        %v320 = vsub.s32 0, %v319
        %v321 = vrot.slane %v245, %v320
        %v322 = vmul.f32 %v286, %v321
        %v323 = vmul.f32 %v287, %v321
        %v324 = vmul.f32 %v288, %v321
        %v325 = vmul.f32 %v289, %v321
        %v326 = vmul.f32 %v290, %v321
        %v327 = vmul.f32 %v291, %v321
        %v328 = vmul.f32 %v292, %v321
        %v329 = vmul.f32 %v293, %v321
        %v330 = vmul.f32 %v294, %v321
        %v331 = vmul.f32 %v295, %v321
        %v332 = vmul.f32 %v296, %v321
        %v333 = vmul.f32 %v297, %v321
        %v334 = vmul.f32 %v298, %v321
        %v335 = vmul.f32 %v299, %v321
        %v336 = vmul.f32 %v300, %v321
        %v337 = vmul.f32 %v301, %v321
        %v338 = vmul.f32 %v302, %v321
        %v339 = vmul.f32 %v303, %v321
        %v340 = vmul.f32 %v304, %v321
        %v341 = vmul.f32 %v305, %v321
        %v342 = vmul.f32 %v306, %v321
        %v343 = vmul.f32 %v307, %v321
        %v344 = vmul.f32 %v308, %v321
        %v345 = vmul.f32 %v309, %v321
        %v346 = vmul.f32 %v310, %v321
        %v347 = vmul.f32 %v311, %v321
        %v348 = vmul.f32 %v312, %v321
        %v349 = vmul.f32 %v313, %v321
        %v350 = vmul.f32 %v314, %v321
        %v351 = vmul.f32 %v315, %v321
        %v352 = vmul.f32 %v316, %v321
        %v353 = vmul.f32 %v317, %v321
        %v354 = vlaneseq
        %v355 = vshrl.u32 %v354, 7
        %v356 = vsub.s32 1, %v355
        %v357 = vrot.slane %v245, %v356
        %v358 = vadd.f32 %v322, %v357
        %v359 = vadd.f32 %v323, %v357
        %v360 = vadd.f32 %v324, %v357
        %v361 = vadd.f32 %v325, %v357
        %v362 = vadd.f32 %v326, %v357
        %v363 = vadd.f32 %v327, %v357
        %v364 = vadd.f32 %v328, %v357
        %v365 = vadd.f32 %v329, %v357
        %v366 = vadd.f32 %v330, %v357
        %v367 = vadd.f32 %v331, %v357
        %v368 = vadd.f32 %v332, %v357
        %v369 = vadd.f32 %v333, %v357
        %v370 = vadd.f32 %v334, %v357
        %v371 = vadd.f32 %v335, %v357
        %v372 = vadd.f32 %v336, %v357
        %v373 = vadd.f32 %v337, %v357
        %v374 = vadd.f32 %v338, %v357
        %v375 = vadd.f32 %v339, %v357
        %v376 = vadd.f32 %v340, %v357
        %v377 = vadd.f32 %v341, %v357
        %v378 = vadd.f32 %v342, %v357
        %v379 = vadd.f32 %v343, %v357
        %v380 = vadd.f32 %v344, %v357
        %v381 = vadd.f32 %v345, %v357
        %v382 = vadd.f32 %v346, %v357
        %v383 = vadd.f32 %v347, %v357
        %v384 = vadd.f32 %v348, %v357
        %v385 = vadd.f32 %v349, %v357
        %v386 = vadd.f32 %v350, %v357
        %v387 = vadd.f32 %v351, %v357
        %v388 = vadd.f32 %v352, %v357
        %v389 = vadd.f32 %v353, %v357
        %390 = vst [vmem:[%s253 + $0x1] sm:$0xff] %v358
        %391 = vst [vmem:[%s253 + $0x9] sm:$0xff] %v359
        %392 = vst [vmem:[%s253 + $0x19] sm:$0xff] %v360
        %393 = vst [vmem:[%s253 + $0x21] sm:$0xff] %v361
        %394 = vst [vmem:[%s253 + $0x31] sm:$0xff] %v362
        %395 = vst [vmem:[%s253 + $0x39] sm:$0xff] %v363
        %396 = vst [vmem:[%s253 + $0x49] sm:$0xff] %v364
        %397 = vst [vmem:[%s253 + $0x51] sm:$0xff] %v365
        %398 = vst [vmem:[%s253 + $0x61] sm:$0xff] %v366
        %399 = vst [vmem:[%s253 + $0x69] sm:$0xff] %v367
        %400 = vst [vmem:[%s253 + $0x79] sm:$0xff] %v368
        %401 = vst [vmem:[%s253 + $0x81] sm:$0xff] %v369
        %402 = vst [vmem:[%s253 + $0x91] sm:$0xff] %v370
        %403 = vst [vmem:[%s253 + $0x99] sm:$0xff] %v371
        %404 = vst [vmem:[%s253 + $0xa9] sm:$0xff] %v372
        %405 = vst [vmem:[%s253 + $0xb1] sm:$0xff] %v373
        %406 = vst [vmem:[%s253 + $0xc1] sm:$0xff] %v374
        %407 = vst [vmem:[%s253 + $0xc9] sm:$0xff] %v375
        %408 = vst [vmem:[%s253 + $0xd9] sm:$0xff] %v376
        %409 = vst [vmem:[%s253 + $0xe1] sm:$0xff] %v377
        %410 = vst [vmem:[%s253 + $0xf1] sm:$0xff] %v378
        %411 = vst [vmem:[%s253 + $0xf9] sm:$0xff] %v379
        %412 = vst [vmem:[%s253 + $0x109] sm:$0xff] %v380
        %413 = vst [vmem:[%s253 + $0x111] sm:$0xff] %v381
        %414 = vst [vmem:[%s253 + $0x121] sm:$0xff] %v382
        %415 = vst [vmem:[%s253 + $0x129] sm:$0xff] %v383
        %416 = vst [vmem:[%s253 + $0x139] sm:$0xff] %v384
        %417 = vst [vmem:[%s253 + $0x141] sm:$0xff] %v385
        %418 = vst [vmem:[%s253 + $0x151] sm:$0xff] %v386
        %419 = vst [vmem:[%s253 + $0x159] sm:$0xff] %v387
        %420 = vst [vmem:[%s253 + $0x169] sm:$0xff] %v388
        %421 = vst [vmem:[%s253 + $0x171] sm:$0xff] %v389
        %v422 = vld [vmem:[#allocation2] sm:$0xff]
        %v423 = vld [vmem:[#allocation2 + $0x8] sm:$0xff]
        %v424 = vld [vmem:[#allocation2 + $0x18] sm:$0xff]
        %v425 = vld [vmem:[#allocation2 + $0x20] sm:$0xff]
        %v426 = vld [vmem:[#allocation2 + $0x30] sm:$0xff]
        %v427 = vld [vmem:[#allocation2 + $0x38] sm:$0xff]
        %v428 = vld [vmem:[#allocation2 + $0x48] sm:$0xff]
        %v429 = vld [vmem:[#allocation2 + $0x50] sm:$0xff]
        %v430 = vld [vmem:[#allocation2 + $0x60] sm:$0xff]
        %v431 = vld [vmem:[#allocation2 + $0x68] sm:$0xff]
        %v432 = vld [vmem:[#allocation2 + $0x78] sm:$0xff]
        %v433 = vld [vmem:[#allocation2 + $0x80] sm:$0xff]
        %v434 = vld [vmem:[#allocation2 + $0x90] sm:$0xff]
        %v435 = vld [vmem:[#allocation2 + $0x98] sm:$0xff]
        %v436 = vld [vmem:[#allocation2 + $0xa8] sm:$0xff]
        %v437 = vld [vmem:[#allocation2 + $0xb0] sm:$0xff]
        %v438 = vld [vmem:[#allocation2 + $0xc0] sm:$0xff]
        %v439 = vld [vmem:[#allocation2 + $0xc8] sm:$0xff]
        %v440 = vld [vmem:[#allocation2 + $0xd8] sm:$0xff]
        %v441 = vld [vmem:[#allocation2 + $0xe0] sm:$0xff]
        %v442 = vld [vmem:[#allocation2 + $0xf0] sm:$0xff]
        %v443 = vld [vmem:[#allocation2 + $0xf8] sm:$0xff]
        %v444 = vld [vmem:[#allocation2 + $0x108] sm:$0xff]
        %v445 = vld [vmem:[#allocation2 + $0x110] sm:$0xff]
        %v446 = vld [vmem:[#allocation2 + $0x120] sm:$0xff]
        %v447 = vld [vmem:[#allocation2 + $0x128] sm:$0xff]
        %v448 = vld [vmem:[#allocation2 + $0x138] sm:$0xff]
        %v449 = vld [vmem:[#allocation2 + $0x140] sm:$0xff]
        %v450 = vld [vmem:[#allocation2 + $0x150] sm:$0xff]
        %v451 = vld [vmem:[#allocation2 + $0x158] sm:$0xff]
        %v452 = vld [vmem:[#allocation2 + $0x168] sm:$0xff]
        %v453 = vld [vmem:[#allocation2 + $0x170] sm:$0xff]
        %v454 = vld [vmem:[#allocation2 + $0x180] sm:$0xff]
        %v455 = vld [vmem:[#allocation2 + $0x188] sm:$0xff]
        %v456 = vld [vmem:[#allocation2 + $0x198] sm:$0xff]
        %v457 = vld [vmem:[#allocation2 + $0x1a0] sm:$0xff]
        %458 = vst [vmem:[#allocation3] sm:$0xff] %v422
        %459 = vst [vmem:[#allocation3 + $0x48] sm:$0xff] %v423
        %460 = vst [vmem:[#allocation3 + $0x90] sm:$0xff] %v424
        %461 = vst [vmem:[#allocation3 + $0xd8] sm:$0xff] %v425
        %462 = vst [vmem:[#allocation3 + $0x120] sm:$0xff] %v426
        %463 = vst [vmem:[#allocation3 + $0x168] sm:$0xff] %v427
        %464 = vst [vmem:[#allocation3 + $0x1b0] sm:$0xff] %v428
        %465 = vst [vmem:[#allocation3 + $0x1f8] sm:$0xff] %v429
        %466 = vst [vmem:[#allocation3 + $0x240] sm:$0xff] %v430
        %467 = vst [vmem:[#allocation3 + $0x288] sm:$0xff] %v431
        %468 = vst [vmem:[#allocation3 + $0x2d0] sm:$0xff] %v432
        %469 = vst [vmem:[#allocation3 + $0x318] sm:$0xff] %v433
        %470 = vst [vmem:[#allocation3 + $0x360] sm:$0xff] %v434
        %471 = vst [vmem:[#allocation3 + $0x3a8] sm:$0xff] %v435
        %472 = vst [vmem:[#allocation3 + $0x3f0] sm:$0xff] %v436
        %473 = vst [vmem:[#allocation3 + $0x438] sm:$0xff] %v437
        %474 = vst [vmem:[#allocation3 + $0x480] sm:$0xff] %v438
        %475 = vst [vmem:[#allocation3 + $0x4c8] sm:$0xff] %v439
        %476 = vst [vmem:[#allocation3 + $0x510] sm:$0xff] %v440
        %477 = vst [vmem:[#allocation3 + $0x558] sm:$0xff] %v441
        %478 = vst [vmem:[#allocation3 + $0x5a0] sm:$0xff] %v442
        %479 = vst [vmem:[#allocation3 + $0x5e8] sm:$0xff] %v443
        %480 = vst [vmem:[#allocation3 + $0x630] sm:$0xff] %v444
        %481 = vst [vmem:[#allocation3 + $0x678] sm:$0xff] %v445
        %482 = vst [vmem:[#allocation3 + $0x6c0] sm:$0xff] %v446
        %483 = vst [vmem:[#allocation3 + $0x708] sm:$0xff] %v447
        %484 = vst [vmem:[#allocation3 + $0x750] sm:$0xff] %v448
        %485 = vst [vmem:[#allocation3 + $0x798] sm:$0xff] %v449
        %486 = vst [vmem:[#allocation3 + $0x7e0] sm:$0xff] %v450
        %487 = vst [vmem:[#allocation3 + $0x828] sm:$0xff] %v451
        %488 = vst [vmem:[#allocation3 + $0x870] sm:$0xff] %v452
        %489 = vst [vmem:[#allocation3 + $0x8b8] sm:$0xff] %v453
        %490 = vst [vmem:[#allocation3 + $0x18] sm:$0xff] %v424
        %491 = vst [vmem:[#allocation3 + $0x60] sm:$0xff] %v425
        %492 = vst [vmem:[#allocation3 + $0xa8] sm:$0xff] %v426
        %493 = vst [vmem:[#allocation3 + $0xf0] sm:$0xff] %v427
        %494 = vst [vmem:[#allocation3 + $0x138] sm:$0xff] %v428
        %495 = vst [vmem:[#allocation3 + $0x180] sm:$0xff] %v429
        %496 = vst [vmem:[#allocation3 + $0x1c8] sm:$0xff] %v430
        %497 = vst [vmem:[#allocation3 + $0x210] sm:$0xff] %v431
        %498 = vst [vmem:[#allocation3 + $0x258] sm:$0xff] %v432
        %499 = vst [vmem:[#allocation3 + $0x2a0] sm:$0xff] %v433
        %500 = vst [vmem:[#allocation3 + $0x2e8] sm:$0xff] %v434
        %501 = vst [vmem:[#allocation3 + $0x330] sm:$0xff] %v435
        %502 = vst [vmem:[#allocation3 + $0x378] sm:$0xff] %v436
        %503 = vst [vmem:[#allocation3 + $0x3c0] sm:$0xff] %v437
        %504 = vst [vmem:[#allocation3 + $0x408] sm:$0xff] %v438
        %505 = vst [vmem:[#allocation3 + $0x450] sm:$0xff] %v439
        %506 = vst [vmem:[#allocation3 + $0x498] sm:$0xff] %v440
        %507 = vst [vmem:[#allocation3 + $0x4e0] sm:$0xff] %v441
        %508 = vst [vmem:[#allocation3 + $0x528] sm:$0xff] %v442
        %509 = vst [vmem:[#allocation3 + $0x570] sm:$0xff] %v443
        %510 = vst [vmem:[#allocation3 + $0x5b8] sm:$0xff] %v444
        %511 = vst [vmem:[#allocation3 + $0x600] sm:$0xff] %v445
        %512 = vst [vmem:[#allocation3 + $0x648] sm:$0xff] %v446
        %513 = vst [vmem:[#allocation3 + $0x690] sm:$0xff] %v447
        %514 = vst [vmem:[#allocation3 + $0x6d8] sm:$0xff] %v448
        %515 = vst [vmem:[#allocation3 + $0x720] sm:$0xff] %v449
        %516 = vst [vmem:[#allocation3 + $0x768] sm:$0xff] %v450
        %517 = vst [vmem:[#allocation3 + $0x7b0] sm:$0xff] %v451
        %518 = vst [vmem:[#allocation3 + $0x7f8] sm:$0xff] %v452
        %519 = vst [vmem:[#allocation3 + $0x840] sm:$0xff] %v453
        %520 = vst [vmem:[#allocation3 + $0x888] sm:$0xff] %v454
        %521 = vst [vmem:[#allocation3 + $0x8d0] sm:$0xff] %v455
        %522 = vst [vmem:[#allocation3 + $0x30] sm:$0xff] %v426
        %523 = vst [vmem:[#allocation3 + $0x78] sm:$0xff] %v427
        %524 = vst [vmem:[#allocation3 + $0xc0] sm:$0xff] %v428
        %525 = vst [vmem:[#allocation3 + $0x108] sm:$0xff] %v429
        %526 = vst [vmem:[#allocation3 + $0x150] sm:$0xff] %v430
        %527 = vst [vmem:[#allocation3 + $0x198] sm:$0xff] %v431
        %528 = vst [vmem:[#allocation3 + $0x1e0] sm:$0xff] %v432
        %529 = vst [vmem:[#allocation3 + $0x228] sm:$0xff] %v433
        %530 = vst [vmem:[#allocation3 + $0x270] sm:$0xff] %v434
        %531 = vst [vmem:[#allocation3 + $0x2b8] sm:$0xff] %v435
        %532 = vst [vmem:[#allocation3 + $0x300] sm:$0xff] %v436
        %533 = vst [vmem:[#allocation3 + $0x348] sm:$0xff] %v437
        %534 = vst [vmem:[#allocation3 + $0x390] sm:$0xff] %v438
        %535 = vst [vmem:[#allocation3 + $0x3d8] sm:$0xff] %v439
        %536 = vst [vmem:[#allocation3 + $0x420] sm:$0xff] %v440
        %537 = vst [vmem:[#allocation3 + $0x468] sm:$0xff] %v441
        %538 = vst [vmem:[#allocation3 + $0x4b0] sm:$0xff] %v442
        %539 = vst [vmem:[#allocation3 + $0x4f8] sm:$0xff] %v443
        %540 = vst [vmem:[#allocation3 + $0x540] sm:$0xff] %v444
        %541 = vst [vmem:[#allocation3 + $0x588] sm:$0xff] %v445
        %542 = vst [vmem:[#allocation3 + $0x5d0] sm:$0xff] %v446
        %543 = vst [vmem:[#allocation3 + $0x618] sm:$0xff] %v447
        %544 = vst [vmem:[#allocation3 + $0x660] sm:$0xff] %v448
        %545 = vst [vmem:[#allocation3 + $0x6a8] sm:$0xff] %v449
        %546 = vst [vmem:[#allocation3 + $0x6f0] sm:$0xff] %v450
        %547 = vst [vmem:[#allocation3 + $0x738] sm:$0xff] %v451
        %548 = vst [vmem:[#allocation3 + $0x780] sm:$0xff] %v452
        %549 = vst [vmem:[#allocation3 + $0x7c8] sm:$0xff] %v453
        %550 = vst [vmem:[#allocation3 + $0x810] sm:$0xff] %v454
        %551 = vst [vmem:[#allocation3 + $0x858] sm:$0xff] %v455
        %552 = vst [vmem:[#allocation3 + $0x8a0] sm:$0xff] %v456
        %553 = vst [vmem:[#allocation3 + $0x8e8] sm:$0xff] %v457
        %v554 = vld [vmem:[#allocation2 + $0x1] sm:$0xff]
        %v555 = vld [vmem:[#allocation2 + $0x9] sm:$0xff]
        %v556 = vld [vmem:[#allocation2 + $0x19] sm:$0xff]
        %v557 = vld [vmem:[#allocation2 + $0x21] sm:$0xff]
        %v558 = vld [vmem:[#allocation2 + $0x31] sm:$0xff]
        %v559 = vld [vmem:[#allocation2 + $0x39] sm:$0xff]
        %v560 = vld [vmem:[#allocation2 + $0x49] sm:$0xff]
        %v561 = vld [vmem:[#allocation2 + $0x51] sm:$0xff]
        %v562 = vld [vmem:[#allocation2 + $0x61] sm:$0xff]
        %v563 = vld [vmem:[#allocation2 + $0x69] sm:$0xff]
        %v564 = vld [vmem:[#allocation2 + $0x79] sm:$0xff]
        %v565 = vld [vmem:[#allocation2 + $0x81] sm:$0xff]
        %v566 = vld [vmem:[#allocation2 + $0x91] sm:$0xff]
        %v567 = vld [vmem:[#allocation2 + $0x99] sm:$0xff]
        %v568 = vld [vmem:[#allocation2 + $0xa9] sm:$0xff]
        %v569 = vld [vmem:[#allocation2 + $0xb1] sm:$0xff]
        %v570 = vld [vmem:[#allocation2 + $0xc1] sm:$0xff]
        %v571 = vld [vmem:[#allocation2 + $0xc9] sm:$0xff]
        %v572 = vld [vmem:[#allocation2 + $0xd9] sm:$0xff]
        %v573 = vld [vmem:[#allocation2 + $0xe1] sm:$0xff]
        %v574 = vld [vmem:[#allocation2 + $0xf1] sm:$0xff]
        %v575 = vld [vmem:[#allocation2 + $0xf9] sm:$0xff]
        %v576 = vld [vmem:[#allocation2 + $0x109] sm:$0xff]
        %v577 = vld [vmem:[#allocation2 + $0x111] sm:$0xff]
        %v578 = vld [vmem:[#allocation2 + $0x121] sm:$0xff]
        %v579 = vld [vmem:[#allocation2 + $0x129] sm:$0xff]
        %v580 = vld [vmem:[#allocation2 + $0x139] sm:$0xff]
        %v581 = vld [vmem:[#allocation2 + $0x141] sm:$0xff]
        %v582 = vld [vmem:[#allocation2 + $0x151] sm:$0xff]
        %v583 = vld [vmem:[#allocation2 + $0x159] sm:$0xff]
        %v584 = vld [vmem:[#allocation2 + $0x169] sm:$0xff]
        %v585 = vld [vmem:[#allocation2 + $0x171] sm:$0xff]
        %v586 = vld [vmem:[#allocation2 + $0x181] sm:$0xff]
        %v587 = vld [vmem:[#allocation2 + $0x189] sm:$0xff]
        %v588 = vld [vmem:[#allocation2 + $0x199] sm:$0xff]
        %v589 = vld [vmem:[#allocation2 + $0x1a1] sm:$0xff]
        %590 = vst [vmem:[#allocation3 + $0x8] sm:$0xff] %v554
        %591 = vst [vmem:[#allocation3 + $0x50] sm:$0xff] %v555
        %592 = vst [vmem:[#allocation3 + $0x98] sm:$0xff] %v556
        %593 = vst [vmem:[#allocation3 + $0xe0] sm:$0xff] %v557
        %594 = vst [vmem:[#allocation3 + $0x128] sm:$0xff] %v558
        %595 = vst [vmem:[#allocation3 + $0x170] sm:$0xff] %v559
        %596 = vst [vmem:[#allocation3 + $0x1b8] sm:$0xff] %v560
        %597 = vst [vmem:[#allocation3 + $0x200] sm:$0xff] %v561
        %598 = vst [vmem:[#allocation3 + $0x248] sm:$0xff] %v562
        %599 = vst [vmem:[#allocation3 + $0x290] sm:$0xff] %v563
        %600 = vst [vmem:[#allocation3 + $0x2d8] sm:$0xff] %v564
        %601 = vst [vmem:[#allocation3 + $0x320] sm:$0xff] %v565
        %602 = vst [vmem:[#allocation3 + $0x368] sm:$0xff] %v566
        %603 = vst [vmem:[#allocation3 + $0x3b0] sm:$0xff] %v567
        %604 = vst [vmem:[#allocation3 + $0x3f8] sm:$0xff] %v568
        %605 = vst [vmem:[#allocation3 + $0x440] sm:$0xff] %v569
        %606 = vst [vmem:[#allocation3 + $0x488] sm:$0xff] %v570
        %607 = vst [vmem:[#allocation3 + $0x4d0] sm:$0xff] %v571
        %608 = vst [vmem:[#allocation3 + $0x518] sm:$0xff] %v572
        %609 = vst [vmem:[#allocation3 + $0x560] sm:$0xff] %v573
        %610 = vst [vmem:[#allocation3 + $0x5a8] sm:$0xff] %v574
        %611 = vst [vmem:[#allocation3 + $0x5f0] sm:$0xff] %v575
        %612 = vst [vmem:[#allocation3 + $0x638] sm:$0xff] %v576
        %613 = vst [vmem:[#allocation3 + $0x680] sm:$0xff] %v577
        %614 = vst [vmem:[#allocation3 + $0x6c8] sm:$0xff] %v578
        %615 = vst [vmem:[#allocation3 + $0x710] sm:$0xff] %v579
        %616 = vst [vmem:[#allocation3 + $0x758] sm:$0xff] %v580
        %617 = vst [vmem:[#allocation3 + $0x7a0] sm:$0xff] %v581
        %618 = vst [vmem:[#allocation3 + $0x7e8] sm:$0xff] %v582
        %619 = vst [vmem:[#allocation3 + $0x830] sm:$0xff] %v583
        %620 = vst [vmem:[#allocation3 + $0x878] sm:$0xff] %v584
        %621 = vst [vmem:[#allocation3 + $0x8c0] sm:$0xff] %v585
        %622 = vst [vmem:[#allocation3 + $0x20] sm:$0xff] %v556
        %623 = vst [vmem:[#allocation3 + $0x68] sm:$0xff] %v557
        %624 = vst [vmem:[#allocation3 + $0xb0] sm:$0xff] %v558
        %625 = vst [vmem:[#allocation3 + $0xf8] sm:$0xff] %v559
        %626 = vst [vmem:[#allocation3 + $0x140] sm:$0xff] %v560
        %627 = vst [vmem:[#allocation3 + $0x188] sm:$0xff] %v561
        %628 = vst [vmem:[#allocation3 + $0x1d0] sm:$0xff] %v562
        %629 = vst [vmem:[#allocation3 + $0x218] sm:$0xff] %v563
        %630 = vst [vmem:[#allocation3 + $0x260] sm:$0xff] %v564
        %631 = vst [vmem:[#allocation3 + $0x2a8] sm:$0xff] %v565
        %632 = vst [vmem:[#allocation3 + $0x2f0] sm:$0xff] %v566
        %633 = vst [vmem:[#allocation3 + $0x338] sm:$0xff] %v567
        %634 = vst [vmem:[#allocation3 + $0x380] sm:$0xff] %v568
        %635 = vst [vmem:[#allocation3 + $0x3c8] sm:$0xff] %v569
        %636 = vst [vmem:[#allocation3 + $0x410] sm:$0xff] %v570
        %637 = vst [vmem:[#allocation3 + $0x458] sm:$0xff] %v571
        %638 = vst [vmem:[#allocation3 + $0x4a0] sm:$0xff] %v572
        %639 = vst [vmem:[#allocation3 + $0x4e8] sm:$0xff] %v573
        %640 = vst [vmem:[#allocation3 + $0x530] sm:$0xff] %v574
        %641 = vst [vmem:[#allocation3 + $0x578] sm:$0xff] %v575
        %642 = vst [vmem:[#allocation3 + $0x5c0] sm:$0xff] %v576
        %643 = vst [vmem:[#allocation3 + $0x608] sm:$0xff] %v577
        %644 = vst [vmem:[#allocation3 + $0x650] sm:$0xff] %v578
        %645 = vst [vmem:[#allocation3 + $0x698] sm:$0xff] %v579
        %646 = vst [vmem:[#allocation3 + $0x6e0] sm:$0xff] %v580
        %647 = vst [vmem:[#allocation3 + $0x728] sm:$0xff] %v581
        %648 = vst [vmem:[#allocation3 + $0x770] sm:$0xff] %v582
        %649 = vst [vmem:[#allocation3 + $0x7b8] sm:$0xff] %v583
        %650 = vst [vmem:[#allocation3 + $0x800] sm:$0xff] %v584
        %651 = vst [vmem:[#allocation3 + $0x848] sm:$0xff] %v585
        %652 = vst [vmem:[#allocation3 + $0x890] sm:$0xff] %v586
        %653 = vst [vmem:[#allocation3 + $0x8d8] sm:$0xff] %v587
        %654 = vst [vmem:[#allocation3 + $0x38] sm:$0xff] %v558
        %655 = vst [vmem:[#allocation3 + $0x80] sm:$0xff] %v559
        %656 = vst [vmem:[#allocation3 + $0xc8] sm:$0xff] %v560
        %657 = vst [vmem:[#allocation3 + $0x110] sm:$0xff] %v561
        %658 = vst [vmem:[#allocation3 + $0x158] sm:$0xff] %v562
        %659 = vst [vmem:[#allocation3 + $0x1a0] sm:$0xff] %v563
        %660 = vst [vmem:[#allocation3 + $0x1e8] sm:$0xff] %v564
        %661 = vst [vmem:[#allocation3 + $0x230] sm:$0xff] %v565
        %662 = vst [vmem:[#allocation3 + $0x278] sm:$0xff] %v566
        %663 = vst [vmem:[#allocation3 + $0x2c0] sm:$0xff] %v567
        %664 = vst [vmem:[#allocation3 + $0x308] sm:$0xff] %v568
        %665 = vst [vmem:[#allocation3 + $0x350] sm:$0xff] %v569
        %666 = vst [vmem:[#allocation3 + $0x398] sm:$0xff] %v570
        %667 = vst [vmem:[#allocation3 + $0x3e0] sm:$0xff] %v571
        %668 = vst [vmem:[#allocation3 + $0x428] sm:$0xff] %v572
        %669 = vst [vmem:[#allocation3 + $0x470] sm:$0xff] %v573
        %670 = vst [vmem:[#allocation3 + $0x4b8] sm:$0xff] %v574
        %671 = vst [vmem:[#allocation3 + $0x500] sm:$0xff] %v575
        %672 = vst [vmem:[#allocation3 + $0x548] sm:$0xff] %v576
        %673 = vst [vmem:[#allocation3 + $0x590] sm:$0xff] %v577
        %674 = vst [vmem:[#allocation3 + $0x5d8] sm:$0xff] %v578
        %675 = vst [vmem:[#allocation3 + $0x620] sm:$0xff] %v579
        %676 = vst [vmem:[#allocation3 + $0x668] sm:$0xff] %v580
        %677 = vst [vmem:[#allocation3 + $0x6b0] sm:$0xff] %v581
        %678 = vst [vmem:[#allocation3 + $0x6f8] sm:$0xff] %v582
        %679 = vst [vmem:[#allocation3 + $0x740] sm:$0xff] %v583
        %680 = vst [vmem:[#allocation3 + $0x788] sm:$0xff] %v584
        %681 = vst [vmem:[#allocation3 + $0x7d0] sm:$0xff] %v585
        %682 = vst [vmem:[#allocation3 + $0x818] sm:$0xff] %v586
        %683 = vst [vmem:[#allocation3 + $0x860] sm:$0xff] %v587
        %684 = vst [vmem:[#allocation3 + $0x8a8] sm:$0xff] %v588
        %685 = vst [vmem:[#allocation3 + $0x8f0] sm:$0xff] %v589
        %v686 = vld [vmem:[#allocation2 + $0x2] sm:$0xff]
        %v687 = vld [vmem:[#allocation2 + $0xa] sm:$0xff]
        %v688 = vld [vmem:[#allocation2 + $0x1a] sm:$0xff]
        %v689 = vld [vmem:[#allocation2 + $0x22] sm:$0xff]
        %v690 = vld [vmem:[#allocation2 + $0x32] sm:$0xff]
        %v691 = vld [vmem:[#allocation2 + $0x3a] sm:$0xff]
        %v692 = vld [vmem:[#allocation2 + $0x4a] sm:$0xff]
        %v693 = vld [vmem:[#allocation2 + $0x52] sm:$0xff]
        %v694 = vld [vmem:[#allocation2 + $0x62] sm:$0xff]
        %v695 = vld [vmem:[#allocation2 + $0x6a] sm:$0xff]
        %v696 = vld [vmem:[#allocation2 + $0x7a] sm:$0xff]
        %v697 = vld [vmem:[#allocation2 + $0x82] sm:$0xff]
        %v698 = vld [vmem:[#allocation2 + $0x92] sm:$0xff]
        %v699 = vld [vmem:[#allocation2 + $0x9a] sm:$0xff]
        %v700 = vld [vmem:[#allocation2 + $0xaa] sm:$0xff]
        %v701 = vld [vmem:[#allocation2 + $0xb2] sm:$0xff]
        %v702 = vld [vmem:[#allocation2 + $0xc2] sm:$0xff]
        %v703 = vld [vmem:[#allocation2 + $0xca] sm:$0xff]
        %v704 = vld [vmem:[#allocation2 + $0xda] sm:$0xff]
        %v705 = vld [vmem:[#allocation2 + $0xe2] sm:$0xff]
        %v706 = vld [vmem:[#allocation2 + $0xf2] sm:$0xff]
        %v707 = vld [vmem:[#allocation2 + $0xfa] sm:$0xff]
        %v708 = vld [vmem:[#allocation2 + $0x10a] sm:$0xff]
        %v709 = vld [vmem:[#allocation2 + $0x112] sm:$0xff]
        %v710 = vld [vmem:[#allocation2 + $0x122] sm:$0xff]
        %v711 = vld [vmem:[#allocation2 + $0x12a] sm:$0xff]
        %v712 = vld [vmem:[#allocation2 + $0x13a] sm:$0xff]
        %v713 = vld [vmem:[#allocation2 + $0x142] sm:$0xff]
        %v714 = vld [vmem:[#allocation2 + $0x152] sm:$0xff]
        %v715 = vld [vmem:[#allocation2 + $0x15a] sm:$0xff]
        %v716 = vld [vmem:[#allocation2 + $0x16a] sm:$0xff]
        %v717 = vld [vmem:[#allocation2 + $0x172] sm:$0xff]
        %v718 = vld [vmem:[#allocation2 + $0x182] sm:$0xff]
        %v719 = vld [vmem:[#allocation2 + $0x18a] sm:$0xff]
        %v720 = vld [vmem:[#allocation2 + $0x19a] sm:$0xff]
        %v721 = vld [vmem:[#allocation2 + $0x1a2] sm:$0xff]
        %722 = vst [vmem:[#allocation3 + $0x10] sm:$0xff] %v686
        %723 = vst [vmem:[#allocation3 + $0x58] sm:$0xff] %v687
        %724 = vst [vmem:[#allocation3 + $0xa0] sm:$0xff] %v688
        %725 = vst [vmem:[#allocation3 + $0xe8] sm:$0xff] %v689
        %726 = vst [vmem:[#allocation3 + $0x130] sm:$0xff] %v690
        %727 = vst [vmem:[#allocation3 + $0x178] sm:$0xff] %v691
        %728 = vst [vmem:[#allocation3 + $0x1c0] sm:$0xff] %v692
        %729 = vst [vmem:[#allocation3 + $0x208] sm:$0xff] %v693
        %730 = vst [vmem:[#allocation3 + $0x250] sm:$0xff] %v694
        %731 = vst [vmem:[#allocation3 + $0x298] sm:$0xff] %v695
        %732 = vst [vmem:[#allocation3 + $0x2e0] sm:$0xff] %v696
        %733 = vst [vmem:[#allocation3 + $0x328] sm:$0xff] %v697
        %734 = vst [vmem:[#allocation3 + $0x370] sm:$0xff] %v698
        %735 = vst [vmem:[#allocation3 + $0x3b8] sm:$0xff] %v699
        %736 = vst [vmem:[#allocation3 + $0x400] sm:$0xff] %v700
        %737 = vst [vmem:[#allocation3 + $0x448] sm:$0xff] %v701
        %738 = vst [vmem:[#allocation3 + $0x490] sm:$0xff] %v702
        %739 = vst [vmem:[#allocation3 + $0x4d8] sm:$0xff] %v703
        %740 = vst [vmem:[#allocation3 + $0x520] sm:$0xff] %v704
        %741 = vst [vmem:[#allocation3 + $0x568] sm:$0xff] %v705
        %742 = vst [vmem:[#allocation3 + $0x5b0] sm:$0xff] %v706
        %743 = vst [vmem:[#allocation3 + $0x5f8] sm:$0xff] %v707
        %744 = vst [vmem:[#allocation3 + $0x640] sm:$0xff] %v708
        %745 = vst [vmem:[#allocation3 + $0x688] sm:$0xff] %v709
        %746 = vst [vmem:[#allocation3 + $0x6d0] sm:$0xff] %v710
        %747 = vst [vmem:[#allocation3 + $0x718] sm:$0xff] %v711
        %748 = vst [vmem:[#allocation3 + $0x760] sm:$0xff] %v712
        %749 = vst [vmem:[#allocation3 + $0x7a8] sm:$0xff] %v713
        %750 = vst [vmem:[#allocation3 + $0x7f0] sm:$0xff] %v714
        %751 = vst [vmem:[#allocation3 + $0x838] sm:$0xff] %v715
        %752 = vst [vmem:[#allocation3 + $0x880] sm:$0xff] %v716
        %753 = vst [vmem:[#allocation3 + $0x8c8] sm:$0xff] %v717
        %754 = vst [vmem:[#allocation3 + $0x28] sm:$0xff] %v688
        %755 = vst [vmem:[#allocation3 + $0x70] sm:$0xff] %v689
        %756 = vst [vmem:[#allocation3 + $0xb8] sm:$0xff] %v690
        %757 = vst [vmem:[#allocation3 + $0x100] sm:$0xff] %v691
        %758 = vst [vmem:[#allocation3 + $0x148] sm:$0xff] %v692
        %759 = vst [vmem:[#allocation3 + $0x190] sm:$0xff] %v693
        %760 = vst [vmem:[#allocation3 + $0x1d8] sm:$0xff] %v694
        %761 = vst [vmem:[#allocation3 + $0x220] sm:$0xff] %v695
        %762 = vst [vmem:[#allocation3 + $0x268] sm:$0xff] %v696
        %763 = vst [vmem:[#allocation3 + $0x2b0] sm:$0xff] %v697
        %764 = vst [vmem:[#allocation3 + $0x2f8] sm:$0xff] %v698
        %765 = vst [vmem:[#allocation3 + $0x340] sm:$0xff] %v699
        %766 = vst [vmem:[#allocation3 + $0x388] sm:$0xff] %v700
        %767 = vst [vmem:[#allocation3 + $0x3d0] sm:$0xff] %v701
        %768 = vst [vmem:[#allocation3 + $0x418] sm:$0xff] %v702
        %769 = vst [vmem:[#allocation3 + $0x460] sm:$0xff] %v703
        %770 = vst [vmem:[#allocation3 + $0x4a8] sm:$0xff] %v704
        %771 = vst [vmem:[#allocation3 + $0x4f0] sm:$0xff] %v705
        %772 = vst [vmem:[#allocation3 + $0x538] sm:$0xff] %v706
        %773 = vst [vmem:[#allocation3 + $0x580] sm:$0xff] %v707
        %774 = vst [vmem:[#allocation3 + $0x5c8] sm:$0xff] %v708
        %775 = vst [vmem:[#allocation3 + $0x610] sm:$0xff] %v709
        %776 = vst [vmem:[#allocation3 + $0x658] sm:$0xff] %v710
        %777 = vst [vmem:[#allocation3 + $0x6a0] sm:$0xff] %v711
        %778 = vst [vmem:[#allocation3 + $0x6e8] sm:$0xff] %v712
        %779 = vst [vmem:[#allocation3 + $0x730] sm:$0xff] %v713
        %780 = vst [vmem:[#allocation3 + $0x778] sm:$0xff] %v714
        %781 = vst [vmem:[#allocation3 + $0x7c0] sm:$0xff] %v715
        %782 = vst [vmem:[#allocation3 + $0x808] sm:$0xff] %v716
        %783 = vst [vmem:[#allocation3 + $0x850] sm:$0xff] %v717
        %784 = vst [vmem:[#allocation3 + $0x898] sm:$0xff] %v718
        %785 = vst [vmem:[#allocation3 + $0x8e0] sm:$0xff] %v719
        %786 = vst [vmem:[#allocation3 + $0x40] sm:$0xff] %v690
        %787 = vst [vmem:[#allocation3 + $0x88] sm:$0xff] %v691
        %788 = vst [vmem:[#allocation3 + $0xd0] sm:$0xff] %v692
        %789 = vst [vmem:[#allocation3 + $0x118] sm:$0xff] %v693
        %790 = vst [vmem:[#allocation3 + $0x160] sm:$0xff] %v694
        %791 = vst [vmem:[#allocation3 + $0x1a8] sm:$0xff] %v695
        %792 = vst [vmem:[#allocation3 + $0x1f0] sm:$0xff] %v696
        %793 = vst [vmem:[#allocation3 + $0x238] sm:$0xff] %v697
        %794 = vst [vmem:[#allocation3 + $0x280] sm:$0xff] %v698
        %795 = vst [vmem:[#allocation3 + $0x2c8] sm:$0xff] %v699
        %796 = vst [vmem:[#allocation3 + $0x310] sm:$0xff] %v700
        %797 = vst [vmem:[#allocation3 + $0x358] sm:$0xff] %v701
        %798 = vst [vmem:[#allocation3 + $0x3a0] sm:$0xff] %v702
        %799 = vst [vmem:[#allocation3 + $0x3e8] sm:$0xff] %v703
        %800 = vst [vmem:[#allocation3 + $0x430] sm:$0xff] %v704
        %801 = vst [vmem:[#allocation3 + $0x478] sm:$0xff] %v705
        %802 = vst [vmem:[#allocation3 + $0x4c0] sm:$0xff] %v706
        %803 = vst [vmem:[#allocation3 + $0x508] sm:$0xff] %v707
        %804 = vst [vmem:[#allocation3 + $0x550] sm:$0xff] %v708
        %805 = vst [vmem:[#allocation3 + $0x598] sm:$0xff] %v709
        %806 = vst [vmem:[#allocation3 + $0x5e0] sm:$0xff] %v710
        %807 = vst [vmem:[#allocation3 + $0x628] sm:$0xff] %v711
        %808 = vst [vmem:[#allocation3 + $0x670] sm:$0xff] %v712
        %809 = vst [vmem:[#allocation3 + $0x6b8] sm:$0xff] %v713
        %810 = vst [vmem:[#allocation3 + $0x700] sm:$0xff] %v714
        %811 = vst [vmem:[#allocation3 + $0x748] sm:$0xff] %v715
        %812 = vst [vmem:[#allocation3 + $0x790] sm:$0xff] %v716
        %813 = vst [vmem:[#allocation3 + $0x7d8] sm:$0xff] %v717
        %814 = vst [vmem:[#allocation3 + $0x820] sm:$0xff] %v718
        %815 = vst [vmem:[#allocation3 + $0x868] sm:$0xff] %v719
        %816 = vst [vmem:[#allocation3 + $0x8b0] sm:$0xff] %v720
        %817 = vst [vmem:[#allocation3 + $0x8f8] sm:$0xff] %v721
        %v818 = vld [vmem:[#allocation3] sm:$0xff]
        %v819 = vld [vmem:[#allocation3 + $0x8] sm:$0xff]
        %v820 = vld [vmem:[#allocation3 + $0x10] sm:$0xff]
        %v821 = vld [vmem:[#allocation3 + $0x18] sm:$0xff]
        %v822 = vld [vmem:[#allocation3 + $0x20] sm:$0xff]
        %v823 = vld [vmem:[#allocation3 + $0x28] sm:$0xff]
        %v824 = vld [vmem:[#allocation3 + $0x30] sm:$0xff]
        %v825 = vld [vmem:[#allocation3 + $0x38] sm:$0xff]
        %v826 = vld [vmem:[#allocation3 + $0x40] sm:$0xff]
        %v827 = vld [vmem:[#allocation3 + $0x48] sm:$0xff]
        %v828 = vld [vmem:[#allocation3 + $0x50] sm:$0xff]
        %v829 = vld [vmem:[#allocation3 + $0x58] sm:$0xff]
        %v830 = vld [vmem:[#allocation3 + $0x60] sm:$0xff]
        %v831 = vld [vmem:[#allocation3 + $0x68] sm:$0xff]
        %v832 = vld [vmem:[#allocation3 + $0x70] sm:$0xff]
        %v833 = vld [vmem:[#allocation3 + $0x78] sm:$0xff]
        %v834 = vld [vmem:[#allocation3 + $0x80] sm:$0xff]
        %v835 = vld [vmem:[#allocation3 + $0x88] sm:$0xff]
        %v836 = vld [vmem:[#allocation3 + $0x90] sm:$0xff]
        %v837 = vld [vmem:[#allocation3 + $0x98] sm:$0xff]
        %v838 = vld [vmem:[#allocation3 + $0xa0] sm:$0xff]
        %v839 = vld [vmem:[#allocation3 + $0xa8] sm:$0xff]
        %v840 = vld [vmem:[#allocation3 + $0xb0] sm:$0xff]
        %v841 = vld [vmem:[#allocation3 + $0xb8] sm:$0xff]
        %v842 = vld [vmem:[#allocation3 + $0xc0] sm:$0xff]
        %v843 = vld [vmem:[#allocation3 + $0xc8] sm:$0xff]
        %v844 = vld [vmem:[#allocation3 + $0xd0] sm:$0xff]
        %v845 = vld [vmem:[#allocation3 + $0xd8] sm:$0xff]
        %v846 = vld [vmem:[#allocation3 + $0xe0] sm:$0xff]
        %v847 = vld [vmem:[#allocation3 + $0xe8] sm:$0xff]
        %v848 = vld [vmem:[#allocation3 + $0xf0] sm:$0xff]
        %v849 = vld [vmem:[#allocation3 + $0xf8] sm:$0xff]
        %v850 = vld [vmem:[#allocation3 + $0x100] sm:$0xff]
        %v851 = vld [vmem:[#allocation3 + $0x108] sm:$0xff]
        %v852 = vld [vmem:[#allocation3 + $0x110] sm:$0xff]
        %v853 = vld [vmem:[#allocation3 + $0x118] sm:$0xff]
        %v854 = vld [vmem:[#allocation3 + $0x120] sm:$0xff]
        %v855 = vld [vmem:[#allocation3 + $0x128] sm:$0xff]
        %v856 = vld [vmem:[#allocation3 + $0x130] sm:$0xff]
        %v857 = vld [vmem:[#allocation3 + $0x138] sm:$0xff]
        %v858 = vld [vmem:[#allocation3 + $0x140] sm:$0xff]
        %v859 = vld [vmem:[#allocation3 + $0x148] sm:$0xff]
        %v860 = vld [vmem:[#allocation3 + $0x150] sm:$0xff]
        %v861 = vld [vmem:[#allocation3 + $0x158] sm:$0xff]
        %v862 = vld [vmem:[#allocation3 + $0x160] sm:$0xff]
        %v863 = vld [vmem:[#allocation3 + $0x168] sm:$0xff]
        %v864 = vld [vmem:[#allocation3 + $0x170] sm:$0xff]
        %v865 = vld [vmem:[#allocation3 + $0x178] sm:$0xff]
        %v866 = vld [vmem:[#allocation3 + $0x180] sm:$0xff]
        %v867 = vld [vmem:[#allocation3 + $0x188] sm:$0xff]
        %v868 = vld [vmem:[#allocation3 + $0x190] sm:$0xff]
        %v869 = vld [vmem:[#allocation3 + $0x198] sm:$0xff]
        %v870 = vld [vmem:[#allocation3 + $0x1a0] sm:$0xff]
        %v871 = vld [vmem:[#allocation3 + $0x1a8] sm:$0xff]
        %v872 = vld [vmem:[#allocation3 + $0x1b0] sm:$0xff]
        %v873 = vld [vmem:[#allocation3 + $0x1b8] sm:$0xff]
        %v874 = vld [vmem:[#allocation3 + $0x1c0] sm:$0xff]
        %v875 = vld [vmem:[#allocation3 + $0x1c8] sm:$0xff]
        %v876 = vld [vmem:[#allocation3 + $0x1d0] sm:$0xff]
        %v877 = vld [vmem:[#allocation3 + $0x1d8] sm:$0xff]
        %v878 = vld [vmem:[#allocation3 + $0x1e0] sm:$0xff]
        %v879 = vld [vmem:[#allocation3 + $0x1e8] sm:$0xff]
        %v880 = vld [vmem:[#allocation3 + $0x1f0] sm:$0xff]
        %v881 = vld [vmem:[#allocation3 + $0x1f8] sm:$0xff]
        %v882 = vld [vmem:[#allocation3 + $0x200] sm:$0xff]
        %v883 = vld [vmem:[#allocation3 + $0x208] sm:$0xff]
        %v884 = vld [vmem:[#allocation3 + $0x210] sm:$0xff]
        %v885 = vld [vmem:[#allocation3 + $0x218] sm:$0xff]
        %v886 = vld [vmem:[#allocation3 + $0x220] sm:$0xff]
        %v887 = vld [vmem:[#allocation3 + $0x228] sm:$0xff]
        %v888 = vld [vmem:[#allocation3 + $0x230] sm:$0xff]
        %v889 = vld [vmem:[#allocation3 + $0x238] sm:$0xff]
        %v890 = vld [vmem:[#allocation3 + $0x240] sm:$0xff]
        %v891 = vld [vmem:[#allocation3 + $0x248] sm:$0xff]
        %v892 = vld [vmem:[#allocation3 + $0x250] sm:$0xff]
        %v893 = vld [vmem:[#allocation3 + $0x258] sm:$0xff]
        %v894 = vld [vmem:[#allocation3 + $0x260] sm:$0xff]
        %v895 = vld [vmem:[#allocation3 + $0x268] sm:$0xff]
        %v896 = vld [vmem:[#allocation3 + $0x270] sm:$0xff]
        %v897 = vld [vmem:[#allocation3 + $0x278] sm:$0xff]
        %v898 = vld [vmem:[#allocation3 + $0x280] sm:$0xff]
        %v899 = vld [vmem:[#allocation3 + $0x288] sm:$0xff]
        %v900 = vld [vmem:[#allocation3 + $0x290] sm:$0xff]
        %v901 = vld [vmem:[#allocation3 + $0x298] sm:$0xff]
        %v902 = vld [vmem:[#allocation3 + $0x2a0] sm:$0xff]
        %v903 = vld [vmem:[#allocation3 + $0x2a8] sm:$0xff]
        %v904 = vld [vmem:[#allocation3 + $0x2b0] sm:$0xff]
        %v905 = vld [vmem:[#allocation3 + $0x2b8] sm:$0xff]
        %v906 = vld [vmem:[#allocation3 + $0x2c0] sm:$0xff]
        %v907 = vld [vmem:[#allocation3 + $0x2c8] sm:$0xff]
        %v908 = vld [vmem:[#allocation3 + $0x2d0] sm:$0xff]
        %v909 = vld [vmem:[#allocation3 + $0x2d8] sm:$0xff]
        %v910 = vld [vmem:[#allocation3 + $0x2e0] sm:$0xff]
        %v911 = vld [vmem:[#allocation3 + $0x2e8] sm:$0xff]
        %v912 = vld [vmem:[#allocation3 + $0x2f0] sm:$0xff]
        %v913 = vld [vmem:[#allocation3 + $0x2f8] sm:$0xff]
        %v914 = vld [vmem:[#allocation3 + $0x300] sm:$0xff]
        %v915 = vld [vmem:[#allocation3 + $0x308] sm:$0xff]
        %v916 = vld [vmem:[#allocation3 + $0x310] sm:$0xff]
        %v917 = vld [vmem:[#allocation3 + $0x318] sm:$0xff]
        %v918 = vld [vmem:[#allocation3 + $0x320] sm:$0xff]
        %v919 = vld [vmem:[#allocation3 + $0x328] sm:$0xff]
        %v920 = vld [vmem:[#allocation3 + $0x330] sm:$0xff]
        %v921 = vld [vmem:[#allocation3 + $0x338] sm:$0xff]
        %v922 = vld [vmem:[#allocation3 + $0x340] sm:$0xff]
        %v923 = vld [vmem:[#allocation3 + $0x348] sm:$0xff]
        %v924 = vld [vmem:[#allocation3 + $0x350] sm:$0xff]
        %v925 = vld [vmem:[#allocation3 + $0x358] sm:$0xff]
        %v926 = vld [vmem:[#allocation3 + $0x360] sm:$0xff]
        %v927 = vld [vmem:[#allocation3 + $0x368] sm:$0xff]
        %v928 = vld [vmem:[#allocation3 + $0x370] sm:$0xff]
        %v929 = vld [vmem:[#allocation3 + $0x378] sm:$0xff]
        %v930 = vld [vmem:[#allocation3 + $0x380] sm:$0xff]
        %v931 = vld [vmem:[#allocation3 + $0x388] sm:$0xff]
        %v932 = vld [vmem:[#allocation3 + $0x390] sm:$0xff]
        %v933 = vld [vmem:[#allocation3 + $0x398] sm:$0xff]
        %v934 = vld [vmem:[#allocation3 + $0x3a0] sm:$0xff]
        %v935 = vld [vmem:[#allocation3 + $0x3a8] sm:$0xff]
        %v936 = vld [vmem:[#allocation3 + $0x3b0] sm:$0xff]
        %v937 = vld [vmem:[#allocation3 + $0x3b8] sm:$0xff]
        %v938 = vld [vmem:[#allocation3 + $0x3c0] sm:$0xff]
        %v939 = vld [vmem:[#allocation3 + $0x3c8] sm:$0xff]
        %v940 = vld [vmem:[#allocation3 + $0x3d0] sm:$0xff]
        %v941 = vld [vmem:[#allocation3 + $0x3d8] sm:$0xff]
        %v942 = vld [vmem:[#allocation3 + $0x3e0] sm:$0xff]
        %v943 = vld [vmem:[#allocation3 + $0x3e8] sm:$0xff]
        %v944 = vld [vmem:[#allocation3 + $0x3f0] sm:$0xff]
        %v945 = vld [vmem:[#allocation3 + $0x3f8] sm:$0xff]
        %v946 = vld [vmem:[#allocation3 + $0x400] sm:$0xff]
        %v947 = vld [vmem:[#allocation3 + $0x408] sm:$0xff]
        %v948 = vld [vmem:[#allocation3 + $0x410] sm:$0xff]
        %v949 = vld [vmem:[#allocation3 + $0x418] sm:$0xff]
        %v950 = vld [vmem:[#allocation3 + $0x420] sm:$0xff]
        %v951 = vld [vmem:[#allocation3 + $0x428] sm:$0xff]
        %v952 = vld [vmem:[#allocation3 + $0x430] sm:$0xff]
        %v953 = vld [vmem:[#allocation3 + $0x438] sm:$0xff]
        %v954 = vld [vmem:[#allocation3 + $0x440] sm:$0xff]
        %v955 = vld [vmem:[#allocation3 + $0x448] sm:$0xff]
        %v956 = vld [vmem:[#allocation3 + $0x450] sm:$0xff]
        %v957 = vld [vmem:[#allocation3 + $0x458] sm:$0xff]
        %v958 = vld [vmem:[#allocation3 + $0x460] sm:$0xff]
        %v959 = vld [vmem:[#allocation3 + $0x468] sm:$0xff]
        %v960 = vld [vmem:[#allocation3 + $0x470] sm:$0xff]
        %v961 = vld [vmem:[#allocation3 + $0x478] sm:$0xff]
        %v962 = vld [vmem:[#allocation3 + $0x480] sm:$0xff]
        %v963 = vld [vmem:[#allocation3 + $0x488] sm:$0xff]
        %v964 = vld [vmem:[#allocation3 + $0x490] sm:$0xff]
        %v965 = vld [vmem:[#allocation3 + $0x498] sm:$0xff]
        %v966 = vld [vmem:[#allocation3 + $0x4a0] sm:$0xff]
        %v967 = vld [vmem:[#allocation3 + $0x4a8] sm:$0xff]
        %v968 = vld [vmem:[#allocation3 + $0x4b0] sm:$0xff]
        %v969 = vld [vmem:[#allocation3 + $0x4b8] sm:$0xff]
        %v970 = vld [vmem:[#allocation3 + $0x4c0] sm:$0xff]
        %v971 = vld [vmem:[#allocation3 + $0x4c8] sm:$0xff]
        %v972 = vld [vmem:[#allocation3 + $0x4d0] sm:$0xff]
        %v973 = vld [vmem:[#allocation3 + $0x4d8] sm:$0xff]
        %v974 = vld [vmem:[#allocation3 + $0x4e0] sm:$0xff]
        %v975 = vld [vmem:[#allocation3 + $0x4e8] sm:$0xff]
        %v976 = vld [vmem:[#allocation3 + $0x4f0] sm:$0xff]
        %v977 = vld [vmem:[#allocation3 + $0x4f8] sm:$0xff]
        %v978 = vld [vmem:[#allocation3 + $0x500] sm:$0xff]
        %v979 = vld [vmem:[#allocation3 + $0x508] sm:$0xff]
        %v980 = vld [vmem:[#allocation3 + $0x510] sm:$0xff]
        %v981 = vld [vmem:[#allocation3 + $0x518] sm:$0xff]
        %v982 = vld [vmem:[#allocation3 + $0x520] sm:$0xff]
        %v983 = vld [vmem:[#allocation3 + $0x528] sm:$0xff]
        %v984 = vld [vmem:[#allocation3 + $0x530] sm:$0xff]
        %v985 = vld [vmem:[#allocation3 + $0x538] sm:$0xff]
        %v986 = vld [vmem:[#allocation3 + $0x540] sm:$0xff]
        %v987 = vld [vmem:[#allocation3 + $0x548] sm:$0xff]
        %v988 = vld [vmem:[#allocation3 + $0x550] sm:$0xff]
        %v989 = vld [vmem:[#allocation3 + $0x558] sm:$0xff]
        %v990 = vld [vmem:[#allocation3 + $0x560] sm:$0xff]
        %v991 = vld [vmem:[#allocation3 + $0x568] sm:$0xff]
        %v992 = vld [vmem:[#allocation3 + $0x570] sm:$0xff]
        %v993 = vld [vmem:[#allocation3 + $0x578] sm:$0xff]
        %v994 = vld [vmem:[#allocation3 + $0x580] sm:$0xff]
        %v995 = vld [vmem:[#allocation3 + $0x588] sm:$0xff]
        %v996 = vld [vmem:[#allocation3 + $0x590] sm:$0xff]
        %v997 = vld [vmem:[#allocation3 + $0x598] sm:$0xff]
        %v998 = vld [vmem:[#allocation3 + $0x5a0] sm:$0xff]
        %v999 = vld [vmem:[#allocation3 + $0x5a8] sm:$0xff]
        %v1000 = vld [vmem:[#allocation3 + $0x5b0] sm:$0xff]
        %v1001 = vld [vmem:[#allocation3 + $0x5b8] sm:$0xff]
        %v1002 = vld [vmem:[#allocation3 + $0x5c0] sm:$0xff]
        %v1003 = vld [vmem:[#allocation3 + $0x5c8] sm:$0xff]
        %v1004 = vld [vmem:[#allocation3 + $0x5d0] sm:$0xff]
        %v1005 = vld [vmem:[#allocation3 + $0x5d8] sm:$0xff]
        %v1006 = vld [vmem:[#allocation3 + $0x5e0] sm:$0xff]
        %v1007 = vld [vmem:[#allocation3 + $0x5e8] sm:$0xff]
        %v1008 = vld [vmem:[#allocation3 + $0x5f0] sm:$0xff]
        %v1009 = vld [vmem:[#allocation3 + $0x5f8] sm:$0xff]
        %v1010 = vld [vmem:[#allocation3 + $0x600] sm:$0xff]
        %v1011 = vld [vmem:[#allocation3 + $0x608] sm:$0xff]
        %v1012 = vld [vmem:[#allocation3 + $0x610] sm:$0xff]
        %v1013 = vld [vmem:[#allocation3 + $0x618] sm:$0xff]
        %v1014 = vld [vmem:[#allocation3 + $0x620] sm:$0xff]
        %v1015 = vld [vmem:[#allocation3 + $0x628] sm:$0xff]
        %v1016 = vld [vmem:[#allocation3 + $0x630] sm:$0xff]
        %v1017 = vld [vmem:[#allocation3 + $0x638] sm:$0xff]
        %v1018 = vld [vmem:[#allocation3 + $0x640] sm:$0xff]
        %v1019 = vld [vmem:[#allocation3 + $0x648] sm:$0xff]
        %v1020 = vld [vmem:[#allocation3 + $0x650] sm:$0xff]
        %v1021 = vld [vmem:[#allocation3 + $0x658] sm:$0xff]
        %v1022 = vld [vmem:[#allocation3 + $0x660] sm:$0xff]
        %v1023 = vld [vmem:[#allocation3 + $0x668] sm:$0xff]
        %v1024 = vld [vmem:[#allocation3 + $0x670] sm:$0xff]
        %v1025 = vld [vmem:[#allocation3 + $0x678] sm:$0xff]
        %v1026 = vld [vmem:[#allocation3 + $0x680] sm:$0xff]
        %v1027 = vld [vmem:[#allocation3 + $0x688] sm:$0xff]
        %v1028 = vld [vmem:[#allocation3 + $0x690] sm:$0xff]
        %v1029 = vld [vmem:[#allocation3 + $0x698] sm:$0xff]
        %v1030 = vld [vmem:[#allocation3 + $0x6a0] sm:$0xff]
        %v1031 = vld [vmem:[#allocation3 + $0x6a8] sm:$0xff]
        %v1032 = vld [vmem:[#allocation3 + $0x6b0] sm:$0xff]
        %v1033 = vld [vmem:[#allocation3 + $0x6b8] sm:$0xff]
        %v1034 = vld [vmem:[#allocation3 + $0x6c0] sm:$0xff]
        %v1035 = vld [vmem:[#allocation3 + $0x6c8] sm:$0xff]
        %v1036 = vld [vmem:[#allocation3 + $0x6d0] sm:$0xff]
        %v1037 = vld [vmem:[#allocation3 + $0x6d8] sm:$0xff]
        %v1038 = vld [vmem:[#allocation3 + $0x6e0] sm:$0xff]
        %v1039 = vld [vmem:[#allocation3 + $0x6e8] sm:$0xff]
        %v1040 = vld [vmem:[#allocation3 + $0x6f0] sm:$0xff]
        %v1041 = vld [vmem:[#allocation3 + $0x6f8] sm:$0xff]
        %v1042 = vld [vmem:[#allocation3 + $0x700] sm:$0xff]
        %v1043 = vld [vmem:[#allocation3 + $0x708] sm:$0xff]
        %v1044 = vld [vmem:[#allocation3 + $0x710] sm:$0xff]
        %v1045 = vld [vmem:[#allocation3 + $0x718] sm:$0xff]
        %v1046 = vld [vmem:[#allocation3 + $0x720] sm:$0xff]
        %v1047 = vld [vmem:[#allocation3 + $0x728] sm:$0xff]
        %v1048 = vld [vmem:[#allocation3 + $0x730] sm:$0xff]
        %v1049 = vld [vmem:[#allocation3 + $0x738] sm:$0xff]
        %v1050 = vld [vmem:[#allocation3 + $0x740] sm:$0xff]
        %v1051 = vld [vmem:[#allocation3 + $0x748] sm:$0xff]
        %v1052 = vld [vmem:[#allocation3 + $0x750] sm:$0xff]
        %v1053 = vld [vmem:[#allocation3 + $0x758] sm:$0xff]
        %v1054 = vld [vmem:[#allocation3 + $0x760] sm:$0xff]
        %v1055 = vld [vmem:[#allocation3 + $0x768] sm:$0xff]
        %v1056 = vld [vmem:[#allocation3 + $0x770] sm:$0xff]
        %v1057 = vld [vmem:[#allocation3 + $0x778] sm:$0xff]
        %v1058 = vld [vmem:[#allocation3 + $0x780] sm:$0xff]
        %v1059 = vld [vmem:[#allocation3 + $0x788] sm:$0xff]
        %v1060 = vld [vmem:[#allocation3 + $0x790] sm:$0xff]
        %v1061 = vld [vmem:[#allocation3 + $0x798] sm:$0xff]
        %v1062 = vld [vmem:[#allocation3 + $0x7a0] sm:$0xff]
        %v1063 = vld [vmem:[#allocation3 + $0x7a8] sm:$0xff]
        %v1064 = vld [vmem:[#allocation3 + $0x7b0] sm:$0xff]
        %v1065 = vld [vmem:[#allocation3 + $0x7b8] sm:$0xff]
        %v1066 = vld [vmem:[#allocation3 + $0x7c0] sm:$0xff]
        %v1067 = vld [vmem:[#allocation3 + $0x7c8] sm:$0xff]
        %v1068 = vld [vmem:[#allocation3 + $0x7d0] sm:$0xff]
        %v1069 = vld [vmem:[#allocation3 + $0x7d8] sm:$0xff]
        %v1070 = vld [vmem:[#allocation3 + $0x7e0] sm:$0xff]
        %v1071 = vld [vmem:[#allocation3 + $0x7e8] sm:$0xff]
        %v1072 = vld [vmem:[#allocation3 + $0x7f0] sm:$0xff]
        %v1073 = vld [vmem:[#allocation3 + $0x7f8] sm:$0xff]
        %v1074 = vld [vmem:[#allocation3 + $0x800] sm:$0xff]
        %v1075 = vld [vmem:[#allocation3 + $0x808] sm:$0xff]
        %v1076 = vld [vmem:[#allocation3 + $0x810] sm:$0xff]
        %v1077 = vld [vmem:[#allocation3 + $0x818] sm:$0xff]
        %v1078 = vld [vmem:[#allocation3 + $0x820] sm:$0xff]
        %v1079 = vld [vmem:[#allocation3 + $0x828] sm:$0xff]
        %v1080 = vld [vmem:[#allocation3 + $0x830] sm:$0xff]
        %v1081 = vld [vmem:[#allocation3 + $0x838] sm:$0xff]
        %v1082 = vld [vmem:[#allocation3 + $0x840] sm:$0xff]
        %v1083 = vld [vmem:[#allocation3 + $0x848] sm:$0xff]
        %v1084 = vld [vmem:[#allocation3 + $0x850] sm:$0xff]
        %v1085 = vld [vmem:[#allocation3 + $0x858] sm:$0xff]
        %v1086 = vld [vmem:[#allocation3 + $0x860] sm:$0xff]
        %v1087 = vld [vmem:[#allocation3 + $0x868] sm:$0xff]
        %v1088 = vld [vmem:[#allocation3 + $0x870] sm:$0xff]
        %v1089 = vld [vmem:[#allocation3 + $0x878] sm:$0xff]
        %v1090 = vld [vmem:[#allocation3 + $0x880] sm:$0xff]
        %v1091 = vld [vmem:[#allocation3 + $0x888] sm:$0xff]
        %v1092 = vld [vmem:[#allocation3 + $0x890] sm:$0xff]
        %v1093 = vld [vmem:[#allocation3 + $0x898] sm:$0xff]
        %v1094 = vld [vmem:[#allocation3 + $0x8a0] sm:$0xff]
        %v1095 = vld [vmem:[#allocation3 + $0x8a8] sm:$0xff]
        %v1096 = vld [vmem:[#allocation3 + $0x8b0] sm:$0xff]
        %v1097 = vld [vmem:[#allocation3 + $0x8b8] sm:$0xff]
        %v1098 = vld [vmem:[#allocation3 + $0x8c0] sm:$0xff]
        %v1099 = vld [vmem:[#allocation3 + $0x8c8] sm:$0xff]
        %v1100 = vld [vmem:[#allocation3 + $0x8d0] sm:$0xff]
        %v1101 = vld [vmem:[#allocation3 + $0x8d8] sm:$0xff]
        %v1102 = vld [vmem:[#allocation3 + $0x8e0] sm:$0xff]
        %v1103 = vld [vmem:[#allocation3 + $0x8e8] sm:$0xff]
        %v1104 = vld [vmem:[#allocation3 + $0x8f0] sm:$0xff]
        %v1105 = vld [vmem:[#allocation3 + $0x8f8] sm:$0xff]
        %v1106 = vld [vmem:[#allocation7] sm:$0xff]
        %v1107 = vld [vmem:[#allocation7 + $0x8] sm:$0xff]
        %v1108 = vld [vmem:[#allocation7 + $0x10] sm:$0xff]
        %v1109 = vld [vmem:[#allocation7 + $0x18] sm:$0xff]
        %v1110 = vld [vmem:[#allocation7 + $0x20] sm:$0xff]
        %v1111 = vld [vmem:[#allocation7 + $0x28] sm:$0xff]
        %v1112 = vld [vmem:[#allocation7 + $0x30] sm:$0xff]
        %v1113 = vld [vmem:[#allocation7 + $0x38] sm:$0xff]
        %v1114 = vld [vmem:[#allocation7 + $0x40] sm:$0xff]
        %v1115 = vld [vmem:[#allocation7 + $0x48] sm:$0xff]
        %v1116 = vld [vmem:[#allocation7 + $0x50] sm:$0xff]
        %v1117 = vld [vmem:[#allocation7 + $0x58] sm:$0xff]
        %v1118 = vld [vmem:[#allocation7 + $0x60] sm:$0xff]
        %v1119 = vld [vmem:[#allocation7 + $0x68] sm:$0xff]
        %v1120 = vld [vmem:[#allocation7 + $0x70] sm:$0xff]
        %v1121 = vld [vmem:[#allocation7 + $0x78] sm:$0xff]
        %v1122 = vld [vmem:[#allocation7 + $0x80] sm:$0xff]
        %v1123 = vld [vmem:[#allocation7 + $0x88] sm:$0xff]
        %v1124 = vld [vmem:[#allocation7 + $0x90] sm:$0xff]
        %v1125 = vld [vmem:[#allocation7 + $0x98] sm:$0xff]
        %v1126 = vld [vmem:[#allocation7 + $0xa0] sm:$0xff]
        %v1127 = vld [vmem:[#allocation7 + $0xa8] sm:$0xff]
        %v1128 = vld [vmem:[#allocation7 + $0xb0] sm:$0xff]
        %v1129 = vld [vmem:[#allocation7 + $0xb8] sm:$0xff]
        %v1130 = vld [vmem:[#allocation7 + $0xc0] sm:$0xff]
        %v1131 = vld [vmem:[#allocation7 + $0xc8] sm:$0xff]
        %v1132 = vld [vmem:[#allocation7 + $0xd0] sm:$0xff]
        %v1133 = vld [vmem:[#allocation7 + $0xd8] sm:$0xff]
        %v1134 = vld [vmem:[#allocation7 + $0xe0] sm:$0xff]
        %v1135 = vld [vmem:[#allocation7 + $0xe8] sm:$0xff]
        %v1136 = vld [vmem:[#allocation7 + $0xf0] sm:$0xff]
        %v1137 = vld [vmem:[#allocation7 + $0xf8] sm:$0xff]
        %v1138 = vld [vmem:[#allocation7 + $0x100] sm:$0xff]
        %v1139 = vld [vmem:[#allocation7 + $0x108] sm:$0xff]
        %v1140 = vld [vmem:[#allocation7 + $0x110] sm:$0xff]
        %v1141 = vld [vmem:[#allocation7 + $0x118] sm:$0xff]
        %v1142 = vld [vmem:[#allocation7 + $0x120] sm:$0xff]
        %v1143 = vld [vmem:[#allocation7 + $0x128] sm:$0xff]
        %v1144 = vld [vmem:[#allocation7 + $0x130] sm:$0xff]
        %v1145 = vld [vmem:[#allocation7 + $0x138] sm:$0xff]
        %v1146 = vld [vmem:[#allocation7 + $0x140] sm:$0xff]
        %v1147 = vld [vmem:[#allocation7 + $0x148] sm:$0xff]
        %v1148 = vld [vmem:[#allocation7 + $0x150] sm:$0xff]
        %v1149 = vld [vmem:[#allocation7 + $0x158] sm:$0xff]
        %v1150 = vld [vmem:[#allocation7 + $0x160] sm:$0xff]
        %v1151 = vld [vmem:[#allocation7 + $0x168] sm:$0xff]
        %v1152 = vld [vmem:[#allocation7 + $0x170] sm:$0xff]
        %v1153 = vld [vmem:[#allocation7 + $0x178] sm:$0xff]
        %v1154 = vld [vmem:[#allocation7 + $0x180] sm:$0xff]
        %v1155 = vld [vmem:[#allocation7 + $0x188] sm:$0xff]
        %v1156 = vld [vmem:[#allocation7 + $0x190] sm:$0xff]
        %v1157 = vld [vmem:[#allocation7 + $0x198] sm:$0xff]
        %v1158 = vld [vmem:[#allocation7 + $0x1a0] sm:$0xff]
        %v1159 = vld [vmem:[#allocation7 + $0x1a8] sm:$0xff]
        %v1160 = vld [vmem:[#allocation7 + $0x1b0] sm:$0xff]
        %v1161 = vld [vmem:[#allocation7 + $0x1b8] sm:$0xff]
        %v1162 = vld [vmem:[#allocation7 + $0x1c0] sm:$0xff]
        %v1163 = vld [vmem:[#allocation7 + $0x1c8] sm:$0xff]
        %v1164 = vld [vmem:[#allocation7 + $0x1d0] sm:$0xff]
        %v1165 = vld [vmem:[#allocation7 + $0x1d8] sm:$0xff]
        %v1166 = vld [vmem:[#allocation7 + $0x1e0] sm:$0xff]
        %v1167 = vld [vmem:[#allocation7 + $0x1e8] sm:$0xff]
        %v1168 = vld [vmem:[#allocation7 + $0x1f0] sm:$0xff]
        %v1169 = vld [vmem:[#allocation7 + $0x1f8] sm:$0xff]
        %v1170 = vld [vmem:[#allocation7 + $0x200] sm:$0xff]
        %v1171 = vld [vmem:[#allocation7 + $0x208] sm:$0xff]
        %v1172 = vld [vmem:[#allocation7 + $0x210] sm:$0xff]
        %v1173 = vld [vmem:[#allocation7 + $0x218] sm:$0xff]
        %v1174 = vld [vmem:[#allocation7 + $0x220] sm:$0xff]
        %v1175 = vld [vmem:[#allocation7 + $0x228] sm:$0xff]
        %v1176 = vld [vmem:[#allocation7 + $0x230] sm:$0xff]
        %v1177 = vld [vmem:[#allocation7 + $0x238] sm:$0xff]
        %v1178 = vld [vmem:[#allocation7 + $0x240] sm:$0xff]
        %v1179 = vld [vmem:[#allocation7 + $0x248] sm:$0xff]
        %v1180 = vld [vmem:[#allocation7 + $0x250] sm:$0xff]
        %v1181 = vld [vmem:[#allocation7 + $0x258] sm:$0xff]
        %v1182 = vld [vmem:[#allocation7 + $0x260] sm:$0xff]
        %v1183 = vld [vmem:[#allocation7 + $0x268] sm:$0xff]
        %v1184 = vld [vmem:[#allocation7 + $0x270] sm:$0xff]
        %v1185 = vld [vmem:[#allocation7 + $0x278] sm:$0xff]
        %v1186 = vld [vmem:[#allocation7 + $0x280] sm:$0xff]
        %v1187 = vld [vmem:[#allocation7 + $0x288] sm:$0xff]
        %v1188 = vld [vmem:[#allocation7 + $0x290] sm:$0xff]
        %v1189 = vld [vmem:[#allocation7 + $0x298] sm:$0xff]
        %v1190 = vld [vmem:[#allocation7 + $0x2a0] sm:$0xff]
        %v1191 = vld [vmem:[#allocation7 + $0x2a8] sm:$0xff]
        %v1192 = vld [vmem:[#allocation7 + $0x2b0] sm:$0xff]
        %v1193 = vld [vmem:[#allocation7 + $0x2b8] sm:$0xff]
        %v1194 = vld [vmem:[#allocation7 + $0x2c0] sm:$0xff]
        %v1195 = vld [vmem:[#allocation7 + $0x2c8] sm:$0xff]
        %v1196 = vld [vmem:[#allocation7 + $0x2d0] sm:$0xff]
        %v1197 = vld [vmem:[#allocation7 + $0x2d8] sm:$0xff]
        %v1198 = vld [vmem:[#allocation7 + $0x2e0] sm:$0xff]
        %v1199 = vld [vmem:[#allocation7 + $0x2e8] sm:$0xff]
        %v1200 = vld [vmem:[#allocation7 + $0x2f0] sm:$0xff]
        %v1201 = vld [vmem:[#allocation7 + $0x2f8] sm:$0xff]
        %v1202 = vld [vmem:[#allocation7 + $0x300] sm:$0xff]
        %v1203 = vld [vmem:[#allocation7 + $0x308] sm:$0xff]
        %v1204 = vld [vmem:[#allocation7 + $0x310] sm:$0xff]
        %v1205 = vld [vmem:[#allocation7 + $0x318] sm:$0xff]
        %v1206 = vld [vmem:[#allocation7 + $0x320] sm:$0xff]
        %v1207 = vld [vmem:[#allocation7 + $0x328] sm:$0xff]
        %v1208 = vld [vmem:[#allocation7 + $0x330] sm:$0xff]
        %v1209 = vld [vmem:[#allocation7 + $0x338] sm:$0xff]
        %v1210 = vld [vmem:[#allocation7 + $0x340] sm:$0xff]
        %v1211 = vld [vmem:[#allocation7 + $0x348] sm:$0xff]
        %v1212 = vld [vmem:[#allocation7 + $0x350] sm:$0xff]
        %v1213 = vld [vmem:[#allocation7 + $0x358] sm:$0xff]
        %v1214 = vld [vmem:[#allocation7 + $0x360] sm:$0xff]
        %v1215 = vld [vmem:[#allocation7 + $0x368] sm:$0xff]
        %v1216 = vld [vmem:[#allocation7 + $0x370] sm:$0xff]
        %v1217 = vld [vmem:[#allocation7 + $0x378] sm:$0xff]
        %v1218 = vld [vmem:[#allocation7 + $0x380] sm:$0xff]
        %v1219 = vld [vmem:[#allocation7 + $0x388] sm:$0xff]
        %v1220 = vld [vmem:[#allocation7 + $0x390] sm:$0xff]
        %v1221 = vld [vmem:[#allocation7 + $0x398] sm:$0xff]
        %v1222 = vld [vmem:[#allocation7 + $0x3a0] sm:$0xff]
        %v1223 = vld [vmem:[#allocation7 + $0x3a8] sm:$0xff]
        %v1224 = vld [vmem:[#allocation7 + $0x3b0] sm:$0xff]
        %v1225 = vld [vmem:[#allocation7 + $0x3b8] sm:$0xff]
        %v1226 = vld [vmem:[#allocation7 + $0x3c0] sm:$0xff]
        %v1227 = vld [vmem:[#allocation7 + $0x3c8] sm:$0xff]
        %v1228 = vld [vmem:[#allocation7 + $0x3d0] sm:$0xff]
        %v1229 = vld [vmem:[#allocation7 + $0x3d8] sm:$0xff]
        %v1230 = vld [vmem:[#allocation7 + $0x3e0] sm:$0xff]
        %v1231 = vld [vmem:[#allocation7 + $0x3e8] sm:$0xff]
        %v1232 = vld [vmem:[#allocation7 + $0x3f0] sm:$0xff]
        %v1233 = vld [vmem:[#allocation7 + $0x3f8] sm:$0xff]
        %v1234 = vld [vmem:[#allocation7 + $0x400] sm:$0xff]
        %v1235 = vld [vmem:[#allocation7 + $0x408] sm:$0xff]
        %v1236 = vld [vmem:[#allocation7 + $0x410] sm:$0xff]
        %v1237 = vld [vmem:[#allocation7 + $0x418] sm:$0xff]
        %v1238 = vld [vmem:[#allocation7 + $0x420] sm:$0xff]
        %v1239 = vld [vmem:[#allocation7 + $0x428] sm:$0xff]
        %v1240 = vld [vmem:[#allocation7 + $0x430] sm:$0xff]
        %v1241 = vld [vmem:[#allocation7 + $0x438] sm:$0xff]
        %v1242 = vld [vmem:[#allocation7 + $0x440] sm:$0xff]
        %v1243 = vld [vmem:[#allocation7 + $0x448] sm:$0xff]
        %v1244 = vld [vmem:[#allocation7 + $0x450] sm:$0xff]
        %v1245 = vld [vmem:[#allocation7 + $0x458] sm:$0xff]
        %v1246 = vld [vmem:[#allocation7 + $0x460] sm:$0xff]
        %v1247 = vld [vmem:[#allocation7 + $0x468] sm:$0xff]
        %v1248 = vld [vmem:[#allocation7 + $0x470] sm:$0xff]
        %v1249 = vld [vmem:[#allocation7 + $0x478] sm:$0xff]
        %v1250 = vlaneseq
        %v1251 = vshrl.u32 %v1250, 7
        %v1252 = vsub.s32 2, %v1251
        %v1253 = vrot.slane %v245, %v1252
        %1254 = vmatprep.subr.mxu0 0.0
        %1255 = vmatpush1.msra.mxu0 %v1106
        %1256 = vmatprep.subr.mxu0 0.0
        %1257 = vmatpush1.msra.mxu0 %v1107
        %1258 = vmatprep.subr.mxu0 0.0
        %1259 = vmatpush1.msra.mxu0 %v1108
        %1260 = vmatprep.subr.mxu0 0.0
        %1261 = vmatpush1.msra.mxu0 %v1109
        %1262 = vmatprep.subr.mxu0 0.0
        %1263 = vmatpush1.msra.mxu0 %v1110
        %1264 = vmatprep.subr.mxu0 0.0
        %1265 = vmatpush1.msra.mxu0 %v1111
        %1266 = vmatprep.subr.mxu0 0.0
        %1267 = vmatpush1.msra.mxu0 %v1112
        %1268 = vmatprep.subr.mxu0 0.0
        %1269 = vmatpush1.msra.mxu0 %v1113
        %1270 = vmatprep.subr.mxu0 0.0
        %1271 = vmatpush1.msra.mxu0 %v1114
        %1272 = vmatprep.subr.mxu0 0.0
        %1273 = vmatpush1.msra.mxu0 %v1115
        %1274 = vmatprep.subr.mxu0 0.0
        %1275 = vmatpush1.msra.mxu0 %v1116
        %1276 = vmatprep.subr.mxu0 0.0
        %1277 = vmatpush1.msra.mxu0 %v1117
        %1278 = vmatprep.subr.mxu0 0.0
        %1279 = vmatpush1.msra.mxu0 %v1118
        %1280 = vmatprep.subr.mxu0 0.0
        %1281 = vmatpush1.msra.mxu0 %v1119
        %1282 = vmatprep.subr.mxu0 0.0
        %1283 = vmatpush1.msra.mxu0 %v1120
        %1284 = vmatprep.subr.mxu0 0.0
        %1285 = vmatpush1.msra.mxu0 %v1121
        %1286 = vmatprep.subr.mxu0 0.0
        %1287 = vmatpush1.msra.mxu0 %v1122
        %1288 = vmatprep.subr.mxu0 0.0
        %1289 = vmatpush1.msra.mxu0 %v1123
        %1290 = vmatprep.subr.mxu0 0.0
        %1291 = vmatpush1.msra.mxu0 %v1124
        %1292 = vmatprep.subr.mxu0 0.0
        %1293 = vmatpush1.msra.mxu0 %v1125
        %1294 = vmatprep.subr.mxu0 0.0
        %1295 = vmatpush1.msra.mxu0 %v1126
        %1296 = vmatprep.subr.mxu0 0.0
        %1297 = vmatpush1.msra.mxu0 %v1127
        %1298 = vmatprep.subr.mxu0 0.0
        %1299 = vmatpush1.msra.mxu0 %v1128
        %1300 = vmatprep.subr.mxu0 0.0
        %1301 = vmatpush1.msra.mxu0 %v1129
        %1302 = vmatprep.subr.mxu0 0.0
        %1303 = vmatpush1.msra.mxu0 %v1130
        %1304 = vmatprep.subr.mxu0 0.0
        %1305 = vmatpush1.msra.mxu0 %v1131
        %1306 = vmatprep.subr.mxu0 0.0
        %1307 = vmatpush1.msra.mxu0 %v1132
        %1308 = vmatprep.subr.mxu0 0.0
        %1309 = vmatpush1.msra.mxu0 %v1133
        %1310 = vmatprep.subr.mxu0 0.0
        %1311 = vmatpush1.msra.mxu0 %v1134
        %1312 = vmatprep.subr.mxu0 0.0
        %1313 = vmatpush1.msra.mxu0 %v1135
        %1314 = vmatprep.subr.mxu0 0.0
        %1315 = vmatpush1.msra.mxu0 %v1136
        %1316 = vmatprep.subr.mxu0 0.0
        %1317 = vmatpush1.msra.mxu0 %v1137
        %1318 = vmatprep.mubr.f32.mxu0 %v819
        %1319 = vmatmul.mubr.f32.gmra.mrb[0].mxu0 %v818
        %v1320 = vpop.f32.mrb[0].mxu0
        %v1321 = vadd.f32 %v1253, %v1320
        %v1322 = vpop.f32.mrb[0].mxu0
        %1323 = vmatprep.mubr.f32.mxu0 %v828
        %1324 = vmatmul.mubr.f32.gmra.mrb[0].mxu0 %v827
        %v1325 = vpop.f32.mrb[0].mxu0
        %v1326 = vadd.f32 %v1253, %v1325
        %v1327 = vpop.f32.mrb[0].mxu0
        %1328 = vmatprep.mubr.f32.mxu0 %v837
        %1329 = vmatmul.mubr.f32.gmra.mrb[0].mxu0 %v836
        %v1330 = vpop.f32.mrb[0].mxu0
        %v1331 = vadd.f32 %v1253, %v1330
        %v1332 = vpop.f32.mrb[0].mxu0
        %1333 = vmatprep.mubr.f32.mxu0 %v846
        %1334 = vmatmul.mubr.f32.gmra.mrb[0].mxu0 %v845
        %v1335 = vpop.f32.mrb[0].mxu0
        %v1336 = vadd.f32 %v1253, %v1335
        %v1337 = vpop.f32.mrb[0].mxu0
        %1338 = vmatprep.mubr.f32.mxu0 %v855
        %1339 = vmatmul.mubr.f32.gmra.mrb[0].mxu0 %v854
        %v1340 = vpop.f32.mrb[0].mxu0
        %v1341 = vadd.f32 %v1253, %v1340
        %v1342 = vpop.f32.mrb[0].mxu0
        %1343 = vmatprep.mubr.f32.mxu0 %v864
        %1344 = vmatmul.mubr.f32.gmra.mrb[0].mxu0 %v863
        %v1345 = vpop.f32.mrb[0].mxu0
        %v1346 = vadd.f32 %v1253, %v1345
        %v1347 = vpop.f32.mrb[0].mxu0
        %1348 = vmatprep.mubr.f32.mxu0 %v873
        %1349 = vmatmul.mubr.f32.gmra.mrb[0].mxu0 %v872
        %v1350 = vpop.f32.mrb[0].mxu0
        %v1351 = vadd.f32 %v1253, %v1350
        %v1352 = vpop.f32.mrb[0].mxu0
        %1353 = vmatprep.mubr.f32.mxu0 %v882
        %1354 = vmatmul.mubr.f32.gmra.mrb[0].mxu0 %v881
        %v1355 = vpop.f32.mrb[0].mxu0
        %v1356 = vadd.f32 %v1253, %v1355
        %v1357 = vpop.f32.mrb[0].mxu0
        %1358 = vmatprep.mubr.f32.mxu0 %v891
        %1359 = vmatmul.mubr.f32.gmra.mrb[0].mxu0 %v890
        %v1360 = vpop.f32.mrb[0].mxu0
        %v1361 = vadd.f32 %v1253, %v1360
        %v1362 = vpop.f32.mrb[0].mxu0
        %1363 = vmatprep.mubr.f32.mxu0 %v900
        %1364 = vmatmul.mubr.f32.gmra.mrb[0].mxu0 %v899
        %v1365 = vpop.f32.mrb[0].mxu0
        %v1366 = vadd.f32 %v1253, %v1365
        %v1367 = vpop.f32.mrb[0].mxu0
        %1368 = vmatprep.mubr.f32.mxu0 %v909
        %1369 = vmatmul.mubr.f32.gmra.mrb[0].mxu0 %v908
        %v1370 = vpop.f32.mrb[0].mxu0
        %v1371 = vadd.f32 %v1253, %v1370
        %v1372 = vpop.f32.mrb[0].mxu0
        %1373 = vmatprep.mubr.f32.mxu0 %v918
        %1374 = vmatmul.mubr.f32.gmra.mrb[0].mxu0 %v917
        %v1375 = vpop.f32.mrb[0].mxu0
        %v1376 = vadd.f32 %v1253, %v1375
        %v1377 = vpop.f32.mrb[0].mxu0
        %1378 = vmatprep.mubr.f32.mxu0 %v927
        %1379 = vmatmul.mubr.f32.gmra.mrb[0].mxu0 %v926
        %v1380 = vpop.f32.mrb[0].mxu0
        %v1381 = vadd.f32 %v1253, %v1380
        %v1382 = vpop.f32.mrb[0].mxu0
        %1383 = vmatprep.mubr.f32.mxu0 %v936
        %1384 = vmatmul.mubr.f32.gmra.mrb[0].mxu0 %v935
        %v1385 = vpop.f32.mrb[0].mxu0
        %v1386 = vadd.f32 %v1253, %v1385
        %v1387 = vpop.f32.mrb[0].mxu0
        %1388 = vmatprep.mubr.f32.mxu0 %v945
        %1389 = vmatmul.mubr.f32.gmra.mrb[0].mxu0 %v944
        %v1390 = vpop.f32.mrb[0].mxu0
        %v1391 = vadd.f32 %v1253, %v1390
        %v1392 = vpop.f32.mrb[0].mxu0
        %1393 = vmatprep.mubr.f32.mxu0 %v954
        %1394 = vmatmul.mubr.f32.gmra.mrb[0].mxu0 %v953
        %v1395 = vpop.f32.mrb[0].mxu0
        %v1396 = vadd.f32 %v1253, %v1395
        %v1397 = vpop.f32.mrb[0].mxu0
        %1398 = vmatprep.mubr.f32.mxu0 %v963
        %1399 = vmatmul.mubr.f32.gmra.mrb[0].mxu0 %v962
        %v1400 = vpop.f32.mrb[0].mxu0
        %v1401 = vadd.f32 %v1253, %v1400
        %v1402 = vpop.f32.mrb[0].mxu0
        %1403 = vmatprep.mubr.f32.mxu0 %v972
        %1404 = vmatmul.mubr.f32.gmra.mrb[0].mxu0 %v971
        %v1405 = vpop.f32.mrb[0].mxu0
        %v1406 = vadd.f32 %v1253, %v1405
        %v1407 = vpop.f32.mrb[0].mxu0
        %1408 = vmatprep.mubr.f32.mxu0 %v981
        %1409 = vmatmul.mubr.f32.gmra.mrb[0].mxu0 %v980
        %v1410 = vpop.f32.mrb[0].mxu0
        %v1411 = vadd.f32 %v1253, %v1410
        %v1412 = vpop.f32.mrb[0].mxu0
        %1413 = vmatprep.mubr.f32.mxu0 %v990
        %1414 = vmatmul.mubr.f32.gmra.mrb[0].mxu0 %v989
        %v1415 = vpop.f32.mrb[0].mxu0
        %v1416 = vadd.f32 %v1253, %v1415
        %v1417 = vpop.f32.mrb[0].mxu0
        %1418 = vmatprep.mubr.f32.mxu0 %v999
        %1419 = vmatmul.mubr.f32.gmra.mrb[0].mxu0 %v998
        %v1420 = vpop.f32.mrb[0].mxu0
        %v1421 = vadd.f32 %v1253, %v1420
        %v1422 = vpop.f32.mrb[0].mxu0
        %1423 = vmatprep.mubr.f32.mxu0 %v1008
        %1424 = vmatmul.mubr.f32.gmra.mrb[0].mxu0 %v1007
        %v1425 = vpop.f32.mrb[0].mxu0
        %v1426 = vadd.f32 %v1253, %v1425
        %v1427 = vpop.f32.mrb[0].mxu0
        %1428 = vmatprep.mubr.f32.mxu0 %v1017
        %1429 = vmatmul.mubr.f32.gmra.mrb[0].mxu0 %v1016
        %v1430 = vpop.f32.mrb[0].mxu0
        %v1431 = vadd.f32 %v1253, %v1430
        %v1432 = vpop.f32.mrb[0].mxu0
        %1433 = vmatprep.mubr.f32.mxu0 %v1026
        %1434 = vmatmul.mubr.f32.gmra.mrb[0].mxu0 %v1025
        %v1435 = vpop.f32.mrb[0].mxu0
        %v1436 = vadd.f32 %v1253, %v1435
        %v1437 = vpop.f32.mrb[0].mxu0
        %1438 = vmatprep.mubr.f32.mxu0 %v1035
        %1439 = vmatmul.mubr.f32.gmra.mrb[0].mxu0 %v1034
        %v1440 = vpop.f32.mrb[0].mxu0
        %v1441 = vadd.f32 %v1253, %v1440
        %v1442 = vpop.f32.mrb[0].mxu0
        %1443 = vmatprep.mubr.f32.mxu0 %v1044
        %1444 = vmatmul.mubr.f32.gmra.mrb[0].mxu0 %v1043
        %v1445 = vpop.f32.mrb[0].mxu0
        %v1446 = vadd.f32 %v1253, %v1445
        %v1447 = vpop.f32.mrb[0].mxu0
        %1448 = vmatprep.mubr.f32.mxu0 %v1053
        %1449 = vmatmul.mubr.f32.gmra.mrb[0].mxu0 %v1052
        %v1450 = vpop.f32.mrb[0].mxu0
        %v1451 = vadd.f32 %v1253, %v1450
        %v1452 = vpop.f32.mrb[0].mxu0
        %1453 = vmatprep.mubr.f32.mxu0 %v1062
        %1454 = vmatmul.mubr.f32.gmra.mrb[0].mxu0 %v1061
        %v1455 = vpop.f32.mrb[0].mxu0
        %v1456 = vadd.f32 %v1253, %v1455
        %v1457 = vpop.f32.mrb[0].mxu0
        %1458 = vmatprep.mubr.f32.mxu0 %v1071
        %1459 = vmatmul.mubr.f32.gmra.mrb[0].mxu0 %v1070
        %v1460 = vpop.f32.mrb[0].mxu0
        %v1461 = vadd.f32 %v1253, %v1460
        %v1462 = vpop.f32.mrb[0].mxu0
        %1463 = vmatprep.mubr.f32.mxu0 %v1080
        %1464 = vmatmul.mubr.f32.gmra.mrb[0].mxu0 %v1079
        %v1465 = vpop.f32.mrb[0].mxu0
        %v1466 = vadd.f32 %v1253, %v1465
        %v1467 = vpop.f32.mrb[0].mxu0
        %1468 = vmatprep.mubr.f32.mxu0 %v1089
        %1469 = vmatmul.mubr.f32.gmra.mrb[0].mxu0 %v1088
        %v1470 = vpop.f32.mrb[0].mxu0
        %v1471 = vadd.f32 %v1253, %v1470
        %v1472 = vpop.f32.mrb[0].mxu0
        %1473 = vmatprep.mubr.f32.mxu0 %v1098
        %1474 = vmatmul.mubr.f32.gmra.mrb[0].mxu0 %v1097
        %v1475 = vpop.f32.mrb[0].mxu0
        %v1476 = vadd.f32 %v1253, %v1475
        %v1477 = vpop.f32.mrb[0].mxu0
        %1478 = vdwg.mxu0
        %1479 = vmatprep.subr.mxu0 0.0
        %1480 = vmatpush1.msra.mxu0 %v1138
        %1481 = vmatprep.subr.mxu0 0.0
        %1482 = vmatpush1.msra.mxu0 %v1139
        %1483 = vmatprep.subr.mxu0 0.0
        %1484 = vmatpush1.msra.mxu0 %v1140
        %1485 = vmatprep.subr.mxu0 0.0
        %1486 = vmatpush1.msra.mxu0 %v1141
        %1487 = vmatprep.subr.mxu0 0.0
        %1488 = vmatpush1.msra.mxu0 %v1142
        %1489 = vmatprep.subr.mxu0 0.0
        %1490 = vmatpush1.msra.mxu0 %v1143
        %1491 = vmatprep.subr.mxu0 0.0
        %1492 = vmatpush1.msra.mxu0 %v1144
        %1493 = vmatprep.subr.mxu0 0.0
        %1494 = vmatpush1.msra.mxu0 %v1145
        %1495 = vmatprep.subr.mxu0 0.0
        %1496 = vmatpush1.msra.mxu0 %v1146
        %1497 = vmatprep.subr.mxu0 0.0
        %1498 = vmatpush1.msra.mxu0 %v1147
        %1499 = vmatprep.subr.mxu0 0.0
        %1500 = vmatpush1.msra.mxu0 %v1148
        %1501 = vmatprep.subr.mxu0 0.0
        %1502 = vmatpush1.msra.mxu0 %v1149
        %1503 = vmatprep.subr.mxu0 0.0
        %1504 = vmatpush1.msra.mxu0 %v1150
        %1505 = vmatprep.subr.mxu0 0.0
        %1506 = vmatpush1.msra.mxu0 %v1151
        %1507 = vmatprep.subr.mxu0 0.0
        %1508 = vmatpush1.msra.mxu0 %v1152
        %1509 = vmatprep.subr.mxu0 0.0
        %1510 = vmatpush1.msra.mxu0 %v1153
        %1511 = vmatprep.subr.mxu0 0.0
        %1512 = vmatpush1.msra.mxu0 %v1154
        %1513 = vmatprep.subr.mxu0 0.0
        %1514 = vmatpush1.msra.mxu0 %v1155
        %1515 = vmatprep.subr.mxu0 0.0
        %1516 = vmatpush1.msra.mxu0 %v1156
        %1517 = vmatprep.subr.mxu0 0.0
        %1518 = vmatpush1.msra.mxu0 %v1157
        %1519 = vmatprep.subr.mxu0 0.0
        %1520 = vmatpush1.msra.mxu0 %v1158
        %1521 = vmatprep.subr.mxu0 0.0
        %1522 = vmatpush1.msra.mxu0 %v1159
        %1523 = vmatprep.subr.mxu0 0.0
        %1524 = vmatpush1.msra.mxu0 %v1160
        %1525 = vmatprep.subr.mxu0 0.0
        %1526 = vmatpush1.msra.mxu0 %v1161
        %1527 = vmatprep.subr.mxu0 0.0
        %1528 = vmatpush1.msra.mxu0 %v1162
        %1529 = vmatprep.subr.mxu0 0.0
        %1530 = vmatpush1.msra.mxu0 %v1163
        %1531 = vmatprep.subr.mxu0 0.0
        %1532 = vmatpush1.msra.mxu0 %v1164
        %1533 = vmatprep.subr.mxu0 0.0
        %1534 = vmatpush1.msra.mxu0 %v1165
        %1535 = vmatprep.subr.mxu0 0.0
        %1536 = vmatpush1.msra.mxu0 %v1166
        %1537 = vmatprep.subr.mxu0 0.0
        %1538 = vmatpush1.msra.mxu0 %v1167
        %1539 = vmatprep.subr.mxu0 0.0
        %1540 = vmatpush1.msra.mxu0 %v1168
        %1541 = vmatprep.subr.mxu0 0.0
        %1542 = vmatpush1.msra.mxu0 %v1169
        %1543 = vmatprep.mubr.f32.mxu0 %v821
        %1544 = vmatmul.mubr.f32.gmra.mrb[0].mxu0 %v820
        %v1545 = vpop.f32.mrb[0].mxu0
        %v1546 = vadd.f32 %v1321, %v1545
        %v1547 = vpop.f32.mrb[0].mxu0
        %1548 = vmatprep.mubr.f32.mxu0 %v830
        %1549 = vmatmul.mubr.f32.gmra.mrb[0].mxu0 %v829
        %v1550 = vpop.f32.mrb[0].mxu0
        %v1551 = vadd.f32 %v1326, %v1550
        %v1552 = vpop.f32.mrb[0].mxu0
        %1553 = vmatprep.mubr.f32.mxu0 %v839
        %1554 = vmatmul.mubr.f32.gmra.mrb[0].mxu0 %v838
        %v1555 = vpop.f32.mrb[0].mxu0
        %v1556 = vadd.f32 %v1331, %v1555
        %v1557 = vpop.f32.mrb[0].mxu0
        %1558 = vmatprep.mubr.f32.mxu0 %v848
        %1559 = vmatmul.mubr.f32.gmra.mrb[0].mxu0 %v847
        %v1560 = vpop.f32.mrb[0].mxu0
        %v1561 = vadd.f32 %v1336, %v1560
        %v1562 = vpop.f32.mrb[0].mxu0
        %1563 = vmatprep.mubr.f32.mxu0 %v857
        %1564 = vmatmul.mubr.f32.gmra.mrb[0].mxu0 %v856
        %v1565 = vpop.f32.mrb[0].mxu0
        %v1566 = vadd.f32 %v1341, %v1565
        %v1567 = vpop.f32.mrb[0].mxu0
        %1568 = vmatprep.mubr.f32.mxu0 %v866
        %1569 = vmatmul.mubr.f32.gmra.mrb[0].mxu0 %v865
        %v1570 = vpop.f32.mrb[0].mxu0
        %v1571 = vadd.f32 %v1346, %v1570
        %v1572 = vpop.f32.mrb[0].mxu0
        %1573 = vmatprep.mubr.f32.mxu0 %v875
        %1574 = vmatmul.mubr.f32.gmra.mrb[0].mxu0 %v874
        %v1575 = vpop.f32.mrb[0].mxu0
        %v1576 = vadd.f32 %v1351, %v1575
        %v1577 = vpop.f32.mrb[0].mxu0
        %1578 = vmatprep.mubr.f32.mxu0 %v884
        %1579 = vmatmul.mubr.f32.gmra.mrb[0].mxu0 %v883
        %v1580 = vpop.f32.mrb[0].mxu0
        %v1581 = vadd.f32 %v1356, %v1580
        %v1582 = vpop.f32.mrb[0].mxu0
        %1583 = vmatprep.mubr.f32.mxu0 %v893
        %1584 = vmatmul.mubr.f32.gmra.mrb[0].mxu0 %v892
        %v1585 = vpop.f32.mrb[0].mxu0
        %v1586 = vadd.f32 %v1361, %v1585
        %v1587 = vpop.f32.mrb[0].mxu0
        %1588 = vmatprep.mubr.f32.mxu0 %v902
        %1589 = vmatmul.mubr.f32.gmra.mrb[0].mxu0 %v901
        %v1590 = vpop.f32.mrb[0].mxu0
        %v1591 = vadd.f32 %v1366, %v1590
        %v1592 = vpop.f32.mrb[0].mxu0
        %1593 = vmatprep.mubr.f32.mxu0 %v911
        %1594 = vmatmul.mubr.f32.gmra.mrb[0].mxu0 %v910
        %v1595 = vpop.f32.mrb[0].mxu0
        %v1596 = vadd.f32 %v1371, %v1595
        %v1597 = vpop.f32.mrb[0].mxu0
        %1598 = vmatprep.mubr.f32.mxu0 %v920
        %1599 = vmatmul.mubr.f32.gmra.mrb[0].mxu0 %v919
        %v1600 = vpop.f32.mrb[0].mxu0
        %v1601 = vadd.f32 %v1376, %v1600
        %v1602 = vpop.f32.mrb[0].mxu0
        %1603 = vmatprep.mubr.f32.mxu0 %v929
        %1604 = vmatmul.mubr.f32.gmra.mrb[0].mxu0 %v928
        %v1605 = vpop.f32.mrb[0].mxu0
        %v1606 = vadd.f32 %v1381, %v1605
        %v1607 = vpop.f32.mrb[0].mxu0
        %1608 = vmatprep.mubr.f32.mxu0 %v938
        %1609 = vmatmul.mubr.f32.gmra.mrb[0].mxu0 %v937
        %v1610 = vpop.f32.mrb[0].mxu0
        %v1611 = vadd.f32 %v1386, %v1610
        %v1612 = vpop.f32.mrb[0].mxu0
        %1613 = vmatprep.mubr.f32.mxu0 %v947
        %1614 = vmatmul.mubr.f32.gmra.mrb[0].mxu0 %v946
        %v1615 = vpop.f32.mrb[0].mxu0
        %v1616 = vadd.f32 %v1391, %v1615
        %v1617 = vpop.f32.mrb[0].mxu0
        %1618 = vmatprep.mubr.f32.mxu0 %v956
        %1619 = vmatmul.mubr.f32.gmra.mrb[0].mxu0 %v955
        %v1620 = vpop.f32.mrb[0].mxu0
        %v1621 = vadd.f32 %v1396, %v1620
        %v1622 = vpop.f32.mrb[0].mxu0
        %1623 = vmatprep.mubr.f32.mxu0 %v965
        %1624 = vmatmul.mubr.f32.gmra.mrb[0].mxu0 %v964
        %v1625 = vpop.f32.mrb[0].mxu0
        %v1626 = vadd.f32 %v1401, %v1625
        %v1627 = vpop.f32.mrb[0].mxu0
        %1628 = vmatprep.mubr.f32.mxu0 %v974
        %1629 = vmatmul.mubr.f32.gmra.mrb[0].mxu0 %v973
        %v1630 = vpop.f32.mrb[0].mxu0
        %v1631 = vadd.f32 %v1406, %v1630
        %v1632 = vpop.f32.mrb[0].mxu0
        %1633 = vmatprep.mubr.f32.mxu0 %v983
        %1634 = vmatmul.mubr.f32.gmra.mrb[0].mxu0 %v982
        %v1635 = vpop.f32.mrb[0].mxu0
        %v1636 = vadd.f32 %v1411, %v1635
        %v1637 = vpop.f32.mrb[0].mxu0
        %1638 = vmatprep.mubr.f32.mxu0 %v992
        %1639 = vmatmul.mubr.f32.gmra.mrb[0].mxu0 %v991
        %v1640 = vpop.f32.mrb[0].mxu0
        %v1641 = vadd.f32 %v1416, %v1640
        %v1642 = vpop.f32.mrb[0].mxu0
        %1643 = vmatprep.mubr.f32.mxu0 %v1001
        %1644 = vmatmul.mubr.f32.gmra.mrb[0].mxu0 %v1000
        %v1645 = vpop.f32.mrb[0].mxu0
        %v1646 = vadd.f32 %v1421, %v1645
        %v1647 = vpop.f32.mrb[0].mxu0
        %1648 = vmatprep.mubr.f32.mxu0 %v1010
        %1649 = vmatmul.mubr.f32.gmra.mrb[0].mxu0 %v1009
        %v1650 = vpop.f32.mrb[0].mxu0
        %v1651 = vadd.f32 %v1426, %v1650
        %v1652 = vpop.f32.mrb[0].mxu0
        %1653 = vmatprep.mubr.f32.mxu0 %v1019
        %1654 = vmatmul.mubr.f32.gmra.mrb[0].mxu0 %v1018
        %v1655 = vpop.f32.mrb[0].mxu0
        %v1656 = vadd.f32 %v1431, %v1655
        %v1657 = vpop.f32.mrb[0].mxu0
        %1658 = vmatprep.mubr.f32.mxu0 %v1028
        %1659 = vmatmul.mubr.f32.gmra.mrb[0].mxu0 %v1027
        %v1660 = vpop.f32.mrb[0].mxu0
        %v1661 = vadd.f32 %v1436, %v1660
        %v1662 = vpop.f32.mrb[0].mxu0
        %1663 = vmatprep.mubr.f32.mxu0 %v1037
        %1664 = vmatmul.mubr.f32.gmra.mrb[0].mxu0 %v1036
        %v1665 = vpop.f32.mrb[0].mxu0
        %v1666 = vadd.f32 %v1441, %v1665
        %v1667 = vpop.f32.mrb[0].mxu0
        %1668 = vmatprep.mubr.f32.mxu0 %v1046
        %1669 = vmatmul.mubr.f32.gmra.mrb[0].mxu0 %v1045
        %v1670 = vpop.f32.mrb[0].mxu0
        %v1671 = vadd.f32 %v1446, %v1670
        %v1672 = vpop.f32.mrb[0].mxu0
        %1673 = vmatprep.mubr.f32.mxu0 %v1055
        %1674 = vmatmul.mubr.f32.gmra.mrb[0].mxu0 %v1054
        %v1675 = vpop.f32.mrb[0].mxu0
        %v1676 = vadd.f32 %v1451, %v1675
        %v1677 = vpop.f32.mrb[0].mxu0
        %1678 = vmatprep.mubr.f32.mxu0 %v1064
        %1679 = vmatmul.mubr.f32.gmra.mrb[0].mxu0 %v1063
        %v1680 = vpop.f32.mrb[0].mxu0
        %v1681 = vadd.f32 %v1456, %v1680
        %v1682 = vpop.f32.mrb[0].mxu0
        %1683 = vmatprep.mubr.f32.mxu0 %v1073
        %1684 = vmatmul.mubr.f32.gmra.mrb[0].mxu0 %v1072
        %v1685 = vpop.f32.mrb[0].mxu0
        %v1686 = vadd.f32 %v1461, %v1685
        %v1687 = vpop.f32.mrb[0].mxu0
        %1688 = vmatprep.mubr.f32.mxu0 %v1082
        %1689 = vmatmul.mubr.f32.gmra.mrb[0].mxu0 %v1081
        %v1690 = vpop.f32.mrb[0].mxu0
        %v1691 = vadd.f32 %v1466, %v1690
        %v1692 = vpop.f32.mrb[0].mxu0
        %1693 = vmatprep.mubr.f32.mxu0 %v1091
        %1694 = vmatmul.mubr.f32.gmra.mrb[0].mxu0 %v1090
        %v1695 = vpop.f32.mrb[0].mxu0
        %v1696 = vadd.f32 %v1471, %v1695
        %v1697 = vpop.f32.mrb[0].mxu0
        %1698 = vmatprep.mubr.f32.mxu0 %v1100
        %1699 = vmatmul.mubr.f32.gmra.mrb[0].mxu0 %v1099
        %v1700 = vpop.f32.mrb[0].mxu0
        %v1701 = vadd.f32 %v1476, %v1700
        %v1702 = vpop.f32.mrb[0].mxu0
        %1703 = vdwg.mxu0
        %1704 = vmatprep.subr.mxu0 0.0
        %1705 = vmatpush1.msra.mxu0 %v1170
        %1706 = vmatprep.subr.mxu0 0.0
        %1707 = vmatpush1.msra.mxu0 %v1171
        %1708 = vmatprep.subr.mxu0 0.0
        %1709 = vmatpush1.msra.mxu0 %v1172
        %1710 = vmatprep.subr.mxu0 0.0
        %1711 = vmatpush1.msra.mxu0 %v1173
        %1712 = vmatprep.subr.mxu0 0.0
        %1713 = vmatpush1.msra.mxu0 %v1174
        %1714 = vmatprep.subr.mxu0 0.0
        %1715 = vmatpush1.msra.mxu0 %v1175
        %1716 = vmatprep.subr.mxu0 0.0
        %1717 = vmatpush1.msra.mxu0 %v1176
        %1718 = vmatprep.subr.mxu0 0.0
        %1719 = vmatpush1.msra.mxu0 %v1177
        %1720 = vmatprep.subr.mxu0 0.0
        %1721 = vmatpush1.msra.mxu0 %v1178
        %1722 = vmatprep.subr.mxu0 0.0
        %1723 = vmatpush1.msra.mxu0 %v1179
        %1724 = vmatprep.subr.mxu0 0.0
        %1725 = vmatpush1.msra.mxu0 %v1180
        %1726 = vmatprep.subr.mxu0 0.0
        %1727 = vmatpush1.msra.mxu0 %v1181
        %1728 = vmatprep.subr.mxu0 0.0
        %1729 = vmatpush1.msra.mxu0 %v1182
        %1730 = vmatprep.subr.mxu0 0.0
        %1731 = vmatpush1.msra.mxu0 %v1183
        %1732 = vmatprep.subr.mxu0 0.0
        %1733 = vmatpush1.msra.mxu0 %v1184
        %1734 = vmatprep.subr.mxu0 0.0
        %1735 = vmatpush1.msra.mxu0 %v1185
        %1736 = vmatprep.subr.mxu0 0.0
        %1737 = vmatpush1.msra.mxu0 %v1186
        %1738 = vmatprep.subr.mxu0 0.0
        %1739 = vmatpush1.msra.mxu0 %v1187
        %1740 = vmatprep.subr.mxu0 0.0
        %1741 = vmatpush1.msra.mxu0 %v1188
        %1742 = vmatprep.subr.mxu0 0.0
        %1743 = vmatpush1.msra.mxu0 %v1189
        %1744 = vmatprep.subr.mxu0 0.0
        %1745 = vmatpush1.msra.mxu0 %v1190
        %1746 = vmatprep.subr.mxu0 0.0
        %1747 = vmatpush1.msra.mxu0 %v1191
        %1748 = vmatprep.subr.mxu0 0.0
        %1749 = vmatpush1.msra.mxu0 %v1192
        %1750 = vmatprep.subr.mxu0 0.0
        %1751 = vmatpush1.msra.mxu0 %v1193
        %1752 = vmatprep.subr.mxu0 0.0
        %1753 = vmatpush1.msra.mxu0 %v1194
        %1754 = vmatprep.subr.mxu0 0.0
        %1755 = vmatpush1.msra.mxu0 %v1195
        %1756 = vmatprep.subr.mxu0 0.0
        %1757 = vmatpush1.msra.mxu0 %v1196
        %1758 = vmatprep.subr.mxu0 0.0
        %1759 = vmatpush1.msra.mxu0 %v1197
        %1760 = vmatprep.subr.mxu0 0.0
        %1761 = vmatpush1.msra.mxu0 %v1198
        %1762 = vmatprep.subr.mxu0 0.0
        %1763 = vmatpush1.msra.mxu0 %v1199
        %1764 = vmatprep.subr.mxu0 0.0
        %1765 = vmatpush1.msra.mxu0 %v1200
        %1766 = vmatprep.subr.mxu0 0.0
        %1767 = vmatpush1.msra.mxu0 %v1201
        %1768 = vmatprep.mubr.f32.mxu0 %v823
        %1769 = vmatmul.mubr.f32.gmra.mrb[0].mxu0 %v822
        %v1770 = vpop.f32.mrb[0].mxu0
        %v1771 = vadd.f32 %v1546, %v1770
        %v1772 = vpop.f32.mrb[0].mxu0
        %1773 = vmatprep.mubr.f32.mxu0 %v832
        %1774 = vmatmul.mubr.f32.gmra.mrb[0].mxu0 %v831
        %v1775 = vpop.f32.mrb[0].mxu0
        %v1776 = vadd.f32 %v1551, %v1775
        %v1777 = vpop.f32.mrb[0].mxu0
        %1778 = vmatprep.mubr.f32.mxu0 %v841
        %1779 = vmatmul.mubr.f32.gmra.mrb[0].mxu0 %v840
        %v1780 = vpop.f32.mrb[0].mxu0
        %v1781 = vadd.f32 %v1556, %v1780
        %v1782 = vpop.f32.mrb[0].mxu0
        %1783 = vmatprep.mubr.f32.mxu0 %v850
        %1784 = vmatmul.mubr.f32.gmra.mrb[0].mxu0 %v849
        %v1785 = vpop.f32.mrb[0].mxu0
        %v1786 = vadd.f32 %v1561, %v1785
        %v1787 = vpop.f32.mrb[0].mxu0
        %1788 = vmatprep.mubr.f32.mxu0 %v859
        %1789 = vmatmul.mubr.f32.gmra.mrb[0].mxu0 %v858
        %v1790 = vpop.f32.mrb[0].mxu0
        %v1791 = vadd.f32 %v1566, %v1790
        %v1792 = vpop.f32.mrb[0].mxu0
        %1793 = vmatprep.mubr.f32.mxu0 %v868
        %1794 = vmatmul.mubr.f32.gmra.mrb[0].mxu0 %v867
        %v1795 = vpop.f32.mrb[0].mxu0
        %v1796 = vadd.f32 %v1571, %v1795
        %v1797 = vpop.f32.mrb[0].mxu0
        %1798 = vmatprep.mubr.f32.mxu0 %v877
        %1799 = vmatmul.mubr.f32.gmra.mrb[0].mxu0 %v876
        %v1800 = vpop.f32.mrb[0].mxu0
        %v1801 = vadd.f32 %v1576, %v1800
        %v1802 = vpop.f32.mrb[0].mxu0
        %1803 = vmatprep.mubr.f32.mxu0 %v886
        %1804 = vmatmul.mubr.f32.gmra.mrb[0].mxu0 %v885
        %v1805 = vpop.f32.mrb[0].mxu0
        %v1806 = vadd.f32 %v1581, %v1805
        %v1807 = vpop.f32.mrb[0].mxu0
        %1808 = vmatprep.mubr.f32.mxu0 %v895
        %1809 = vmatmul.mubr.f32.gmra.mrb[0].mxu0 %v894
        %v1810 = vpop.f32.mrb[0].mxu0
        %v1811 = vadd.f32 %v1586, %v1810
        %v1812 = vpop.f32.mrb[0].mxu0
        %1813 = vmatprep.mubr.f32.mxu0 %v904
        %1814 = vmatmul.mubr.f32.gmra.mrb[0].mxu0 %v903
        %v1815 = vpop.f32.mrb[0].mxu0
        %v1816 = vadd.f32 %v1591, %v1815
        %v1817 = vpop.f32.mrb[0].mxu0
        %1818 = vmatprep.mubr.f32.mxu0 %v913
        %1819 = vmatmul.mubr.f32.gmra.mrb[0].mxu0 %v912
        %v1820 = vpop.f32.mrb[0].mxu0
        %v1821 = vadd.f32 %v1596, %v1820
        %v1822 = vpop.f32.mrb[0].mxu0
        %1823 = vmatprep.mubr.f32.mxu0 %v922
        %1824 = vmatmul.mubr.f32.gmra.mrb[0].mxu0 %v921
        %v1825 = vpop.f32.mrb[0].mxu0
        %v1826 = vadd.f32 %v1601, %v1825
        %v1827 = vpop.f32.mrb[0].mxu0
        %1828 = vmatprep.mubr.f32.mxu0 %v931
        %1829 = vmatmul.mubr.f32.gmra.mrb[0].mxu0 %v930
        %v1830 = vpop.f32.mrb[0].mxu0
        %v1831 = vadd.f32 %v1606, %v1830
        %v1832 = vpop.f32.mrb[0].mxu0
        %1833 = vmatprep.mubr.f32.mxu0 %v940
        %1834 = vmatmul.mubr.f32.gmra.mrb[0].mxu0 %v939
        %v1835 = vpop.f32.mrb[0].mxu0
        %v1836 = vadd.f32 %v1611, %v1835
        %v1837 = vpop.f32.mrb[0].mxu0
        %1838 = vmatprep.mubr.f32.mxu0 %v949
        %1839 = vmatmul.mubr.f32.gmra.mrb[0].mxu0 %v948
        %v1840 = vpop.f32.mrb[0].mxu0
        %v1841 = vadd.f32 %v1616, %v1840
        %v1842 = vpop.f32.mrb[0].mxu0
        %1843 = vmatprep.mubr.f32.mxu0 %v958
        %1844 = vmatmul.mubr.f32.gmra.mrb[0].mxu0 %v957
        %v1845 = vpop.f32.mrb[0].mxu0
        %v1846 = vadd.f32 %v1621, %v1845
        %v1847 = vpop.f32.mrb[0].mxu0
        %1848 = vmatprep.mubr.f32.mxu0 %v967
        %1849 = vmatmul.mubr.f32.gmra.mrb[0].mxu0 %v966
        %v1850 = vpop.f32.mrb[0].mxu0
        %v1851 = vadd.f32 %v1626, %v1850
        %v1852 = vpop.f32.mrb[0].mxu0
        %1853 = vmatprep.mubr.f32.mxu0 %v976
        %1854 = vmatmul.mubr.f32.gmra.mrb[0].mxu0 %v975
        %v1855 = vpop.f32.mrb[0].mxu0
        %v1856 = vadd.f32 %v1631, %v1855
        %v1857 = vpop.f32.mrb[0].mxu0
        %1858 = vmatprep.mubr.f32.mxu0 %v985
        %1859 = vmatmul.mubr.f32.gmra.mrb[0].mxu0 %v984
        %v1860 = vpop.f32.mrb[0].mxu0
        %v1861 = vadd.f32 %v1636, %v1860
        %v1862 = vpop.f32.mrb[0].mxu0
        %1863 = vmatprep.mubr.f32.mxu0 %v994
        %1864 = vmatmul.mubr.f32.gmra.mrb[0].mxu0 %v993
        %v1865 = vpop.f32.mrb[0].mxu0
        %v1866 = vadd.f32 %v1641, %v1865
        %v1867 = vpop.f32.mrb[0].mxu0
        %1868 = vmatprep.mubr.f32.mxu0 %v1003
        %1869 = vmatmul.mubr.f32.gmra.mrb[0].mxu0 %v1002
        %v1870 = vpop.f32.mrb[0].mxu0
        %v1871 = vadd.f32 %v1646, %v1870
        %v1872 = vpop.f32.mrb[0].mxu0
        %1873 = vmatprep.mubr.f32.mxu0 %v1012
        %1874 = vmatmul.mubr.f32.gmra.mrb[0].mxu0 %v1011
        %v1875 = vpop.f32.mrb[0].mxu0
        %v1876 = vadd.f32 %v1651, %v1875
        %v1877 = vpop.f32.mrb[0].mxu0
        %1878 = vmatprep.mubr.f32.mxu0 %v1021
        %1879 = vmatmul.mubr.f32.gmra.mrb[0].mxu0 %v1020
        %v1880 = vpop.f32.mrb[0].mxu0
        %v1881 = vadd.f32 %v1656, %v1880
        %v1882 = vpop.f32.mrb[0].mxu0
        %1883 = vmatprep.mubr.f32.mxu0 %v1030
        %1884 = vmatmul.mubr.f32.gmra.mrb[0].mxu0 %v1029
        %v1885 = vpop.f32.mrb[0].mxu0
        %v1886 = vadd.f32 %v1661, %v1885
        %v1887 = vpop.f32.mrb[0].mxu0
        %1888 = vmatprep.mubr.f32.mxu0 %v1039
        %1889 = vmatmul.mubr.f32.gmra.mrb[0].mxu0 %v1038
        %v1890 = vpop.f32.mrb[0].mxu0
        %v1891 = vadd.f32 %v1666, %v1890
        %v1892 = vpop.f32.mrb[0].mxu0
        %1893 = vmatprep.mubr.f32.mxu0 %v1048
        %1894 = vmatmul.mubr.f32.gmra.mrb[0].mxu0 %v1047
        %v1895 = vpop.f32.mrb[0].mxu0
        %v1896 = vadd.f32 %v1671, %v1895
        %v1897 = vpop.f32.mrb[0].mxu0
        %1898 = vmatprep.mubr.f32.mxu0 %v1057
        %1899 = vmatmul.mubr.f32.gmra.mrb[0].mxu0 %v1056
        %v1900 = vpop.f32.mrb[0].mxu0
        %v1901 = vadd.f32 %v1676, %v1900
        %v1902 = vpop.f32.mrb[0].mxu0
        %1903 = vmatprep.mubr.f32.mxu0 %v1066
        %1904 = vmatmul.mubr.f32.gmra.mrb[0].mxu0 %v1065
        %v1905 = vpop.f32.mrb[0].mxu0
        %v1906 = vadd.f32 %v1681, %v1905
        %v1907 = vpop.f32.mrb[0].mxu0
        %1908 = vmatprep.mubr.f32.mxu0 %v1075
        %1909 = vmatmul.mubr.f32.gmra.mrb[0].mxu0 %v1074
        %v1910 = vpop.f32.mrb[0].mxu0
        %v1911 = vadd.f32 %v1686, %v1910
        %v1912 = vpop.f32.mrb[0].mxu0
        %1913 = vmatprep.mubr.f32.mxu0 %v1084
        %1914 = vmatmul.mubr.f32.gmra.mrb[0].mxu0 %v1083
        %v1915 = vpop.f32.mrb[0].mxu0
        %v1916 = vadd.f32 %v1691, %v1915
        %v1917 = vpop.f32.mrb[0].mxu0
        %1918 = vmatprep.mubr.f32.mxu0 %v1093
        %1919 = vmatmul.mubr.f32.gmra.mrb[0].mxu0 %v1092
        %v1920 = vpop.f32.mrb[0].mxu0
        %v1921 = vadd.f32 %v1696, %v1920
        %v1922 = vpop.f32.mrb[0].mxu0
        %1923 = vmatprep.mubr.f32.mxu0 %v1102
        %1924 = vmatmul.mubr.f32.gmra.mrb[0].mxu0 %v1101
        %v1925 = vpop.f32.mrb[0].mxu0
        %v1926 = vadd.f32 %v1701, %v1925
        %v1927 = vpop.f32.mrb[0].mxu0
        %1928 = vdwg.mxu0
        %1929 = vmatprep.subr.mxu0 0.0
        %1930 = vmatpush1.msra.mxu0 %v1202
        %1931 = vmatprep.subr.mxu0 0.0
        %1932 = vmatpush1.msra.mxu0 %v1203
        %1933 = vmatprep.subr.mxu0 0.0
        %1934 = vmatpush1.msra.mxu0 %v1204
        %1935 = vmatprep.subr.mxu0 0.0
        %1936 = vmatpush1.msra.mxu0 %v1205
        %1937 = vmatprep.subr.mxu0 0.0
        %1938 = vmatpush1.msra.mxu0 %v1206
        %1939 = vmatprep.subr.mxu0 0.0
        %1940 = vmatpush1.msra.mxu0 %v1207
        %1941 = vmatprep.subr.mxu0 0.0
        %1942 = vmatpush1.msra.mxu0 %v1208
        %1943 = vmatprep.subr.mxu0 0.0
        %1944 = vmatpush1.msra.mxu0 %v1209
        %1945 = vmatprep.subr.mxu0 0.0
        %1946 = vmatpush1.msra.mxu0 %v1210
        %1947 = vmatprep.subr.mxu0 0.0
        %1948 = vmatpush1.msra.mxu0 %v1211
        %1949 = vmatprep.subr.mxu0 0.0
        %1950 = vmatpush1.msra.mxu0 %v1212
        %1951 = vmatprep.subr.mxu0 0.0
        %1952 = vmatpush1.msra.mxu0 %v1213
        %1953 = vmatprep.subr.mxu0 0.0
        %1954 = vmatpush1.msra.mxu0 %v1214
        %1955 = vmatprep.subr.mxu0 0.0
        %1956 = vmatpush1.msra.mxu0 %v1215
        %1957 = vmatprep.subr.mxu0 0.0
        %1958 = vmatpush1.msra.mxu0 %v1216
        %1959 = vmatprep.subr.mxu0 0.0
        %1960 = vmatpush1.msra.mxu0 %v1217
        %1961 = vmatprep.subr.mxu0 0.0
        %1962 = vmatpush1.msra.mxu0 %v1218
        %1963 = vmatprep.subr.mxu0 0.0
        %1964 = vmatpush1.msra.mxu0 %v1219
        %1965 = vmatprep.subr.mxu0 0.0
        %1966 = vmatpush1.msra.mxu0 %v1220
        %1967 = vmatprep.subr.mxu0 0.0
        %1968 = vmatpush1.msra.mxu0 %v1221
        %1969 = vmatprep.subr.mxu0 0.0
        %1970 = vmatpush1.msra.mxu0 %v1222
        %1971 = vmatprep.subr.mxu0 0.0
        %1972 = vmatpush1.msra.mxu0 %v1223
        %1973 = vmatprep.subr.mxu0 0.0
        %1974 = vmatpush1.msra.mxu0 %v1224
        %1975 = vmatprep.subr.mxu0 0.0
        %1976 = vmatpush1.msra.mxu0 %v1225
        %1977 = vmatprep.subr.mxu0 0.0
        %1978 = vmatpush1.msra.mxu0 %v1226
        %1979 = vmatprep.subr.mxu0 0.0
        %1980 = vmatpush1.msra.mxu0 %v1227
        %1981 = vmatprep.subr.mxu0 0.0
        %1982 = vmatpush1.msra.mxu0 %v1228
        %1983 = vmatprep.subr.mxu0 0.0
        %1984 = vmatpush1.msra.mxu0 %v1229
        %1985 = vmatprep.subr.mxu0 0.0
        %1986 = vmatpush1.msra.mxu0 %v1230
        %1987 = vmatprep.subr.mxu0 0.0
        %1988 = vmatpush1.msra.mxu0 %v1231
        %1989 = vmatprep.subr.mxu0 0.0
        %1990 = vmatpush1.msra.mxu0 %v1232
        %1991 = vmatprep.subr.mxu0 0.0
        %1992 = vmatpush1.msra.mxu0 %v1233
        %1993 = vmatprep.mubr.f32.mxu0 %v825
        %1994 = vmatmul.mubr.f32.gmra.mrb[0].mxu0 %v824
        %v1995 = vpop.f32.mrb[0].mxu0
        %v1996 = vadd.f32 %v1771, %v1995
        %v1997 = vpop.f32.mrb[0].mxu0
        %1998 = vmatprep.mubr.f32.mxu0 %v834
        %1999 = vmatmul.mubr.f32.gmra.mrb[0].mxu0 %v833
        %v2000 = vpop.f32.mrb[0].mxu0
        %v2001 = vadd.f32 %v1776, %v2000
        %v2002 = vpop.f32.mrb[0].mxu0
        %2003 = vmatprep.mubr.f32.mxu0 %v843
        %2004 = vmatmul.mubr.f32.gmra.mrb[0].mxu0 %v842
        %v2005 = vpop.f32.mrb[0].mxu0
        %v2006 = vadd.f32 %v1781, %v2005
        %v2007 = vpop.f32.mrb[0].mxu0
        %2008 = vmatprep.mubr.f32.mxu0 %v852
        %2009 = vmatmul.mubr.f32.gmra.mrb[0].mxu0 %v851
        %v2010 = vpop.f32.mrb[0].mxu0
        %v2011 = vadd.f32 %v1786, %v2010
        %v2012 = vpop.f32.mrb[0].mxu0
        %2013 = vmatprep.mubr.f32.mxu0 %v861
        %2014 = vmatmul.mubr.f32.gmra.mrb[0].mxu0 %v860
        %v2015 = vpop.f32.mrb[0].mxu0
        %v2016 = vadd.f32 %v1791, %v2015
        %v2017 = vpop.f32.mrb[0].mxu0
        %2018 = vmatprep.mubr.f32.mxu0 %v870
        %2019 = vmatmul.mubr.f32.gmra.mrb[0].mxu0 %v869
        %v2020 = vpop.f32.mrb[0].mxu0
        %v2021 = vadd.f32 %v1796, %v2020
        %v2022 = vpop.f32.mrb[0].mxu0
        %2023 = vmatprep.mubr.f32.mxu0 %v879
        %2024 = vmatmul.mubr.f32.gmra.mrb[0].mxu0 %v878
        %v2025 = vpop.f32.mrb[0].mxu0
        %v2026 = vadd.f32 %v1801, %v2025
        %v2027 = vpop.f32.mrb[0].mxu0
        %2028 = vmatprep.mubr.f32.mxu0 %v888
        %2029 = vmatmul.mubr.f32.gmra.mrb[0].mxu0 %v887
        %v2030 = vpop.f32.mrb[0].mxu0
        %v2031 = vadd.f32 %v1806, %v2030
        %v2032 = vpop.f32.mrb[0].mxu0
        %2033 = vmatprep.mubr.f32.mxu0 %v897
        %2034 = vmatmul.mubr.f32.gmra.mrb[0].mxu0 %v896
        %v2035 = vpop.f32.mrb[0].mxu0
        %v2036 = vadd.f32 %v1811, %v2035
        %v2037 = vpop.f32.mrb[0].mxu0
        %2038 = vmatprep.mubr.f32.mxu0 %v906
        %2039 = vmatmul.mubr.f32.gmra.mrb[0].mxu0 %v905
        %v2040 = vpop.f32.mrb[0].mxu0
        %v2041 = vadd.f32 %v1816, %v2040
        %v2042 = vpop.f32.mrb[0].mxu0
        %2043 = vmatprep.mubr.f32.mxu0 %v915
        %2044 = vmatmul.mubr.f32.gmra.mrb[0].mxu0 %v914
        %v2045 = vpop.f32.mrb[0].mxu0
        %v2046 = vadd.f32 %v1821, %v2045
        %v2047 = vpop.f32.mrb[0].mxu0
        %2048 = vmatprep.mubr.f32.mxu0 %v924
        %2049 = vmatmul.mubr.f32.gmra.mrb[0].mxu0 %v923
        %v2050 = vpop.f32.mrb[0].mxu0
        %v2051 = vadd.f32 %v1826, %v2050
        %v2052 = vpop.f32.mrb[0].mxu0
        %2053 = vmatprep.mubr.f32.mxu0 %v933
        %2054 = vmatmul.mubr.f32.gmra.mrb[0].mxu0 %v932
        %v2055 = vpop.f32.mrb[0].mxu0
        %v2056 = vadd.f32 %v1831, %v2055
        %v2057 = vpop.f32.mrb[0].mxu0
        %2058 = vmatprep.mubr.f32.mxu0 %v942
        %2059 = vmatmul.mubr.f32.gmra.mrb[0].mxu0 %v941
        %v2060 = vpop.f32.mrb[0].mxu0
        %v2061 = vadd.f32 %v1836, %v2060
        %v2062 = vpop.f32.mrb[0].mxu0
        %2063 = vmatprep.mubr.f32.mxu0 %v951
        %2064 = vmatmul.mubr.f32.gmra.mrb[0].mxu0 %v950
        %v2065 = vpop.f32.mrb[0].mxu0
        %v2066 = vadd.f32 %v1841, %v2065
        %v2067 = vpop.f32.mrb[0].mxu0
        %2068 = vmatprep.mubr.f32.mxu0 %v960
        %2069 = vmatmul.mubr.f32.gmra.mrb[0].mxu0 %v959
        %v2070 = vpop.f32.mrb[0].mxu0
        %v2071 = vadd.f32 %v1846, %v2070
        %v2072 = vpop.f32.mrb[0].mxu0
        %2073 = vmatprep.mubr.f32.mxu0 %v969
        %2074 = vmatmul.mubr.f32.gmra.mrb[0].mxu0 %v968
        %v2075 = vpop.f32.mrb[0].mxu0
        %v2076 = vadd.f32 %v1851, %v2075
        %v2077 = vpop.f32.mrb[0].mxu0
        %2078 = vmatprep.mubr.f32.mxu0 %v978
        %2079 = vmatmul.mubr.f32.gmra.mrb[0].mxu0 %v977
        %v2080 = vpop.f32.mrb[0].mxu0
        %v2081 = vadd.f32 %v1856, %v2080
        %v2082 = vpop.f32.mrb[0].mxu0
        %2083 = vmatprep.mubr.f32.mxu0 %v987
        %2084 = vmatmul.mubr.f32.gmra.mrb[0].mxu0 %v986
        %v2085 = vpop.f32.mrb[0].mxu0
        %v2086 = vadd.f32 %v1861, %v2085
        %v2087 = vpop.f32.mrb[0].mxu0
        %2088 = vmatprep.mubr.f32.mxu0 %v996
        %2089 = vmatmul.mubr.f32.gmra.mrb[0].mxu0 %v995
        %v2090 = vpop.f32.mrb[0].mxu0
        %v2091 = vadd.f32 %v1866, %v2090
        %v2092 = vpop.f32.mrb[0].mxu0
        %2093 = vmatprep.mubr.f32.mxu0 %v1005
        %2094 = vmatmul.mubr.f32.gmra.mrb[0].mxu0 %v1004
        %v2095 = vpop.f32.mrb[0].mxu0
        %v2096 = vadd.f32 %v1871, %v2095
        %v2097 = vpop.f32.mrb[0].mxu0
        %2098 = vmatprep.mubr.f32.mxu0 %v1014
        %2099 = vmatmul.mubr.f32.gmra.mrb[0].mxu0 %v1013
        %v2100 = vpop.f32.mrb[0].mxu0
        %v2101 = vadd.f32 %v1876, %v2100
        %v2102 = vpop.f32.mrb[0].mxu0
        %2103 = vmatprep.mubr.f32.mxu0 %v1023
        %2104 = vmatmul.mubr.f32.gmra.mrb[0].mxu0 %v1022
        %v2105 = vpop.f32.mrb[0].mxu0
        %v2106 = vadd.f32 %v1881, %v2105
        %v2107 = vpop.f32.mrb[0].mxu0
        %2108 = vmatprep.mubr.f32.mxu0 %v1032
        %2109 = vmatmul.mubr.f32.gmra.mrb[0].mxu0 %v1031
        %v2110 = vpop.f32.mrb[0].mxu0
        %v2111 = vadd.f32 %v1886, %v2110
        %v2112 = vpop.f32.mrb[0].mxu0
        %2113 = vmatprep.mubr.f32.mxu0 %v1041
        %2114 = vmatmul.mubr.f32.gmra.mrb[0].mxu0 %v1040
        %v2115 = vpop.f32.mrb[0].mxu0
        %v2116 = vadd.f32 %v1891, %v2115
        %v2117 = vpop.f32.mrb[0].mxu0
        %2118 = vmatprep.mubr.f32.mxu0 %v1050
        %2119 = vmatmul.mubr.f32.gmra.mrb[0].mxu0 %v1049
        %v2120 = vpop.f32.mrb[0].mxu0
        %v2121 = vadd.f32 %v1896, %v2120
        %v2122 = vpop.f32.mrb[0].mxu0
        %2123 = vmatprep.mubr.f32.mxu0 %v1059
        %2124 = vmatmul.mubr.f32.gmra.mrb[0].mxu0 %v1058
        %v2125 = vpop.f32.mrb[0].mxu0
        %v2126 = vadd.f32 %v1901, %v2125
        %v2127 = vpop.f32.mrb[0].mxu0
        %2128 = vmatprep.mubr.f32.mxu0 %v1068
        %2129 = vmatmul.mubr.f32.gmra.mrb[0].mxu0 %v1067
        %v2130 = vpop.f32.mrb[0].mxu0
        %v2131 = vadd.f32 %v1906, %v2130
        %v2132 = vpop.f32.mrb[0].mxu0
        %2133 = vmatprep.mubr.f32.mxu0 %v1077
        %2134 = vmatmul.mubr.f32.gmra.mrb[0].mxu0 %v1076
        %v2135 = vpop.f32.mrb[0].mxu0
        %v2136 = vadd.f32 %v1911, %v2135
        %v2137 = vpop.f32.mrb[0].mxu0
        %2138 = vmatprep.mubr.f32.mxu0 %v1086
        %2139 = vmatmul.mubr.f32.gmra.mrb[0].mxu0 %v1085
        %v2140 = vpop.f32.mrb[0].mxu0
        %v2141 = vadd.f32 %v1916, %v2140
        %v2142 = vpop.f32.mrb[0].mxu0
        %2143 = vmatprep.mubr.f32.mxu0 %v1095
        %2144 = vmatmul.mubr.f32.gmra.mrb[0].mxu0 %v1094
        %v2145 = vpop.f32.mrb[0].mxu0
        %v2146 = vadd.f32 %v1921, %v2145
        %v2147 = vpop.f32.mrb[0].mxu0
        %2148 = vmatprep.mubr.f32.mxu0 %v1104
        %2149 = vmatmul.mubr.f32.gmra.mrb[0].mxu0 %v1103
        %v2150 = vpop.f32.mrb[0].mxu0
        %v2151 = vadd.f32 %v1926, %v2150
        %v2152 = vpop.f32.mrb[0].mxu0
        %2153 = vdwg.mxu0
        %2154 = vmatprep.subr.mxu0 0.0
        %2155 = vmatpush1.msra.mxu0 %v1234
        %2156 = vmatprep.subr.mxu0 0.0
        %2157 = vmatpush1.msra.mxu0 %v1235
        %2158 = vmatprep.subr.mxu0 0.0
        %2159 = vmatpush1.msra.mxu0 %v1236
        %2160 = vmatprep.subr.mxu0 0.0
        %2161 = vmatpush1.msra.mxu0 %v1237
        %2162 = vmatprep.subr.mxu0 0.0
        %2163 = vmatpush1.msra.mxu0 %v1238
        %2164 = vmatprep.subr.mxu0 0.0
        %2165 = vmatpush1.msra.mxu0 %v1239
        %2166 = vmatprep.subr.mxu0 0.0
        %2167 = vmatpush1.msra.mxu0 %v1240
        %2168 = vmatprep.subr.mxu0 0.0
        %2169 = vmatpush1.msra.mxu0 %v1241
        %2170 = vmatprep.subr.mxu0 0.0
        %2171 = vmatpush1.msra.mxu0 %v1242
        %2172 = vmatprep.subr.mxu0 0.0
        %2173 = vmatpush1.msra.mxu0 %v1243
        %2174 = vmatprep.subr.mxu0 0.0
        %2175 = vmatpush1.msra.mxu0 %v1244
        %2176 = vmatprep.subr.mxu0 0.0
        %2177 = vmatpush1.msra.mxu0 %v1245
        %2178 = vmatprep.subr.mxu0 0.0
        %2179 = vmatpush1.msra.mxu0 %v1246
        %2180 = vmatprep.subr.mxu0 0.0
        %2181 = vmatpush1.msra.mxu0 %v1247
        %2182 = vmatprep.subr.mxu0 0.0
        %2183 = vmatpush1.msra.mxu0 %v1248
        %2184 = vmatprep.subr.mxu0 0.0
        %2185 = vmatpush1.msra.mxu0 %v1249
        %2186 = vmatprep.subr.mxu0 0.0
        %2187 = vmatpush1.msra.mxu0 0.0
        %2188 = vmatprep.subr.mxu0 0.0
        %2189 = vmatpush1.msra.mxu0 0.0
        %2190 = vmatprep.subr.mxu0 0.0
        %2191 = vmatpush1.msra.mxu0 0.0
        %2192 = vmatprep.subr.mxu0 0.0
        %2193 = vmatpush1.msra.mxu0 0.0
        %2194 = vmatprep.subr.mxu0 0.0
        %2195 = vmatpush1.msra.mxu0 0.0
        %2196 = vmatprep.subr.mxu0 0.0
        %2197 = vmatpush1.msra.mxu0 0.0
        %2198 = vmatprep.subr.mxu0 0.0
        %2199 = vmatpush1.msra.mxu0 0.0
        %2200 = vmatprep.subr.mxu0 0.0
        %2201 = vmatpush1.msra.mxu0 0.0
        %2202 = vmatprep.subr.mxu0 0.0
        %2203 = vmatpush1.msra.mxu0 0.0
        %2204 = vmatprep.subr.mxu0 0.0
        %2205 = vmatpush1.msra.mxu0 0.0
        %2206 = vmatprep.subr.mxu0 0.0
        %2207 = vmatpush1.msra.mxu0 0.0
        %2208 = vmatprep.subr.mxu0 0.0
        %2209 = vmatpush1.msra.mxu0 0.0
        %2210 = vmatprep.subr.mxu0 0.0
        %2211 = vmatpush1.msra.mxu0 0.0
        %2212 = vmatprep.subr.mxu0 0.0
        %2213 = vmatpush1.msra.mxu0 0.0
        %2214 = vmatprep.subr.mxu0 0.0
        %2215 = vmatpush1.msra.mxu0 0.0
        %2216 = vmatprep.subr.mxu0 0.0
        %2217 = vmatpush1.msra.mxu0 0.0
        %2218 = vmatprep.mubr.f32.mxu0 0.0
        %2219 = vmatmul.mubr.f32.gmra.mrb[0].mxu0 %v826
        %v2220 = vpop.f32.mrb[0].mxu0
        %v2221 = vadd.f32 %v1996, %v2220
        %v2222 = vpop.f32.mrb[0].mxu0
        %2223 = vmatprep.mubr.f32.mxu0 0.0
        %2224 = vmatmul.mubr.f32.gmra.mrb[0].mxu0 %v835
        %v2225 = vpop.f32.mrb[0].mxu0
        %v2226 = vadd.f32 %v2001, %v2225
        %v2227 = vpop.f32.mrb[0].mxu0
        %2228 = vmatprep.mubr.f32.mxu0 0.0
        %2229 = vmatmul.mubr.f32.gmra.mrb[0].mxu0 %v844
        %v2230 = vpop.f32.mrb[0].mxu0
        %v2231 = vadd.f32 %v2006, %v2230
        %v2232 = vpop.f32.mrb[0].mxu0
        %2233 = vmatprep.mubr.f32.mxu0 0.0
        %2234 = vmatmul.mubr.f32.gmra.mrb[0].mxu0 %v853
        %v2235 = vpop.f32.mrb[0].mxu0
        %v2236 = vadd.f32 %v2011, %v2235
        %v2237 = vpop.f32.mrb[0].mxu0
        %2238 = vmatprep.mubr.f32.mxu0 0.0
        %2239 = vmatmul.mubr.f32.gmra.mrb[0].mxu0 %v862
        %v2240 = vpop.f32.mrb[0].mxu0
        %v2241 = vadd.f32 %v2016, %v2240
        %v2242 = vpop.f32.mrb[0].mxu0
        %2243 = vmatprep.mubr.f32.mxu0 0.0
        %2244 = vmatmul.mubr.f32.gmra.mrb[0].mxu0 %v871
        %v2245 = vpop.f32.mrb[0].mxu0
        %v2246 = vadd.f32 %v2021, %v2245
        %v2247 = vpop.f32.mrb[0].mxu0
        %2248 = vmatprep.mubr.f32.mxu0 0.0
        %2249 = vmatmul.mubr.f32.gmra.mrb[0].mxu0 %v880
        %v2250 = vpop.f32.mrb[0].mxu0
        %v2251 = vadd.f32 %v2026, %v2250
        %v2252 = vpop.f32.mrb[0].mxu0
        %2253 = vmatprep.mubr.f32.mxu0 0.0
        %2254 = vmatmul.mubr.f32.gmra.mrb[0].mxu0 %v889
        %v2255 = vpop.f32.mrb[0].mxu0
        %v2256 = vadd.f32 %v2031, %v2255
        %v2257 = vpop.f32.mrb[0].mxu0
        %2258 = vmatprep.mubr.f32.mxu0 0.0
        %2259 = vmatmul.mubr.f32.gmra.mrb[0].mxu0 %v898
        %v2260 = vpop.f32.mrb[0].mxu0
        %v2261 = vadd.f32 %v2036, %v2260
        %v2262 = vpop.f32.mrb[0].mxu0
        %2263 = vmatprep.mubr.f32.mxu0 0.0
        %2264 = vmatmul.mubr.f32.gmra.mrb[0].mxu0 %v907
        %v2265 = vpop.f32.mrb[0].mxu0
        %v2266 = vadd.f32 %v2041, %v2265
        %v2267 = vpop.f32.mrb[0].mxu0
        %2268 = vmatprep.mubr.f32.mxu0 0.0
        %2269 = vmatmul.mubr.f32.gmra.mrb[0].mxu0 %v916
        %v2270 = vpop.f32.mrb[0].mxu0
        %v2271 = vadd.f32 %v2046, %v2270
        %v2272 = vpop.f32.mrb[0].mxu0
        %2273 = vmatprep.mubr.f32.mxu0 0.0
        %2274 = vmatmul.mubr.f32.gmra.mrb[0].mxu0 %v925
        %v2275 = vpop.f32.mrb[0].mxu0
        %v2276 = vadd.f32 %v2051, %v2275
        %v2277 = vpop.f32.mrb[0].mxu0
        %2278 = vmatprep.mubr.f32.mxu0 0.0
        %2279 = vmatmul.mubr.f32.gmra.mrb[0].mxu0 %v934
        %v2280 = vpop.f32.mrb[0].mxu0
        %v2281 = vadd.f32 %v2056, %v2280
        %v2282 = vpop.f32.mrb[0].mxu0
        %2283 = vmatprep.mubr.f32.mxu0 0.0
        %2284 = vmatmul.mubr.f32.gmra.mrb[0].mxu0 %v943
        %v2285 = vpop.f32.mrb[0].mxu0
        %v2286 = vadd.f32 %v2061, %v2285
        %v2287 = vpop.f32.mrb[0].mxu0
        %2288 = vmatprep.mubr.f32.mxu0 0.0
        %2289 = vmatmul.mubr.f32.gmra.mrb[0].mxu0 %v952
        %v2290 = vpop.f32.mrb[0].mxu0
        %v2291 = vadd.f32 %v2066, %v2290
        %v2292 = vpop.f32.mrb[0].mxu0
        %2293 = vmatprep.mubr.f32.mxu0 0.0
        %2294 = vmatmul.mubr.f32.gmra.mrb[0].mxu0 %v961
        %v2295 = vpop.f32.mrb[0].mxu0
        %v2296 = vadd.f32 %v2071, %v2295
        %v2297 = vpop.f32.mrb[0].mxu0
        %2298 = vmatprep.mubr.f32.mxu0 0.0
        %2299 = vmatmul.mubr.f32.gmra.mrb[0].mxu0 %v970
        %v2300 = vpop.f32.mrb[0].mxu0
        %v2301 = vadd.f32 %v2076, %v2300
        %v2302 = vpop.f32.mrb[0].mxu0
        %2303 = vmatprep.mubr.f32.mxu0 0.0
        %2304 = vmatmul.mubr.f32.gmra.mrb[0].mxu0 %v979
        %v2305 = vpop.f32.mrb[0].mxu0
        %v2306 = vadd.f32 %v2081, %v2305
        %v2307 = vpop.f32.mrb[0].mxu0
        %2308 = vmatprep.mubr.f32.mxu0 0.0
        %2309 = vmatmul.mubr.f32.gmra.mrb[0].mxu0 %v988
        %v2310 = vpop.f32.mrb[0].mxu0
        %v2311 = vadd.f32 %v2086, %v2310
        %v2312 = vpop.f32.mrb[0].mxu0
        %2313 = vmatprep.mubr.f32.mxu0 0.0
        %2314 = vmatmul.mubr.f32.gmra.mrb[0].mxu0 %v997
        %v2315 = vpop.f32.mrb[0].mxu0
        %v2316 = vadd.f32 %v2091, %v2315
        %v2317 = vpop.f32.mrb[0].mxu0
        %2318 = vmatprep.mubr.f32.mxu0 0.0
        %2319 = vmatmul.mubr.f32.gmra.mrb[0].mxu0 %v1006
        %v2320 = vpop.f32.mrb[0].mxu0
        %v2321 = vadd.f32 %v2096, %v2320
        %v2322 = vpop.f32.mrb[0].mxu0
        %2323 = vmatprep.mubr.f32.mxu0 0.0
        %2324 = vmatmul.mubr.f32.gmra.mrb[0].mxu0 %v1015
        %v2325 = vpop.f32.mrb[0].mxu0
        %v2326 = vadd.f32 %v2101, %v2325
        %v2327 = vpop.f32.mrb[0].mxu0
        %2328 = vmatprep.mubr.f32.mxu0 0.0
        %2329 = vmatmul.mubr.f32.gmra.mrb[0].mxu0 %v1024
        %v2330 = vpop.f32.mrb[0].mxu0
        %v2331 = vadd.f32 %v2106, %v2330
        %v2332 = vpop.f32.mrb[0].mxu0
        %2333 = vmatprep.mubr.f32.mxu0 0.0
        %2334 = vmatmul.mubr.f32.gmra.mrb[0].mxu0 %v1033
        %v2335 = vpop.f32.mrb[0].mxu0
        %v2336 = vadd.f32 %v2111, %v2335
        %v2337 = vpop.f32.mrb[0].mxu0
        %2338 = vmatprep.mubr.f32.mxu0 0.0
        %2339 = vmatmul.mubr.f32.gmra.mrb[0].mxu0 %v1042
        %v2340 = vpop.f32.mrb[0].mxu0
        %v2341 = vadd.f32 %v2116, %v2340
        %v2342 = vpop.f32.mrb[0].mxu0
        %2343 = vmatprep.mubr.f32.mxu0 0.0
        %2344 = vmatmul.mubr.f32.gmra.mrb[0].mxu0 %v1051
        %v2345 = vpop.f32.mrb[0].mxu0
        %v2346 = vadd.f32 %v2121, %v2345
        %v2347 = vpop.f32.mrb[0].mxu0
        %2348 = vmatprep.mubr.f32.mxu0 0.0
        %2349 = vmatmul.mubr.f32.gmra.mrb[0].mxu0 %v1060
        %v2350 = vpop.f32.mrb[0].mxu0
        %v2351 = vadd.f32 %v2126, %v2350
        %v2352 = vpop.f32.mrb[0].mxu0
        %2353 = vmatprep.mubr.f32.mxu0 0.0
        %2354 = vmatmul.mubr.f32.gmra.mrb[0].mxu0 %v1069
        %v2355 = vpop.f32.mrb[0].mxu0
        %v2356 = vadd.f32 %v2131, %v2355
        %v2357 = vpop.f32.mrb[0].mxu0
        %2358 = vmatprep.mubr.f32.mxu0 0.0
        %2359 = vmatmul.mubr.f32.gmra.mrb[0].mxu0 %v1078
        %v2360 = vpop.f32.mrb[0].mxu0
        %v2361 = vadd.f32 %v2136, %v2360
        %v2362 = vpop.f32.mrb[0].mxu0
        %2363 = vmatprep.mubr.f32.mxu0 0.0
        %2364 = vmatmul.mubr.f32.gmra.mrb[0].mxu0 %v1087
        %v2365 = vpop.f32.mrb[0].mxu0
        %v2366 = vadd.f32 %v2141, %v2365
        %v2367 = vpop.f32.mrb[0].mxu0
        %2368 = vmatprep.mubr.f32.mxu0 0.0
        %2369 = vmatmul.mubr.f32.gmra.mrb[0].mxu0 %v1096
        %v2370 = vpop.f32.mrb[0].mxu0
        %v2371 = vadd.f32 %v2146, %v2370
        %v2372 = vpop.f32.mrb[0].mxu0
        %2373 = vmatprep.mubr.f32.mxu0 0.0
        %2374 = vmatmul.mubr.f32.gmra.mrb[0].mxu0 %v1105
        %v2375 = vpop.f32.mrb[0].mxu0
        %v2376 = vadd.f32 %v2151, %v2375
        %v2377 = vpop.f32.mrb[0].mxu0
        %2378 = vdwg.mxu0
        %vm2379 = vcmp.ge.f32.partialorder %v2221, 0.0
        %vm2380 = vcmp.ge.f32.partialorder %v2226, 0.0
        %vm2381 = vcmp.ge.f32.partialorder %v2231, 0.0
        %vm2382 = vcmp.ge.f32.partialorder %v2236, 0.0
        %vm2383 = vcmp.ge.f32.partialorder %v2241, 0.0
        %vm2384 = vcmp.ge.f32.partialorder %v2246, 0.0
        %vm2385 = vcmp.ge.f32.partialorder %v2251, 0.0
        %vm2386 = vcmp.ge.f32.partialorder %v2256, 0.0
        %vm2387 = vcmp.ge.f32.partialorder %v2261, 0.0
        %vm2388 = vcmp.ge.f32.partialorder %v2266, 0.0
        %vm2389 = vcmp.ge.f32.partialorder %v2271, 0.0
        %vm2390 = vcmp.ge.f32.partialorder %v2276, 0.0
        %vm2391 = vcmp.ge.f32.partialorder %v2281, 0.0
        %vm2392 = vcmp.ge.f32.partialorder %v2286, 0.0
        %vm2393 = vcmp.ge.f32.partialorder %v2291, 0.0
        %vm2394 = vcmp.ge.f32.partialorder %v2296, 0.0
        %vm2395 = vcmp.ge.f32.partialorder %v2301, 0.0
        %vm2396 = vcmp.ge.f32.partialorder %v2306, 0.0
        %vm2397 = vcmp.ge.f32.partialorder %v2311, 0.0
        %vm2398 = vcmp.ge.f32.partialorder %v2316, 0.0
        %vm2399 = vcmp.ge.f32.partialorder %v2321, 0.0
        %vm2400 = vcmp.ge.f32.partialorder %v2326, 0.0
        %vm2401 = vcmp.ge.f32.partialorder %v2331, 0.0
        %vm2402 = vcmp.ge.f32.partialorder %v2336, 0.0
        %vm2403 = vcmp.ge.f32.partialorder %v2341, 0.0
        %vm2404 = vcmp.ge.f32.partialorder %v2346, 0.0
        %vm2405 = vcmp.ge.f32.partialorder %v2351, 0.0
        %vm2406 = vcmp.ge.f32.partialorder %v2356, 0.0
        %vm2407 = vcmp.ge.f32.partialorder %v2361, 0.0
        %vm2408 = vcmp.ge.f32.partialorder %v2366, 0.0
        %vm2409 = vcmp.ge.f32.partialorder %v2371, 0.0
        %vm2410 = vcmp.ge.f32.partialorder %v2376, 0.0
        %v2411 = vlaneseq
        %v2412 = vshrl.u32 %v2411, 7
        %v2413 = vsub.s32 3, %v2412
        %v2414 = vrot.slane %v245, %v2413
        %v2415 = vmul.f32 %v2414, %v2221
        %v2416 = vmul.f32 %v2414, %v2226
        %v2417 = vmul.f32 %v2414, %v2231
        %v2418 = vmul.f32 %v2414, %v2236
        %v2419 = vmul.f32 %v2414, %v2241
        %v2420 = vmul.f32 %v2414, %v2246
        %v2421 = vmul.f32 %v2414, %v2251
        %v2422 = vmul.f32 %v2414, %v2256
        %v2423 = vmul.f32 %v2414, %v2261
        %v2424 = vmul.f32 %v2414, %v2266
        %v2425 = vmul.f32 %v2414, %v2271
        %v2426 = vmul.f32 %v2414, %v2276
        %v2427 = vmul.f32 %v2414, %v2281
        %v2428 = vmul.f32 %v2414, %v2286
        %v2429 = vmul.f32 %v2414, %v2291
        %v2430 = vmul.f32 %v2414, %v2296
        %v2431 = vmul.f32 %v2414, %v2301
        %v2432 = vmul.f32 %v2414, %v2306
        %v2433 = vmul.f32 %v2414, %v2311
        %v2434 = vmul.f32 %v2414, %v2316
        %v2435 = vmul.f32 %v2414, %v2321
        %v2436 = vmul.f32 %v2414, %v2326
        %v2437 = vmul.f32 %v2414, %v2331
        %v2438 = vmul.f32 %v2414, %v2336
        %v2439 = vmul.f32 %v2414, %v2341
        %v2440 = vmul.f32 %v2414, %v2346
        %v2441 = vmul.f32 %v2414, %v2351
        %v2442 = vmul.f32 %v2414, %v2356
        %v2443 = vmul.f32 %v2414, %v2361
        %v2444 = vmul.f32 %v2414, %v2366
        %v2445 = vmul.f32 %v2414, %v2371
        %v2446 = vmul.f32 %v2414, %v2376
        %v2447 = vsel %vm2379, %v2221, %v2415
        %v2448 = vsel %vm2380, %v2226, %v2416
        %v2449 = vsel %vm2381, %v2231, %v2417
        %v2450 = vsel %vm2382, %v2236, %v2418
        %v2451 = vsel %vm2383, %v2241, %v2419
        %v2452 = vsel %vm2384, %v2246, %v2420
        %v2453 = vsel %vm2385, %v2251, %v2421
        %v2454 = vsel %vm2386, %v2256, %v2422
        %v2455 = vsel %vm2387, %v2261, %v2423
        %v2456 = vsel %vm2388, %v2266, %v2424
        %v2457 = vsel %vm2389, %v2271, %v2425
        %v2458 = vsel %vm2390, %v2276, %v2426
        %v2459 = vsel %vm2391, %v2281, %v2427
        %v2460 = vsel %vm2392, %v2286, %v2428
        %v2461 = vsel %vm2393, %v2291, %v2429
        %v2462 = vsel %vm2394, %v2296, %v2430
        %v2463 = vsel %vm2395, %v2301, %v2431
        %v2464 = vsel %vm2396, %v2306, %v2432
        %v2465 = vsel %vm2397, %v2311, %v2433
        %v2466 = vsel %vm2398, %v2316, %v2434
        %v2467 = vsel %vm2399, %v2321, %v2435
        %v2468 = vsel %vm2400, %v2326, %v2436
        %v2469 = vsel %vm2401, %v2331, %v2437
        %v2470 = vsel %vm2402, %v2336, %v2438
        %v2471 = vsel %vm2403, %v2341, %v2439
        %v2472 = vsel %vm2404, %v2346, %v2440
        %v2473 = vsel %vm2405, %v2351, %v2441
        %v2474 = vsel %vm2406, %v2356, %v2442
        %v2475 = vsel %vm2407, %v2361, %v2443
        %v2476 = vsel %vm2408, %v2366, %v2444
        %v2477 = vsel %vm2409, %v2371, %v2445
        %v2478 = vsel %vm2410, %v2376, %v2446
        %2479 = vst [vmem:[%s253 + $0x1] sm:$0xff] %v2447
        %2480 = vst [vmem:[%s253 + $0x9] sm:$0xff] %v2448
        %2481 = vst [vmem:[%s253 + $0x19] sm:$0xff] %v2449
        %2482 = vst [vmem:[%s253 + $0x21] sm:$0xff] %v2450
        %2483 = vst [vmem:[%s253 + $0x31] sm:$0xff] %v2451
        %2484 = vst [vmem:[%s253 + $0x39] sm:$0xff] %v2452
        %2485 = vst [vmem:[%s253 + $0x49] sm:$0xff] %v2453
        %2486 = vst [vmem:[%s253 + $0x51] sm:$0xff] %v2454
        %2487 = vst [vmem:[%s253 + $0x61] sm:$0xff] %v2455
        %2488 = vst [vmem:[%s253 + $0x69] sm:$0xff] %v2456
        %2489 = vst [vmem:[%s253 + $0x79] sm:$0xff] %v2457
        %2490 = vst [vmem:[%s253 + $0x81] sm:$0xff] %v2458
        %2491 = vst [vmem:[%s253 + $0x91] sm:$0xff] %v2459
        %2492 = vst [vmem:[%s253 + $0x99] sm:$0xff] %v2460
        %2493 = vst [vmem:[%s253 + $0xa9] sm:$0xff] %v2461
        %2494 = vst [vmem:[%s253 + $0xb1] sm:$0xff] %v2462
        %2495 = vst [vmem:[%s253 + $0xc1] sm:$0xff] %v2463
        %2496 = vst [vmem:[%s253 + $0xc9] sm:$0xff] %v2464
        %2497 = vst [vmem:[%s253 + $0xd9] sm:$0xff] %v2465
        %2498 = vst [vmem:[%s253 + $0xe1] sm:$0xff] %v2466
        %2499 = vst [vmem:[%s253 + $0xf1] sm:$0xff] %v2467
        %2500 = vst [vmem:[%s253 + $0xf9] sm:$0xff] %v2468
        %2501 = vst [vmem:[%s253 + $0x109] sm:$0xff] %v2469
        %2502 = vst [vmem:[%s253 + $0x111] sm:$0xff] %v2470
        %2503 = vst [vmem:[%s253 + $0x121] sm:$0xff] %v2471
        %2504 = vst [vmem:[%s253 + $0x129] sm:$0xff] %v2472
        %2505 = vst [vmem:[%s253 + $0x139] sm:$0xff] %v2473
        %2506 = vst [vmem:[%s253 + $0x141] sm:$0xff] %v2474
        %2507 = vst [vmem:[%s253 + $0x151] sm:$0xff] %v2475
        %2508 = vst [vmem:[%s253 + $0x159] sm:$0xff] %v2476
        %2509 = vst [vmem:[%s253 + $0x169] sm:$0xff] %v2477
        %2510 = vst [vmem:[%s253 + $0x171] sm:$0xff] %v2478
        %v2511 = vld [vmem:[#allocation2] sm:$0xff]
        %v2512 = vld [vmem:[#allocation2 + $0x8] sm:$0xff]
        %v2513 = vld [vmem:[#allocation2 + $0x18] sm:$0xff]
        %v2514 = vld [vmem:[#allocation2 + $0x20] sm:$0xff]
        %v2515 = vld [vmem:[#allocation2 + $0x30] sm:$0xff]
        %v2516 = vld [vmem:[#allocation2 + $0x38] sm:$0xff]
        %v2517 = vld [vmem:[#allocation2 + $0x48] sm:$0xff]
        %v2518 = vld [vmem:[#allocation2 + $0x50] sm:$0xff]
        %v2519 = vld [vmem:[#allocation2 + $0x60] sm:$0xff]
        %v2520 = vld [vmem:[#allocation2 + $0x68] sm:$0xff]
        %v2521 = vld [vmem:[#allocation2 + $0x78] sm:$0xff]
        %v2522 = vld [vmem:[#allocation2 + $0x80] sm:$0xff]
        %v2523 = vld [vmem:[#allocation2 + $0x90] sm:$0xff]
        %v2524 = vld [vmem:[#allocation2 + $0x98] sm:$0xff]
        %v2525 = vld [vmem:[#allocation2 + $0xa8] sm:$0xff]
        %v2526 = vld [vmem:[#allocation2 + $0xb0] sm:$0xff]
        %v2527 = vld [vmem:[#allocation2 + $0xc0] sm:$0xff]
        %v2528 = vld [vmem:[#allocation2 + $0xc8] sm:$0xff]
        %v2529 = vld [vmem:[#allocation2 + $0xd8] sm:$0xff]
        %v2530 = vld [vmem:[#allocation2 + $0xe0] sm:$0xff]
        %v2531 = vld [vmem:[#allocation2 + $0xf0] sm:$0xff]
        %v2532 = vld [vmem:[#allocation2 + $0xf8] sm:$0xff]
        %v2533 = vld [vmem:[#allocation2 + $0x108] sm:$0xff]
        %v2534 = vld [vmem:[#allocation2 + $0x110] sm:$0xff]
        %v2535 = vld [vmem:[#allocation2 + $0x120] sm:$0xff]
        %v2536 = vld [vmem:[#allocation2 + $0x128] sm:$0xff]
        %v2537 = vld [vmem:[#allocation2 + $0x138] sm:$0xff]
        %v2538 = vld [vmem:[#allocation2 + $0x140] sm:$0xff]
        %v2539 = vld [vmem:[#allocation2 + $0x150] sm:$0xff]
        %v2540 = vld [vmem:[#allocation2 + $0x158] sm:$0xff]
        %v2541 = vld [vmem:[#allocation2 + $0x168] sm:$0xff]
        %v2542 = vld [vmem:[#allocation2 + $0x170] sm:$0xff]
        %v2543 = vld [vmem:[#allocation2 + $0x180] sm:$0xff]
        %v2544 = vld [vmem:[#allocation2 + $0x188] sm:$0xff]
        %v2545 = vld [vmem:[#allocation2 + $0x198] sm:$0xff]
        %v2546 = vld [vmem:[#allocation2 + $0x1a0] sm:$0xff]
        %2547 = vst [vmem:[#allocation3] sm:$0xff] %v2511
        %2548 = vst [vmem:[#allocation3 + $0x48] sm:$0xff] %v2512
        %2549 = vst [vmem:[#allocation3 + $0x90] sm:$0xff] %v2513
        %2550 = vst [vmem:[#allocation3 + $0xd8] sm:$0xff] %v2514
        %2551 = vst [vmem:[#allocation3 + $0x120] sm:$0xff] %v2515
        %2552 = vst [vmem:[#allocation3 + $0x168] sm:$0xff] %v2516
        %2553 = vst [vmem:[#allocation3 + $0x1b0] sm:$0xff] %v2517
        %2554 = vst [vmem:[#allocation3 + $0x1f8] sm:$0xff] %v2518
        %2555 = vst [vmem:[#allocation3 + $0x240] sm:$0xff] %v2519
        %2556 = vst [vmem:[#allocation3 + $0x288] sm:$0xff] %v2520
        %2557 = vst [vmem:[#allocation3 + $0x2d0] sm:$0xff] %v2521
        %2558 = vst [vmem:[#allocation3 + $0x318] sm:$0xff] %v2522
        %2559 = vst [vmem:[#allocation3 + $0x360] sm:$0xff] %v2523
        %2560 = vst [vmem:[#allocation3 + $0x3a8] sm:$0xff] %v2524
        %2561 = vst [vmem:[#allocation3 + $0x3f0] sm:$0xff] %v2525
        %2562 = vst [vmem:[#allocation3 + $0x438] sm:$0xff] %v2526
        %2563 = vst [vmem:[#allocation3 + $0x480] sm:$0xff] %v2527
        %2564 = vst [vmem:[#allocation3 + $0x4c8] sm:$0xff] %v2528
        %2565 = vst [vmem:[#allocation3 + $0x510] sm:$0xff] %v2529
        %2566 = vst [vmem:[#allocation3 + $0x558] sm:$0xff] %v2530
        %2567 = vst [vmem:[#allocation3 + $0x5a0] sm:$0xff] %v2531
        %2568 = vst [vmem:[#allocation3 + $0x5e8] sm:$0xff] %v2532
        %2569 = vst [vmem:[#allocation3 + $0x630] sm:$0xff] %v2533
        %2570 = vst [vmem:[#allocation3 + $0x678] sm:$0xff] %v2534
        %2571 = vst [vmem:[#allocation3 + $0x6c0] sm:$0xff] %v2535
        %2572 = vst [vmem:[#allocation3 + $0x708] sm:$0xff] %v2536
        %2573 = vst [vmem:[#allocation3 + $0x750] sm:$0xff] %v2537
        %2574 = vst [vmem:[#allocation3 + $0x798] sm:$0xff] %v2538
        %2575 = vst [vmem:[#allocation3 + $0x7e0] sm:$0xff] %v2539
        %2576 = vst [vmem:[#allocation3 + $0x828] sm:$0xff] %v2540
        %2577 = vst [vmem:[#allocation3 + $0x870] sm:$0xff] %v2541
        %2578 = vst [vmem:[#allocation3 + $0x8b8] sm:$0xff] %v2542
        %2579 = vst [vmem:[#allocation3 + $0x18] sm:$0xff] %v2513
        %2580 = vst [vmem:[#allocation3 + $0x60] sm:$0xff] %v2514
        %2581 = vst [vmem:[#allocation3 + $0xa8] sm:$0xff] %v2515
        %2582 = vst [vmem:[#allocation3 + $0xf0] sm:$0xff] %v2516
        %2583 = vst [vmem:[#allocation3 + $0x138] sm:$0xff] %v2517
        %2584 = vst [vmem:[#allocation3 + $0x180] sm:$0xff] %v2518
        %2585 = vst [vmem:[#allocation3 + $0x1c8] sm:$0xff] %v2519
        %2586 = vst [vmem:[#allocation3 + $0x210] sm:$0xff] %v2520
        %2587 = vst [vmem:[#allocation3 + $0x258] sm:$0xff] %v2521
        %2588 = vst [vmem:[#allocation3 + $0x2a0] sm:$0xff] %v2522
        %2589 = vst [vmem:[#allocation3 + $0x2e8] sm:$0xff] %v2523
        %2590 = vst [vmem:[#allocation3 + $0x330] sm:$0xff] %v2524
        %2591 = vst [vmem:[#allocation3 + $0x378] sm:$0xff] %v2525
        %2592 = vst [vmem:[#allocation3 + $0x3c0] sm:$0xff] %v2526
        %2593 = vst [vmem:[#allocation3 + $0x408] sm:$0xff] %v2527
        %2594 = vst [vmem:[#allocation3 + $0x450] sm:$0xff] %v2528
        %2595 = vst [vmem:[#allocation3 + $0x498] sm:$0xff] %v2529
        %2596 = vst [vmem:[#allocation3 + $0x4e0] sm:$0xff] %v2530
        %2597 = vst [vmem:[#allocation3 + $0x528] sm:$0xff] %v2531
        %2598 = vst [vmem:[#allocation3 + $0x570] sm:$0xff] %v2532
        %2599 = vst [vmem:[#allocation3 + $0x5b8] sm:$0xff] %v2533
        %2600 = vst [vmem:[#allocation3 + $0x600] sm:$0xff] %v2534
        %2601 = vst [vmem:[#allocation3 + $0x648] sm:$0xff] %v2535
        %2602 = vst [vmem:[#allocation3 + $0x690] sm:$0xff] %v2536
        %2603 = vst [vmem:[#allocation3 + $0x6d8] sm:$0xff] %v2537
        %2604 = vst [vmem:[#allocation3 + $0x720] sm:$0xff] %v2538
        %2605 = vst [vmem:[#allocation3 + $0x768] sm:$0xff] %v2539
        %2606 = vst [vmem:[#allocation3 + $0x7b0] sm:$0xff] %v2540
        %2607 = vst [vmem:[#allocation3 + $0x7f8] sm:$0xff] %v2541
        %2608 = vst [vmem:[#allocation3 + $0x840] sm:$0xff] %v2542
        %2609 = vst [vmem:[#allocation3 + $0x888] sm:$0xff] %v2543
        %2610 = vst [vmem:[#allocation3 + $0x8d0] sm:$0xff] %v2544
        %2611 = vst [vmem:[#allocation3 + $0x30] sm:$0xff] %v2515
        %2612 = vst [vmem:[#allocation3 + $0x78] sm:$0xff] %v2516
        %2613 = vst [vmem:[#allocation3 + $0xc0] sm:$0xff] %v2517
        %2614 = vst [vmem:[#allocation3 + $0x108] sm:$0xff] %v2518
        %2615 = vst [vmem:[#allocation3 + $0x150] sm:$0xff] %v2519
        %2616 = vst [vmem:[#allocation3 + $0x198] sm:$0xff] %v2520
        %2617 = vst [vmem:[#allocation3 + $0x1e0] sm:$0xff] %v2521
        %2618 = vst [vmem:[#allocation3 + $0x228] sm:$0xff] %v2522
        %2619 = vst [vmem:[#allocation3 + $0x270] sm:$0xff] %v2523
        %2620 = vst [vmem:[#allocation3 + $0x2b8] sm:$0xff] %v2524
        %2621 = vst [vmem:[#allocation3 + $0x300] sm:$0xff] %v2525
        %2622 = vst [vmem:[#allocation3 + $0x348] sm:$0xff] %v2526
        %2623 = vst [vmem:[#allocation3 + $0x390] sm:$0xff] %v2527
        %2624 = vst [vmem:[#allocation3 + $0x3d8] sm:$0xff] %v2528
        %2625 = vst [vmem:[#allocation3 + $0x420] sm:$0xff] %v2529
        %2626 = vst [vmem:[#allocation3 + $0x468] sm:$0xff] %v2530
        %2627 = vst [vmem:[#allocation3 + $0x4b0] sm:$0xff] %v2531
        %2628 = vst [vmem:[#allocation3 + $0x4f8] sm:$0xff] %v2532
        %2629 = vst [vmem:[#allocation3 + $0x540] sm:$0xff] %v2533
        %2630 = vst [vmem:[#allocation3 + $0x588] sm:$0xff] %v2534
        %2631 = vst [vmem:[#allocation3 + $0x5d0] sm:$0xff] %v2535
        %2632 = vst [vmem:[#allocation3 + $0x618] sm:$0xff] %v2536
        %2633 = vst [vmem:[#allocation3 + $0x660] sm:$0xff] %v2537
        %2634 = vst [vmem:[#allocation3 + $0x6a8] sm:$0xff] %v2538
        %2635 = vst [vmem:[#allocation3 + $0x6f0] sm:$0xff] %v2539
        %2636 = vst [vmem:[#allocation3 + $0x738] sm:$0xff] %v2540
        %2637 = vst [vmem:[#allocation3 + $0x780] sm:$0xff] %v2541
        %2638 = vst [vmem:[#allocation3 + $0x7c8] sm:$0xff] %v2542
        %2639 = vst [vmem:[#allocation3 + $0x810] sm:$0xff] %v2543
        %2640 = vst [vmem:[#allocation3 + $0x858] sm:$0xff] %v2544
        %2641 = vst [vmem:[#allocation3 + $0x8a0] sm:$0xff] %v2545
        %2642 = vst [vmem:[#allocation3 + $0x8e8] sm:$0xff] %v2546
        %v2643 = vld [vmem:[#allocation2 + $0x1] sm:$0xff]
        %v2644 = vld [vmem:[#allocation2 + $0x9] sm:$0xff]
        %v2645 = vld [vmem:[#allocation2 + $0x19] sm:$0xff]
        %v2646 = vld [vmem:[#allocation2 + $0x21] sm:$0xff]
        %v2647 = vld [vmem:[#allocation2 + $0x31] sm:$0xff]
        %v2648 = vld [vmem:[#allocation2 + $0x39] sm:$0xff]
        %v2649 = vld [vmem:[#allocation2 + $0x49] sm:$0xff]
        %v2650 = vld [vmem:[#allocation2 + $0x51] sm:$0xff]
        %v2651 = vld [vmem:[#allocation2 + $0x61] sm:$0xff]
        %v2652 = vld [vmem:[#allocation2 + $0x69] sm:$0xff]
        %v2653 = vld [vmem:[#allocation2 + $0x79] sm:$0xff]
        %v2654 = vld [vmem:[#allocation2 + $0x81] sm:$0xff]
        %v2655 = vld [vmem:[#allocation2 + $0x91] sm:$0xff]
        %v2656 = vld [vmem:[#allocation2 + $0x99] sm:$0xff]
        %v2657 = vld [vmem:[#allocation2 + $0xa9] sm:$0xff]
        %v2658 = vld [vmem:[#allocation2 + $0xb1] sm:$0xff]
        %v2659 = vld [vmem:[#allocation2 + $0xc1] sm:$0xff]
        %v2660 = vld [vmem:[#allocation2 + $0xc9] sm:$0xff]
        %v2661 = vld [vmem:[#allocation2 + $0xd9] sm:$0xff]
        %v2662 = vld [vmem:[#allocation2 + $0xe1] sm:$0xff]
        %v2663 = vld [vmem:[#allocation2 + $0xf1] sm:$0xff]
        %v2664 = vld [vmem:[#allocation2 + $0xf9] sm:$0xff]
        %v2665 = vld [vmem:[#allocation2 + $0x109] sm:$0xff]
        %v2666 = vld [vmem:[#allocation2 + $0x111] sm:$0xff]
        %v2667 = vld [vmem:[#allocation2 + $0x121] sm:$0xff]
        %v2668 = vld [vmem:[#allocation2 + $0x129] sm:$0xff]
        %v2669 = vld [vmem:[#allocation2 + $0x139] sm:$0xff]
        %v2670 = vld [vmem:[#allocation2 + $0x141] sm:$0xff]
        %v2671 = vld [vmem:[#allocation2 + $0x151] sm:$0xff]
        %v2672 = vld [vmem:[#allocation2 + $0x159] sm:$0xff]
        %v2673 = vld [vmem:[#allocation2 + $0x169] sm:$0xff]
        %v2674 = vld [vmem:[#allocation2 + $0x171] sm:$0xff]
        %v2675 = vld [vmem:[#allocation2 + $0x181] sm:$0xff]
        %v2676 = vld [vmem:[#allocation2 + $0x189] sm:$0xff]
        %v2677 = vld [vmem:[#allocation2 + $0x199] sm:$0xff]
        %v2678 = vld [vmem:[#allocation2 + $0x1a1] sm:$0xff]
        %2679 = vst [vmem:[#allocation3 + $0x8] sm:$0xff] %v2643
        %2680 = vst [vmem:[#allocation3 + $0x50] sm:$0xff] %v2644
        %2681 = vst [vmem:[#allocation3 + $0x98] sm:$0xff] %v2645
        %2682 = vst [vmem:[#allocation3 + $0xe0] sm:$0xff] %v2646
        %2683 = vst [vmem:[#allocation3 + $0x128] sm:$0xff] %v2647
        %2684 = vst [vmem:[#allocation3 + $0x170] sm:$0xff] %v2648
        %2685 = vst [vmem:[#allocation3 + $0x1b8] sm:$0xff] %v2649
        %2686 = vst [vmem:[#allocation3 + $0x200] sm:$0xff] %v2650
        %2687 = vst [vmem:[#allocation3 + $0x248] sm:$0xff] %v2651
        %2688 = vst [vmem:[#allocation3 + $0x290] sm:$0xff] %v2652
        %2689 = vst [vmem:[#allocation3 + $0x2d8] sm:$0xff] %v2653
        %2690 = vst [vmem:[#allocation3 + $0x320] sm:$0xff] %v2654
        %2691 = vst [vmem:[#allocation3 + $0x368] sm:$0xff] %v2655
        %2692 = vst [vmem:[#allocation3 + $0x3b0] sm:$0xff] %v2656
        %2693 = vst [vmem:[#allocation3 + $0x3f8] sm:$0xff] %v2657
        %2694 = vst [vmem:[#allocation3 + $0x440] sm:$0xff] %v2658
        %2695 = vst [vmem:[#allocation3 + $0x488] sm:$0xff] %v2659
        %2696 = vst [vmem:[#allocation3 + $0x4d0] sm:$0xff] %v2660
        %2697 = vst [vmem:[#allocation3 + $0x518] sm:$0xff] %v2661
        %2698 = vst [vmem:[#allocation3 + $0x560] sm:$0xff] %v2662
        %2699 = vst [vmem:[#allocation3 + $0x5a8] sm:$0xff] %v2663
        %2700 = vst [vmem:[#allocation3 + $0x5f0] sm:$0xff] %v2664
        %2701 = vst [vmem:[#allocation3 + $0x638] sm:$0xff] %v2665
        %2702 = vst [vmem:[#allocation3 + $0x680] sm:$0xff] %v2666
        %2703 = vst [vmem:[#allocation3 + $0x6c8] sm:$0xff] %v2667
        %2704 = vst [vmem:[#allocation3 + $0x710] sm:$0xff] %v2668
        %2705 = vst [vmem:[#allocation3 + $0x758] sm:$0xff] %v2669
        %2706 = vst [vmem:[#allocation3 + $0x7a0] sm:$0xff] %v2670
        %2707 = vst [vmem:[#allocation3 + $0x7e8] sm:$0xff] %v2671
        %2708 = vst [vmem:[#allocation3 + $0x830] sm:$0xff] %v2672
        %2709 = vst [vmem:[#allocation3 + $0x878] sm:$0xff] %v2673
        %2710 = vst [vmem:[#allocation3 + $0x8c0] sm:$0xff] %v2674
        %2711 = vst [vmem:[#allocation3 + $0x20] sm:$0xff] %v2645
        %2712 = vst [vmem:[#allocation3 + $0x68] sm:$0xff] %v2646
        %2713 = vst [vmem:[#allocation3 + $0xb0] sm:$0xff] %v2647
        %2714 = vst [vmem:[#allocation3 + $0xf8] sm:$0xff] %v2648
        %2715 = vst [vmem:[#allocation3 + $0x140] sm:$0xff] %v2649
        %2716 = vst [vmem:[#allocation3 + $0x188] sm:$0xff] %v2650
        %2717 = vst [vmem:[#allocation3 + $0x1d0] sm:$0xff] %v2651
        %2718 = vst [vmem:[#allocation3 + $0x218] sm:$0xff] %v2652
        %2719 = vst [vmem:[#allocation3 + $0x260] sm:$0xff] %v2653
        %2720 = vst [vmem:[#allocation3 + $0x2a8] sm:$0xff] %v2654
        %2721 = vst [vmem:[#allocation3 + $0x2f0] sm:$0xff] %v2655
        %2722 = vst [vmem:[#allocation3 + $0x338] sm:$0xff] %v2656
        %2723 = vst [vmem:[#allocation3 + $0x380] sm:$0xff] %v2657
        %2724 = vst [vmem:[#allocation3 + $0x3c8] sm:$0xff] %v2658
        %2725 = vst [vmem:[#allocation3 + $0x410] sm:$0xff] %v2659
        %2726 = vst [vmem:[#allocation3 + $0x458] sm:$0xff] %v2660
        %2727 = vst [vmem:[#allocation3 + $0x4a0] sm:$0xff] %v2661
        %2728 = vst [vmem:[#allocation3 + $0x4e8] sm:$0xff] %v2662
        %2729 = vst [vmem:[#allocation3 + $0x530] sm:$0xff] %v2663
        %2730 = vst [vmem:[#allocation3 + $0x578] sm:$0xff] %v2664
        %2731 = vst [vmem:[#allocation3 + $0x5c0] sm:$0xff] %v2665
        %2732 = vst [vmem:[#allocation3 + $0x608] sm:$0xff] %v2666
        %2733 = vst [vmem:[#allocation3 + $0x650] sm:$0xff] %v2667
        %2734 = vst [vmem:[#allocation3 + $0x698] sm:$0xff] %v2668
        %2735 = vst [vmem:[#allocation3 + $0x6e0] sm:$0xff] %v2669
        %2736 = vst [vmem:[#allocation3 + $0x728] sm:$0xff] %v2670
        %2737 = vst [vmem:[#allocation3 + $0x770] sm:$0xff] %v2671
        %2738 = vst [vmem:[#allocation3 + $0x7b8] sm:$0xff] %v2672
        %2739 = vst [vmem:[#allocation3 + $0x800] sm:$0xff] %v2673
        %2740 = vst [vmem:[#allocation3 + $0x848] sm:$0xff] %v2674
        %2741 = vst [vmem:[#allocation3 + $0x890] sm:$0xff] %v2675
        %2742 = vst [vmem:[#allocation3 + $0x8d8] sm:$0xff] %v2676
        %2743 = vst [vmem:[#allocation3 + $0x38] sm:$0xff] %v2647
        %2744 = vst [vmem:[#allocation3 + $0x80] sm:$0xff] %v2648
        %2745 = vst [vmem:[#allocation3 + $0xc8] sm:$0xff] %v2649
        %2746 = vst [vmem:[#allocation3 + $0x110] sm:$0xff] %v2650
        %2747 = vst [vmem:[#allocation3 + $0x158] sm:$0xff] %v2651
        %2748 = vst [vmem:[#allocation3 + $0x1a0] sm:$0xff] %v2652
        %2749 = vst [vmem:[#allocation3 + $0x1e8] sm:$0xff] %v2653
        %2750 = vst [vmem:[#allocation3 + $0x230] sm:$0xff] %v2654
        %2751 = vst [vmem:[#allocation3 + $0x278] sm:$0xff] %v2655
        %2752 = vst [vmem:[#allocation3 + $0x2c0] sm:$0xff] %v2656
        %2753 = vst [vmem:[#allocation3 + $0x308] sm:$0xff] %v2657
        %2754 = vst [vmem:[#allocation3 + $0x350] sm:$0xff] %v2658
        %2755 = vst [vmem:[#allocation3 + $0x398] sm:$0xff] %v2659
        %2756 = vst [vmem:[#allocation3 + $0x3e0] sm:$0xff] %v2660
        %2757 = vst [vmem:[#allocation3 + $0x428] sm:$0xff] %v2661
        %2758 = vst [vmem:[#allocation3 + $0x470] sm:$0xff] %v2662
        %2759 = vst [vmem:[#allocation3 + $0x4b8] sm:$0xff] %v2663
        %2760 = vst [vmem:[#allocation3 + $0x500] sm:$0xff] %v2664
        %2761 = vst [vmem:[#allocation3 + $0x548] sm:$0xff] %v2665
        %2762 = vst [vmem:[#allocation3 + $0x590] sm:$0xff] %v2666
        %2763 = vst [vmem:[#allocation3 + $0x5d8] sm:$0xff] %v2667
        %2764 = vst [vmem:[#allocation3 + $0x620] sm:$0xff] %v2668
        %2765 = vst [vmem:[#allocation3 + $0x668] sm:$0xff] %v2669
        %2766 = vst [vmem:[#allocation3 + $0x6b0] sm:$0xff] %v2670
        %2767 = vst [vmem:[#allocation3 + $0x6f8] sm:$0xff] %v2671
        %2768 = vst [vmem:[#allocation3 + $0x740] sm:$0xff] %v2672
        %2769 = vst [vmem:[#allocation3 + $0x788] sm:$0xff] %v2673
        %2770 = vst [vmem:[#allocation3 + $0x7d0] sm:$0xff] %v2674
        %2771 = vst [vmem:[#allocation3 + $0x818] sm:$0xff] %v2675
        %2772 = vst [vmem:[#allocation3 + $0x860] sm:$0xff] %v2676
        %2773 = vst [vmem:[#allocation3 + $0x8a8] sm:$0xff] %v2677
        %2774 = vst [vmem:[#allocation3 + $0x8f0] sm:$0xff] %v2678
        %v2775 = vld [vmem:[#allocation2 + $0x2] sm:$0xff]
        %v2776 = vld [vmem:[#allocation2 + $0xa] sm:$0xff]
        %v2777 = vld [vmem:[#allocation2 + $0x1a] sm:$0xff]
        %v2778 = vld [vmem:[#allocation2 + $0x22] sm:$0xff]
        %v2779 = vld [vmem:[#allocation2 + $0x32] sm:$0xff]
        %v2780 = vld [vmem:[#allocation2 + $0x3a] sm:$0xff]
        %v2781 = vld [vmem:[#allocation2 + $0x4a] sm:$0xff]
        %v2782 = vld [vmem:[#allocation2 + $0x52] sm:$0xff]
        %v2783 = vld [vmem:[#allocation2 + $0x62] sm:$0xff]
        %v2784 = vld [vmem:[#allocation2 + $0x6a] sm:$0xff]
        %v2785 = vld [vmem:[#allocation2 + $0x7a] sm:$0xff]
        %v2786 = vld [vmem:[#allocation2 + $0x82] sm:$0xff]
        %v2787 = vld [vmem:[#allocation2 + $0x92] sm:$0xff]
        %v2788 = vld [vmem:[#allocation2 + $0x9a] sm:$0xff]
        %v2789 = vld [vmem:[#allocation2 + $0xaa] sm:$0xff]
        %v2790 = vld [vmem:[#allocation2 + $0xb2] sm:$0xff]
        %v2791 = vld [vmem:[#allocation2 + $0xc2] sm:$0xff]
        %v2792 = vld [vmem:[#allocation2 + $0xca] sm:$0xff]
        %v2793 = vld [vmem:[#allocation2 + $0xda] sm:$0xff]
        %v2794 = vld [vmem:[#allocation2 + $0xe2] sm:$0xff]
        %v2795 = vld [vmem:[#allocation2 + $0xf2] sm:$0xff]
        %v2796 = vld [vmem:[#allocation2 + $0xfa] sm:$0xff]
        %v2797 = vld [vmem:[#allocation2 + $0x10a] sm:$0xff]
        %v2798 = vld [vmem:[#allocation2 + $0x112] sm:$0xff]
        %v2799 = vld [vmem:[#allocation2 + $0x122] sm:$0xff]
        %v2800 = vld [vmem:[#allocation2 + $0x12a] sm:$0xff]
        %v2801 = vld [vmem:[#allocation2 + $0x13a] sm:$0xff]
        %v2802 = vld [vmem:[#allocation2 + $0x142] sm:$0xff]
        %v2803 = vld [vmem:[#allocation2 + $0x152] sm:$0xff]
        %v2804 = vld [vmem:[#allocation2 + $0x15a] sm:$0xff]
        %v2805 = vld [vmem:[#allocation2 + $0x16a] sm:$0xff]
        %v2806 = vld [vmem:[#allocation2 + $0x172] sm:$0xff]
        %v2807 = vld [vmem:[#allocation2 + $0x182] sm:$0xff]
        %v2808 = vld [vmem:[#allocation2 + $0x18a] sm:$0xff]
        %v2809 = vld [vmem:[#allocation2 + $0x19a] sm:$0xff]
        %v2810 = vld [vmem:[#allocation2 + $0x1a2] sm:$0xff]
        %2811 = vst [vmem:[#allocation3 + $0x10] sm:$0xff] %v2775
        %2812 = vst [vmem:[#allocation3 + $0x58] sm:$0xff] %v2776
        %2813 = vst [vmem:[#allocation3 + $0xa0] sm:$0xff] %v2777
        %2814 = vst [vmem:[#allocation3 + $0xe8] sm:$0xff] %v2778
        %2815 = vst [vmem:[#allocation3 + $0x130] sm:$0xff] %v2779
        %2816 = vst [vmem:[#allocation3 + $0x178] sm:$0xff] %v2780
        %2817 = vst [vmem:[#allocation3 + $0x1c0] sm:$0xff] %v2781
        %2818 = vst [vmem:[#allocation3 + $0x208] sm:$0xff] %v2782
        %2819 = vst [vmem:[#allocation3 + $0x250] sm:$0xff] %v2783
        %2820 = vst [vmem:[#allocation3 + $0x298] sm:$0xff] %v2784
        %2821 = vst [vmem:[#allocation3 + $0x2e0] sm:$0xff] %v2785
        %2822 = vst [vmem:[#allocation3 + $0x328] sm:$0xff] %v2786
        %2823 = vst [vmem:[#allocation3 + $0x370] sm:$0xff] %v2787
        %2824 = vst [vmem:[#allocation3 + $0x3b8] sm:$0xff] %v2788
        %2825 = vst [vmem:[#allocation3 + $0x400] sm:$0xff] %v2789
        %2826 = vst [vmem:[#allocation3 + $0x448] sm:$0xff] %v2790
        %2827 = vst [vmem:[#allocation3 + $0x490] sm:$0xff] %v2791
        %2828 = vst [vmem:[#allocation3 + $0x4d8] sm:$0xff] %v2792
        %2829 = vst [vmem:[#allocation3 + $0x520] sm:$0xff] %v2793
        %2830 = vst [vmem:[#allocation3 + $0x568] sm:$0xff] %v2794
        %2831 = vst [vmem:[#allocation3 + $0x5b0] sm:$0xff] %v2795
        %2832 = vst [vmem:[#allocation3 + $0x5f8] sm:$0xff] %v2796
        %2833 = vst [vmem:[#allocation3 + $0x640] sm:$0xff] %v2797
        %2834 = vst [vmem:[#allocation3 + $0x688] sm:$0xff] %v2798
        %2835 = vst [vmem:[#allocation3 + $0x6d0] sm:$0xff] %v2799
        %2836 = vst [vmem:[#allocation3 + $0x718] sm:$0xff] %v2800
        %2837 = vst [vmem:[#allocation3 + $0x760] sm:$0xff] %v2801
        %2838 = vst [vmem:[#allocation3 + $0x7a8] sm:$0xff] %v2802
        %2839 = vst [vmem:[#allocation3 + $0x7f0] sm:$0xff] %v2803
        %2840 = vst [vmem:[#allocation3 + $0x838] sm:$0xff] %v2804
        %2841 = vst [vmem:[#allocation3 + $0x880] sm:$0xff] %v2805
        %2842 = vst [vmem:[#allocation3 + $0x8c8] sm:$0xff] %v2806
        %2843 = vst [vmem:[#allocation3 + $0x28] sm:$0xff] %v2777
        %2844 = vst [vmem:[#allocation3 + $0x70] sm:$0xff] %v2778
        %2845 = vst [vmem:[#allocation3 + $0xb8] sm:$0xff] %v2779
        %2846 = vst [vmem:[#allocation3 + $0x100] sm:$0xff] %v2780
        %2847 = vst [vmem:[#allocation3 + $0x148] sm:$0xff] %v2781
        %2848 = vst [vmem:[#allocation3 + $0x190] sm:$0xff] %v2782
        %2849 = vst [vmem:[#allocation3 + $0x1d8] sm:$0xff] %v2783
        %2850 = vst [vmem:[#allocation3 + $0x220] sm:$0xff] %v2784
        %2851 = vst [vmem:[#allocation3 + $0x268] sm:$0xff] %v2785
        %2852 = vst [vmem:[#allocation3 + $0x2b0] sm:$0xff] %v2786
        %2853 = vst [vmem:[#allocation3 + $0x2f8] sm:$0xff] %v2787
        %2854 = vst [vmem:[#allocation3 + $0x340] sm:$0xff] %v2788
        %2855 = vst [vmem:[#allocation3 + $0x388] sm:$0xff] %v2789
        %2856 = vst [vmem:[#allocation3 + $0x3d0] sm:$0xff] %v2790
        %2857 = vst [vmem:[#allocation3 + $0x418] sm:$0xff] %v2791
        %2858 = vst [vmem:[#allocation3 + $0x460] sm:$0xff] %v2792
        %2859 = vst [vmem:[#allocation3 + $0x4a8] sm:$0xff] %v2793
        %2860 = vst [vmem:[#allocation3 + $0x4f0] sm:$0xff] %v2794
        %2861 = vst [vmem:[#allocation3 + $0x538] sm:$0xff] %v2795
        %2862 = vst [vmem:[#allocation3 + $0x580] sm:$0xff] %v2796
        %2863 = vst [vmem:[#allocation3 + $0x5c8] sm:$0xff] %v2797
        %2864 = vst [vmem:[#allocation3 + $0x610] sm:$0xff] %v2798
        %2865 = vst [vmem:[#allocation3 + $0x658] sm:$0xff] %v2799
        %2866 = vst [vmem:[#allocation3 + $0x6a0] sm:$0xff] %v2800
        %2867 = vst [vmem:[#allocation3 + $0x6e8] sm:$0xff] %v2801
        %2868 = vst [vmem:[#allocation3 + $0x730] sm:$0xff] %v2802
        %2869 = vst [vmem:[#allocation3 + $0x778] sm:$0xff] %v2803
        %2870 = vst [vmem:[#allocation3 + $0x7c0] sm:$0xff] %v2804
        %2871 = vst [vmem:[#allocation3 + $0x808] sm:$0xff] %v2805
        %2872 = vst [vmem:[#allocation3 + $0x850] sm:$0xff] %v2806
        %2873 = vst [vmem:[#allocation3 + $0x898] sm:$0xff] %v2807
        %2874 = vst [vmem:[#allocation3 + $0x8e0] sm:$0xff] %v2808
        %2875 = vst [vmem:[#allocation3 + $0x40] sm:$0xff] %v2779
        %2876 = vst [vmem:[#allocation3 + $0x88] sm:$0xff] %v2780
        %2877 = vst [vmem:[#allocation3 + $0xd0] sm:$0xff] %v2781
        %2878 = vst [vmem:[#allocation3 + $0x118] sm:$0xff] %v2782
        %2879 = vst [vmem:[#allocation3 + $0x160] sm:$0xff] %v2783
        %2880 = vst [vmem:[#allocation3 + $0x1a8] sm:$0xff] %v2784
        %2881 = vst [vmem:[#allocation3 + $0x1f0] sm:$0xff] %v2785
        %2882 = vst [vmem:[#allocation3 + $0x238] sm:$0xff] %v2786
        %2883 = vst [vmem:[#allocation3 + $0x280] sm:$0xff] %v2787
        %2884 = vst [vmem:[#allocation3 + $0x2c8] sm:$0xff] %v2788
        %2885 = vst [vmem:[#allocation3 + $0x310] sm:$0xff] %v2789
        %2886 = vst [vmem:[#allocation3 + $0x358] sm:$0xff] %v2790
        %2887 = vst [vmem:[#allocation3 + $0x3a0] sm:$0xff] %v2791
        %2888 = vst [vmem:[#allocation3 + $0x3e8] sm:$0xff] %v2792
        %2889 = vst [vmem:[#allocation3 + $0x430] sm:$0xff] %v2793
        %2890 = vst [vmem:[#allocation3 + $0x478] sm:$0xff] %v2794
        %2891 = vst [vmem:[#allocation3 + $0x4c0] sm:$0xff] %v2795
        %2892 = vst [vmem:[#allocation3 + $0x508] sm:$0xff] %v2796
        %2893 = vst [vmem:[#allocation3 + $0x550] sm:$0xff] %v2797
        %2894 = vst [vmem:[#allocation3 + $0x598] sm:$0xff] %v2798
        %2895 = vst [vmem:[#allocation3 + $0x5e0] sm:$0xff] %v2799
        %2896 = vst [vmem:[#allocation3 + $0x628] sm:$0xff] %v2800
        %2897 = vst [vmem:[#allocation3 + $0x670] sm:$0xff] %v2801
        %2898 = vst [vmem:[#allocation3 + $0x6b8] sm:$0xff] %v2802
        %2899 = vst [vmem:[#allocation3 + $0x700] sm:$0xff] %v2803
        %2900 = vst [vmem:[#allocation3 + $0x748] sm:$0xff] %v2804
        %2901 = vst [vmem:[#allocation3 + $0x790] sm:$0xff] %v2805
        %2902 = vst [vmem:[#allocation3 + $0x7d8] sm:$0xff] %v2806
        %2903 = vst [vmem:[#allocation3 + $0x820] sm:$0xff] %v2807
        %2904 = vst [vmem:[#allocation3 + $0x868] sm:$0xff] %v2808
        %2905 = vst [vmem:[#allocation3 + $0x8b0] sm:$0xff] %v2809
        %2906 = vst [vmem:[#allocation3 + $0x8f8] sm:$0xff] %v2810
        %v2907 = vld [vmem:[#allocation3] sm:$0xff]
        %v2908 = vld [vmem:[#allocation3 + $0x8] sm:$0xff]
        %v2909 = vld [vmem:[#allocation3 + $0x10] sm:$0xff]
        %v2910 = vld [vmem:[#allocation3 + $0x18] sm:$0xff]
        %v2911 = vld [vmem:[#allocation3 + $0x20] sm:$0xff]
        %v2912 = vld [vmem:[#allocation3 + $0x28] sm:$0xff]
        %v2913 = vld [vmem:[#allocation3 + $0x30] sm:$0xff]
        %v2914 = vld [vmem:[#allocation3 + $0x38] sm:$0xff]
        %v2915 = vld [vmem:[#allocation3 + $0x40] sm:$0xff]
        %v2916 = vld [vmem:[#allocation3 + $0x48] sm:$0xff]
        %v2917 = vld [vmem:[#allocation3 + $0x50] sm:$0xff]
        %v2918 = vld [vmem:[#allocation3 + $0x58] sm:$0xff]
        %v2919 = vld [vmem:[#allocation3 + $0x60] sm:$0xff]
        %v2920 = vld [vmem:[#allocation3 + $0x68] sm:$0xff]
        %v2921 = vld [vmem:[#allocation3 + $0x70] sm:$0xff]
        %v2922 = vld [vmem:[#allocation3 + $0x78] sm:$0xff]
        %v2923 = vld [vmem:[#allocation3 + $0x80] sm:$0xff]
        %v2924 = vld [vmem:[#allocation3 + $0x88] sm:$0xff]
        %v2925 = vld [vmem:[#allocation3 + $0x90] sm:$0xff]
        %v2926 = vld [vmem:[#allocation3 + $0x98] sm:$0xff]
        %v2927 = vld [vmem:[#allocation3 + $0xa0] sm:$0xff]
        %v2928 = vld [vmem:[#allocation3 + $0xa8] sm:$0xff]
        %v2929 = vld [vmem:[#allocation3 + $0xb0] sm:$0xff]
        %v2930 = vld [vmem:[#allocation3 + $0xb8] sm:$0xff]
        %v2931 = vld [vmem:[#allocation3 + $0xc0] sm:$0xff]
        %v2932 = vld [vmem:[#allocation3 + $0xc8] sm:$0xff]
        %v2933 = vld [vmem:[#allocation3 + $0xd0] sm:$0xff]
        %v2934 = vld [vmem:[#allocation3 + $0xd8] sm:$0xff]
        %v2935 = vld [vmem:[#allocation3 + $0xe0] sm:$0xff]
        %v2936 = vld [vmem:[#allocation3 + $0xe8] sm:$0xff]
        %v2937 = vld [vmem:[#allocation3 + $0xf0] sm:$0xff]
        %v2938 = vld [vmem:[#allocation3 + $0xf8] sm:$0xff]
        %v2939 = vld [vmem:[#allocation3 + $0x100] sm:$0xff]
        %v2940 = vld [vmem:[#allocation3 + $0x108] sm:$0xff]
        %v2941 = vld [vmem:[#allocation3 + $0x110] sm:$0xff]
        %v2942 = vld [vmem:[#allocation3 + $0x118] sm:$0xff]
        %v2943 = vld [vmem:[#allocation3 + $0x120] sm:$0xff]
        %v2944 = vld [vmem:[#allocation3 + $0x128] sm:$0xff]
        %v2945 = vld [vmem:[#allocation3 + $0x130] sm:$0xff]
        %v2946 = vld [vmem:[#allocation3 + $0x138] sm:$0xff]
        %v2947 = vld [vmem:[#allocation3 + $0x140] sm:$0xff]
        %v2948 = vld [vmem:[#allocation3 + $0x148] sm:$0xff]
        %v2949 = vld [vmem:[#allocation3 + $0x150] sm:$0xff]
        %v2950 = vld [vmem:[#allocation3 + $0x158] sm:$0xff]
        %v2951 = vld [vmem:[#allocation3 + $0x160] sm:$0xff]
        %v2952 = vld [vmem:[#allocation3 + $0x168] sm:$0xff]
        %v2953 = vld [vmem:[#allocation3 + $0x170] sm:$0xff]
        %v2954 = vld [vmem:[#allocation3 + $0x178] sm:$0xff]
        %v2955 = vld [vmem:[#allocation3 + $0x180] sm:$0xff]
        %v2956 = vld [vmem:[#allocation3 + $0x188] sm:$0xff]
        %v2957 = vld [vmem:[#allocation3 + $0x190] sm:$0xff]
        %v2958 = vld [vmem:[#allocation3 + $0x198] sm:$0xff]
        %v2959 = vld [vmem:[#allocation3 + $0x1a0] sm:$0xff]
        %v2960 = vld [vmem:[#allocation3 + $0x1a8] sm:$0xff]
        %v2961 = vld [vmem:[#allocation3 + $0x1b0] sm:$0xff]
        %v2962 = vld [vmem:[#allocation3 + $0x1b8] sm:$0xff]
        %v2963 = vld [vmem:[#allocation3 + $0x1c0] sm:$0xff]
        %v2964 = vld [vmem:[#allocation3 + $0x1c8] sm:$0xff]
        %v2965 = vld [vmem:[#allocation3 + $0x1d0] sm:$0xff]
        %v2966 = vld [vmem:[#allocation3 + $0x1d8] sm:$0xff]
        %v2967 = vld [vmem:[#allocation3 + $0x1e0] sm:$0xff]
        %v2968 = vld [vmem:[#allocation3 + $0x1e8] sm:$0xff]
        %v2969 = vld [vmem:[#allocation3 + $0x1f0] sm:$0xff]
        %v2970 = vld [vmem:[#allocation3 + $0x1f8] sm:$0xff]
        %v2971 = vld [vmem:[#allocation3 + $0x200] sm:$0xff]
        %v2972 = vld [vmem:[#allocation3 + $0x208] sm:$0xff]
        %v2973 = vld [vmem:[#allocation3 + $0x210] sm:$0xff]
        %v2974 = vld [vmem:[#allocation3 + $0x218] sm:$0xff]
        %v2975 = vld [vmem:[#allocation3 + $0x220] sm:$0xff]
        %v2976 = vld [vmem:[#allocation3 + $0x228] sm:$0xff]
        %v2977 = vld [vmem:[#allocation3 + $0x230] sm:$0xff]
        %v2978 = vld [vmem:[#allocation3 + $0x238] sm:$0xff]
        %v2979 = vld [vmem:[#allocation3 + $0x240] sm:$0xff]
        %v2980 = vld [vmem:[#allocation3 + $0x248] sm:$0xff]
        %v2981 = vld [vmem:[#allocation3 + $0x250] sm:$0xff]
        %v2982 = vld [vmem:[#allocation3 + $0x258] sm:$0xff]
        %v2983 = vld [vmem:[#allocation3 + $0x260] sm:$0xff]
        %v2984 = vld [vmem:[#allocation3 + $0x268] sm:$0xff]
        %v2985 = vld [vmem:[#allocation3 + $0x270] sm:$0xff]
        %v2986 = vld [vmem:[#allocation3 + $0x278] sm:$0xff]
        %v2987 = vld [vmem:[#allocation3 + $0x280] sm:$0xff]
        %v2988 = vld [vmem:[#allocation3 + $0x288] sm:$0xff]
        %v2989 = vld [vmem:[#allocation3 + $0x290] sm:$0xff]
        %v2990 = vld [vmem:[#allocation3 + $0x298] sm:$0xff]
        %v2991 = vld [vmem:[#allocation3 + $0x2a0] sm:$0xff]
        %v2992 = vld [vmem:[#allocation3 + $0x2a8] sm:$0xff]
        %v2993 = vld [vmem:[#allocation3 + $0x2b0] sm:$0xff]
        %v2994 = vld [vmem:[#allocation3 + $0x2b8] sm:$0xff]
        %v2995 = vld [vmem:[#allocation3 + $0x2c0] sm:$0xff]
        %v2996 = vld [vmem:[#allocation3 + $0x2c8] sm:$0xff]
        %v2997 = vld [vmem:[#allocation3 + $0x2d0] sm:$0xff]
        %v2998 = vld [vmem:[#allocation3 + $0x2d8] sm:$0xff]
        %v2999 = vld [vmem:[#allocation3 + $0x2e0] sm:$0xff]
        %v3000 = vld [vmem:[#allocation3 + $0x2e8] sm:$0xff]
        %v3001 = vld [vmem:[#allocation3 + $0x2f0] sm:$0xff]
        %v3002 = vld [vmem:[#allocation3 + $0x2f8] sm:$0xff]
        %v3003 = vld [vmem:[#allocation3 + $0x300] sm:$0xff]
        %v3004 = vld [vmem:[#allocation3 + $0x308] sm:$0xff]
        %v3005 = vld [vmem:[#allocation3 + $0x310] sm:$0xff]
        %v3006 = vld [vmem:[#allocation3 + $0x318] sm:$0xff]
        %v3007 = vld [vmem:[#allocation3 + $0x320] sm:$0xff]
        %v3008 = vld [vmem:[#allocation3 + $0x328] sm:$0xff]
        %v3009 = vld [vmem:[#allocation3 + $0x330] sm:$0xff]
        %v3010 = vld [vmem:[#allocation3 + $0x338] sm:$0xff]
        %v3011 = vld [vmem:[#allocation3 + $0x340] sm:$0xff]
        %v3012 = vld [vmem:[#allocation3 + $0x348] sm:$0xff]
        %v3013 = vld [vmem:[#allocation3 + $0x350] sm:$0xff]
        %v3014 = vld [vmem:[#allocation3 + $0x358] sm:$0xff]
        %v3015 = vld [vmem:[#allocation3 + $0x360] sm:$0xff]
        %v3016 = vld [vmem:[#allocation3 + $0x368] sm:$0xff]
        %v3017 = vld [vmem:[#allocation3 + $0x370] sm:$0xff]
        %v3018 = vld [vmem:[#allocation3 + $0x378] sm:$0xff]
        %v3019 = vld [vmem:[#allocation3 + $0x380] sm:$0xff]
        %v3020 = vld [vmem:[#allocation3 + $0x388] sm:$0xff]
        %v3021 = vld [vmem:[#allocation3 + $0x390] sm:$0xff]
        %v3022 = vld [vmem:[#allocation3 + $0x398] sm:$0xff]
        %v3023 = vld [vmem:[#allocation3 + $0x3a0] sm:$0xff]
        %v3024 = vld [vmem:[#allocation3 + $0x3a8] sm:$0xff]
        %v3025 = vld [vmem:[#allocation3 + $0x3b0] sm:$0xff]
        %v3026 = vld [vmem:[#allocation3 + $0x3b8] sm:$0xff]
        %v3027 = vld [vmem:[#allocation3 + $0x3c0] sm:$0xff]
        %v3028 = vld [vmem:[#allocation3 + $0x3c8] sm:$0xff]
        %v3029 = vld [vmem:[#allocation3 + $0x3d0] sm:$0xff]
        %v3030 = vld [vmem:[#allocation3 + $0x3d8] sm:$0xff]
        %v3031 = vld [vmem:[#allocation3 + $0x3e0] sm:$0xff]
        %v3032 = vld [vmem:[#allocation3 + $0x3e8] sm:$0xff]
        %v3033 = vld [vmem:[#allocation3 + $0x3f0] sm:$0xff]
        %v3034 = vld [vmem:[#allocation3 + $0x3f8] sm:$0xff]
        %v3035 = vld [vmem:[#allocation3 + $0x400] sm:$0xff]
        %v3036 = vld [vmem:[#allocation3 + $0x408] sm:$0xff]
        %v3037 = vld [vmem:[#allocation3 + $0x410] sm:$0xff]
        %v3038 = vld [vmem:[#allocation3 + $0x418] sm:$0xff]
        %v3039 = vld [vmem:[#allocation3 + $0x420] sm:$0xff]
        %v3040 = vld [vmem:[#allocation3 + $0x428] sm:$0xff]
        %v3041 = vld [vmem:[#allocation3 + $0x430] sm:$0xff]
        %v3042 = vld [vmem:[#allocation3 + $0x438] sm:$0xff]
        %v3043 = vld [vmem:[#allocation3 + $0x440] sm:$0xff]
        %v3044 = vld [vmem:[#allocation3 + $0x448] sm:$0xff]
        %v3045 = vld [vmem:[#allocation3 + $0x450] sm:$0xff]
        %v3046 = vld [vmem:[#allocation3 + $0x458] sm:$0xff]
        %v3047 = vld [vmem:[#allocation3 + $0x460] sm:$0xff]
        %v3048 = vld [vmem:[#allocation3 + $0x468] sm:$0xff]
        %v3049 = vld [vmem:[#allocation3 + $0x470] sm:$0xff]
        %v3050 = vld [vmem:[#allocation3 + $0x478] sm:$0xff]
        %v3051 = vld [vmem:[#allocation3 + $0x480] sm:$0xff]
        %v3052 = vld [vmem:[#allocation3 + $0x488] sm:$0xff]
        %v3053 = vld [vmem:[#allocation3 + $0x490] sm:$0xff]
        %v3054 = vld [vmem:[#allocation3 + $0x498] sm:$0xff]
        %v3055 = vld [vmem:[#allocation3 + $0x4a0] sm:$0xff]
        %v3056 = vld [vmem:[#allocation3 + $0x4a8] sm:$0xff]
        %v3057 = vld [vmem:[#allocation3 + $0x4b0] sm:$0xff]
        %v3058 = vld [vmem:[#allocation3 + $0x4b8] sm:$0xff]
        %v3059 = vld [vmem:[#allocation3 + $0x4c0] sm:$0xff]
        %v3060 = vld [vmem:[#allocation3 + $0x4c8] sm:$0xff]
        %v3061 = vld [vmem:[#allocation3 + $0x4d0] sm:$0xff]
        %v3062 = vld [vmem:[#allocation3 + $0x4d8] sm:$0xff]
        %v3063 = vld [vmem:[#allocation3 + $0x4e0] sm:$0xff]
        %v3064 = vld [vmem:[#allocation3 + $0x4e8] sm:$0xff]
        %v3065 = vld [vmem:[#allocation3 + $0x4f0] sm:$0xff]
        %v3066 = vld [vmem:[#allocation3 + $0x4f8] sm:$0xff]
        %v3067 = vld [vmem:[#allocation3 + $0x500] sm:$0xff]
        %v3068 = vld [vmem:[#allocation3 + $0x508] sm:$0xff]
        %v3069 = vld [vmem:[#allocation3 + $0x510] sm:$0xff]
        %v3070 = vld [vmem:[#allocation3 + $0x518] sm:$0xff]
        %v3071 = vld [vmem:[#allocation3 + $0x520] sm:$0xff]
        %v3072 = vld [vmem:[#allocation3 + $0x528] sm:$0xff]
        %v3073 = vld [vmem:[#allocation3 + $0x530] sm:$0xff]
        %v3074 = vld [vmem:[#allocation3 + $0x538] sm:$0xff]
        %v3075 = vld [vmem:[#allocation3 + $0x540] sm:$0xff]
        %v3076 = vld [vmem:[#allocation3 + $0x548] sm:$0xff]
        %v3077 = vld [vmem:[#allocation3 + $0x550] sm:$0xff]
        %v3078 = vld [vmem:[#allocation3 + $0x558] sm:$0xff]
        %v3079 = vld [vmem:[#allocation3 + $0x560] sm:$0xff]
        %v3080 = vld [vmem:[#allocation3 + $0x568] sm:$0xff]
        %v3081 = vld [vmem:[#allocation3 + $0x570] sm:$0xff]
        %v3082 = vld [vmem:[#allocation3 + $0x578] sm:$0xff]
        %v3083 = vld [vmem:[#allocation3 + $0x580] sm:$0xff]
        %v3084 = vld [vmem:[#allocation3 + $0x588] sm:$0xff]
        %v3085 = vld [vmem:[#allocation3 + $0x590] sm:$0xff]
        %v3086 = vld [vmem:[#allocation3 + $0x598] sm:$0xff]
        %v3087 = vld [vmem:[#allocation3 + $0x5a0] sm:$0xff]
        %v3088 = vld [vmem:[#allocation3 + $0x5a8] sm:$0xff]
        %v3089 = vld [vmem:[#allocation3 + $0x5b0] sm:$0xff]
        %v3090 = vld [vmem:[#allocation3 + $0x5b8] sm:$0xff]
        %v3091 = vld [vmem:[#allocation3 + $0x5c0] sm:$0xff]
        %v3092 = vld [vmem:[#allocation3 + $0x5c8] sm:$0xff]
        %v3093 = vld [vmem:[#allocation3 + $0x5d0] sm:$0xff]
        %v3094 = vld [vmem:[#allocation3 + $0x5d8] sm:$0xff]
        %v3095 = vld [vmem:[#allocation3 + $0x5e0] sm:$0xff]
        %v3096 = vld [vmem:[#allocation3 + $0x5e8] sm:$0xff]
        %v3097 = vld [vmem:[#allocation3 + $0x5f0] sm:$0xff]
        %v3098 = vld [vmem:[#allocation3 + $0x5f8] sm:$0xff]
        %v3099 = vld [vmem:[#allocation3 + $0x600] sm:$0xff]
        %v3100 = vld [vmem:[#allocation3 + $0x608] sm:$0xff]
        %v3101 = vld [vmem:[#allocation3 + $0x610] sm:$0xff]
        %v3102 = vld [vmem:[#allocation3 + $0x618] sm:$0xff]
        %v3103 = vld [vmem:[#allocation3 + $0x620] sm:$0xff]
        %v3104 = vld [vmem:[#allocation3 + $0x628] sm:$0xff]
        %v3105 = vld [vmem:[#allocation3 + $0x630] sm:$0xff]
        %v3106 = vld [vmem:[#allocation3 + $0x638] sm:$0xff]
        %v3107 = vld [vmem:[#allocation3 + $0x640] sm:$0xff]
        %v3108 = vld [vmem:[#allocation3 + $0x648] sm:$0xff]
        %v3109 = vld [vmem:[#allocation3 + $0x650] sm:$0xff]
        %v3110 = vld [vmem:[#allocation3 + $0x658] sm:$0xff]
        %v3111 = vld [vmem:[#allocation3 + $0x660] sm:$0xff]
        %v3112 = vld [vmem:[#allocation3 + $0x668] sm:$0xff]
        %v3113 = vld [vmem:[#allocation3 + $0x670] sm:$0xff]
        %v3114 = vld [vmem:[#allocation3 + $0x678] sm:$0xff]
        %v3115 = vld [vmem:[#allocation3 + $0x680] sm:$0xff]
        %v3116 = vld [vmem:[#allocation3 + $0x688] sm:$0xff]
        %v3117 = vld [vmem:[#allocation3 + $0x690] sm:$0xff]
        %v3118 = vld [vmem:[#allocation3 + $0x698] sm:$0xff]
        %v3119 = vld [vmem:[#allocation3 + $0x6a0] sm:$0xff]
        %v3120 = vld [vmem:[#allocation3 + $0x6a8] sm:$0xff]
        %v3121 = vld [vmem:[#allocation3 + $0x6b0] sm:$0xff]
        %v3122 = vld [vmem:[#allocation3 + $0x6b8] sm:$0xff]
        %v3123 = vld [vmem:[#allocation3 + $0x6c0] sm:$0xff]
        %v3124 = vld [vmem:[#allocation3 + $0x6c8] sm:$0xff]
        %v3125 = vld [vmem:[#allocation3 + $0x6d0] sm:$0xff]
        %v3126 = vld [vmem:[#allocation3 + $0x6d8] sm:$0xff]
        %v3127 = vld [vmem:[#allocation3 + $0x6e0] sm:$0xff]
        %v3128 = vld [vmem:[#allocation3 + $0x6e8] sm:$0xff]
        %v3129 = vld [vmem:[#allocation3 + $0x6f0] sm:$0xff]
        %v3130 = vld [vmem:[#allocation3 + $0x6f8] sm:$0xff]
        %v3131 = vld [vmem:[#allocation3 + $0x700] sm:$0xff]
        %v3132 = vld [vmem:[#allocation3 + $0x708] sm:$0xff]
        %v3133 = vld [vmem:[#allocation3 + $0x710] sm:$0xff]
        %v3134 = vld [vmem:[#allocation3 + $0x718] sm:$0xff]
        %v3135 = vld [vmem:[#allocation3 + $0x720] sm:$0xff]
        %v3136 = vld [vmem:[#allocation3 + $0x728] sm:$0xff]
        %v3137 = vld [vmem:[#allocation3 + $0x730] sm:$0xff]
        %v3138 = vld [vmem:[#allocation3 + $0x738] sm:$0xff]
        %v3139 = vld [vmem:[#allocation3 + $0x740] sm:$0xff]
        %v3140 = vld [vmem:[#allocation3 + $0x748] sm:$0xff]
        %v3141 = vld [vmem:[#allocation3 + $0x750] sm:$0xff]
        %v3142 = vld [vmem:[#allocation3 + $0x758] sm:$0xff]
        %v3143 = vld [vmem:[#allocation3 + $0x760] sm:$0xff]
        %v3144 = vld [vmem:[#allocation3 + $0x768] sm:$0xff]
        %v3145 = vld [vmem:[#allocation3 + $0x770] sm:$0xff]
        %v3146 = vld [vmem:[#allocation3 + $0x778] sm:$0xff]
        %v3147 = vld [vmem:[#allocation3 + $0x780] sm:$0xff]
        %v3148 = vld [vmem:[#allocation3 + $0x788] sm:$0xff]
        %v3149 = vld [vmem:[#allocation3 + $0x790] sm:$0xff]
        %v3150 = vld [vmem:[#allocation3 + $0x798] sm:$0xff]
        %v3151 = vld [vmem:[#allocation3 + $0x7a0] sm:$0xff]
        %v3152 = vld [vmem:[#allocation3 + $0x7a8] sm:$0xff]
        %v3153 = vld [vmem:[#allocation3 + $0x7b0] sm:$0xff]
        %v3154 = vld [vmem:[#allocation3 + $0x7b8] sm:$0xff]
        %v3155 = vld [vmem:[#allocation3 + $0x7c0] sm:$0xff]
        %v3156 = vld [vmem:[#allocation3 + $0x7c8] sm:$0xff]
        %v3157 = vld [vmem:[#allocation3 + $0x7d0] sm:$0xff]
        %v3158 = vld [vmem:[#allocation3 + $0x7d8] sm:$0xff]
        %v3159 = vld [vmem:[#allocation3 + $0x7e0] sm:$0xff]
        %v3160 = vld [vmem:[#allocation3 + $0x7e8] sm:$0xff]
        %v3161 = vld [vmem:[#allocation3 + $0x7f0] sm:$0xff]
        %v3162 = vld [vmem:[#allocation3 + $0x7f8] sm:$0xff]
        %v3163 = vld [vmem:[#allocation3 + $0x800] sm:$0xff]
        %v3164 = vld [vmem:[#allocation3 + $0x808] sm:$0xff]
        %v3165 = vld [vmem:[#allocation3 + $0x810] sm:$0xff]
        %v3166 = vld [vmem:[#allocation3 + $0x818] sm:$0xff]
        %v3167 = vld [vmem:[#allocation3 + $0x820] sm:$0xff]
        %v3168 = vld [vmem:[#allocation3 + $0x828] sm:$0xff]
        %v3169 = vld [vmem:[#allocation3 + $0x830] sm:$0xff]
        %v3170 = vld [vmem:[#allocation3 + $0x838] sm:$0xff]
        %v3171 = vld [vmem:[#allocation3 + $0x840] sm:$0xff]
        %v3172 = vld [vmem:[#allocation3 + $0x848] sm:$0xff]
        %v3173 = vld [vmem:[#allocation3 + $0x850] sm:$0xff]
        %v3174 = vld [vmem:[#allocation3 + $0x858] sm:$0xff]
        %v3175 = vld [vmem:[#allocation3 + $0x860] sm:$0xff]
        %v3176 = vld [vmem:[#allocation3 + $0x868] sm:$0xff]
        %v3177 = vld [vmem:[#allocation3 + $0x870] sm:$0xff]
        %v3178 = vld [vmem:[#allocation3 + $0x878] sm:$0xff]
        %v3179 = vld [vmem:[#allocation3 + $0x880] sm:$0xff]
        %v3180 = vld [vmem:[#allocation3 + $0x888] sm:$0xff]
        %v3181 = vld [vmem:[#allocation3 + $0x890] sm:$0xff]
        %v3182 = vld [vmem:[#allocation3 + $0x898] sm:$0xff]
        %v3183 = vld [vmem:[#allocation3 + $0x8a0] sm:$0xff]
        %v3184 = vld [vmem:[#allocation3 + $0x8a8] sm:$0xff]
        %v3185 = vld [vmem:[#allocation3 + $0x8b0] sm:$0xff]
        %v3186 = vld [vmem:[#allocation3 + $0x8b8] sm:$0xff]
        %v3187 = vld [vmem:[#allocation3 + $0x8c0] sm:$0xff]
        %v3188 = vld [vmem:[#allocation3 + $0x8c8] sm:$0xff]
        %v3189 = vld [vmem:[#allocation3 + $0x8d0] sm:$0xff]
        %v3190 = vld [vmem:[#allocation3 + $0x8d8] sm:$0xff]
        %v3191 = vld [vmem:[#allocation3 + $0x8e0] sm:$0xff]
        %v3192 = vld [vmem:[#allocation3 + $0x8e8] sm:$0xff]
        %v3193 = vld [vmem:[#allocation3 + $0x8f0] sm:$0xff]
        %v3194 = vld [vmem:[#allocation3 + $0x8f8] sm:$0xff]
        %v3195 = vld [vmem:[#allocation9] sm:$0xff]
        %v3196 = vld [vmem:[#allocation9 + $0x8] sm:$0xff]
        %v3197 = vld [vmem:[#allocation9 + $0x10] sm:$0xff]
        %v3198 = vld [vmem:[#allocation9 + $0x18] sm:$0xff]
        %v3199 = vld [vmem:[#allocation9 + $0x20] sm:$0xff]
        %v3200 = vld [vmem:[#allocation9 + $0x28] sm:$0xff]
        %v3201 = vld [vmem:[#allocation9 + $0x30] sm:$0xff]
        %v3202 = vld [vmem:[#allocation9 + $0x38] sm:$0xff]
        %v3203 = vld [vmem:[#allocation9 + $0x40] sm:$0xff]
        %v3204 = vld [vmem:[#allocation9 + $0x48] sm:$0xff]
        %v3205 = vld [vmem:[#allocation9 + $0x50] sm:$0xff]
        %v3206 = vld [vmem:[#allocation9 + $0x58] sm:$0xff]
        %v3207 = vld [vmem:[#allocation9 + $0x60] sm:$0xff]
        %v3208 = vld [vmem:[#allocation9 + $0x68] sm:$0xff]
        %v3209 = vld [vmem:[#allocation9 + $0x70] sm:$0xff]
        %v3210 = vld [vmem:[#allocation9 + $0x78] sm:$0xff]
        %v3211 = vld [vmem:[#allocation9 + $0x80] sm:$0xff]
        %v3212 = vld [vmem:[#allocation9 + $0x88] sm:$0xff]
        %v3213 = vld [vmem:[#allocation9 + $0x90] sm:$0xff]
        %v3214 = vld [vmem:[#allocation9 + $0x98] sm:$0xff]
        %v3215 = vld [vmem:[#allocation9 + $0xa0] sm:$0xff]
        %v3216 = vld [vmem:[#allocation9 + $0xa8] sm:$0xff]
        %v3217 = vld [vmem:[#allocation9 + $0xb0] sm:$0xff]
        %v3218 = vld [vmem:[#allocation9 + $0xb8] sm:$0xff]
        %v3219 = vld [vmem:[#allocation9 + $0xc0] sm:$0xff]
        %v3220 = vld [vmem:[#allocation9 + $0xc8] sm:$0xff]
        %v3221 = vld [vmem:[#allocation9 + $0xd0] sm:$0xff]
        %v3222 = vld [vmem:[#allocation9 + $0xd8] sm:$0xff]
        %v3223 = vld [vmem:[#allocation9 + $0xe0] sm:$0xff]
        %v3224 = vld [vmem:[#allocation9 + $0xe8] sm:$0xff]
        %v3225 = vld [vmem:[#allocation9 + $0xf0] sm:$0xff]
        %v3226 = vld [vmem:[#allocation9 + $0xf8] sm:$0xff]
        %v3227 = vld [vmem:[#allocation9 + $0x100] sm:$0xff]
        %v3228 = vld [vmem:[#allocation9 + $0x108] sm:$0xff]
        %v3229 = vld [vmem:[#allocation9 + $0x110] sm:$0xff]
        %v3230 = vld [vmem:[#allocation9 + $0x118] sm:$0xff]
        %v3231 = vld [vmem:[#allocation9 + $0x120] sm:$0xff]
        %v3232 = vld [vmem:[#allocation9 + $0x128] sm:$0xff]
        %v3233 = vld [vmem:[#allocation9 + $0x130] sm:$0xff]
        %v3234 = vld [vmem:[#allocation9 + $0x138] sm:$0xff]
        %v3235 = vld [vmem:[#allocation9 + $0x140] sm:$0xff]
        %v3236 = vld [vmem:[#allocation9 + $0x148] sm:$0xff]
        %v3237 = vld [vmem:[#allocation9 + $0x150] sm:$0xff]
        %v3238 = vld [vmem:[#allocation9 + $0x158] sm:$0xff]
        %v3239 = vld [vmem:[#allocation9 + $0x160] sm:$0xff]
        %v3240 = vld [vmem:[#allocation9 + $0x168] sm:$0xff]
        %v3241 = vld [vmem:[#allocation9 + $0x170] sm:$0xff]
        %v3242 = vld [vmem:[#allocation9 + $0x178] sm:$0xff]
        %v3243 = vld [vmem:[#allocation9 + $0x180] sm:$0xff]
        %v3244 = vld [vmem:[#allocation9 + $0x188] sm:$0xff]
        %v3245 = vld [vmem:[#allocation9 + $0x190] sm:$0xff]
        %v3246 = vld [vmem:[#allocation9 + $0x198] sm:$0xff]
        %v3247 = vld [vmem:[#allocation9 + $0x1a0] sm:$0xff]
        %v3248 = vld [vmem:[#allocation9 + $0x1a8] sm:$0xff]
        %v3249 = vld [vmem:[#allocation9 + $0x1b0] sm:$0xff]
        %v3250 = vld [vmem:[#allocation9 + $0x1b8] sm:$0xff]
        %v3251 = vld [vmem:[#allocation9 + $0x1c0] sm:$0xff]
        %v3252 = vld [vmem:[#allocation9 + $0x1c8] sm:$0xff]
        %v3253 = vld [vmem:[#allocation9 + $0x1d0] sm:$0xff]
        %v3254 = vld [vmem:[#allocation9 + $0x1d8] sm:$0xff]
        %v3255 = vld [vmem:[#allocation9 + $0x1e0] sm:$0xff]
        %v3256 = vld [vmem:[#allocation9 + $0x1e8] sm:$0xff]
        %v3257 = vld [vmem:[#allocation9 + $0x1f0] sm:$0xff]
        %v3258 = vld [vmem:[#allocation9 + $0x1f8] sm:$0xff]
        %v3259 = vld [vmem:[#allocation9 + $0x200] sm:$0xff]
        %v3260 = vld [vmem:[#allocation9 + $0x208] sm:$0xff]
        %v3261 = vld [vmem:[#allocation9 + $0x210] sm:$0xff]
        %v3262 = vld [vmem:[#allocation9 + $0x218] sm:$0xff]
        %v3263 = vld [vmem:[#allocation9 + $0x220] sm:$0xff]
        %v3264 = vld [vmem:[#allocation9 + $0x228] sm:$0xff]
        %v3265 = vld [vmem:[#allocation9 + $0x230] sm:$0xff]
        %v3266 = vld [vmem:[#allocation9 + $0x238] sm:$0xff]
        %v3267 = vld [vmem:[#allocation9 + $0x240] sm:$0xff]
        %v3268 = vld [vmem:[#allocation9 + $0x248] sm:$0xff]
        %v3269 = vld [vmem:[#allocation9 + $0x250] sm:$0xff]
        %v3270 = vld [vmem:[#allocation9 + $0x258] sm:$0xff]
        %v3271 = vld [vmem:[#allocation9 + $0x260] sm:$0xff]
        %v3272 = vld [vmem:[#allocation9 + $0x268] sm:$0xff]
        %v3273 = vld [vmem:[#allocation9 + $0x270] sm:$0xff]
        %v3274 = vld [vmem:[#allocation9 + $0x278] sm:$0xff]
        %v3275 = vld [vmem:[#allocation9 + $0x280] sm:$0xff]
        %v3276 = vld [vmem:[#allocation9 + $0x288] sm:$0xff]
        %v3277 = vld [vmem:[#allocation9 + $0x290] sm:$0xff]
        %v3278 = vld [vmem:[#allocation9 + $0x298] sm:$0xff]
        %v3279 = vld [vmem:[#allocation9 + $0x2a0] sm:$0xff]
        %v3280 = vld [vmem:[#allocation9 + $0x2a8] sm:$0xff]
        %v3281 = vld [vmem:[#allocation9 + $0x2b0] sm:$0xff]
        %v3282 = vld [vmem:[#allocation9 + $0x2b8] sm:$0xff]
        %v3283 = vld [vmem:[#allocation9 + $0x2c0] sm:$0xff]
        %v3284 = vld [vmem:[#allocation9 + $0x2c8] sm:$0xff]
        %v3285 = vld [vmem:[#allocation9 + $0x2d0] sm:$0xff]
        %v3286 = vld [vmem:[#allocation9 + $0x2d8] sm:$0xff]
        %v3287 = vld [vmem:[#allocation9 + $0x2e0] sm:$0xff]
        %v3288 = vld [vmem:[#allocation9 + $0x2e8] sm:$0xff]
        %v3289 = vld [vmem:[#allocation9 + $0x2f0] sm:$0xff]
        %v3290 = vld [vmem:[#allocation9 + $0x2f8] sm:$0xff]
        %v3291 = vld [vmem:[#allocation9 + $0x300] sm:$0xff]
        %v3292 = vld [vmem:[#allocation9 + $0x308] sm:$0xff]
        %v3293 = vld [vmem:[#allocation9 + $0x310] sm:$0xff]
        %v3294 = vld [vmem:[#allocation9 + $0x318] sm:$0xff]
        %v3295 = vld [vmem:[#allocation9 + $0x320] sm:$0xff]
        %v3296 = vld [vmem:[#allocation9 + $0x328] sm:$0xff]
        %v3297 = vld [vmem:[#allocation9 + $0x330] sm:$0xff]
        %v3298 = vld [vmem:[#allocation9 + $0x338] sm:$0xff]
        %v3299 = vld [vmem:[#allocation9 + $0x340] sm:$0xff]
        %v3300 = vld [vmem:[#allocation9 + $0x348] sm:$0xff]
        %v3301 = vld [vmem:[#allocation9 + $0x350] sm:$0xff]
        %v3302 = vld [vmem:[#allocation9 + $0x358] sm:$0xff]
        %v3303 = vld [vmem:[#allocation9 + $0x360] sm:$0xff]
        %v3304 = vld [vmem:[#allocation9 + $0x368] sm:$0xff]
        %v3305 = vld [vmem:[#allocation9 + $0x370] sm:$0xff]
        %v3306 = vld [vmem:[#allocation9 + $0x378] sm:$0xff]
        %v3307 = vld [vmem:[#allocation9 + $0x380] sm:$0xff]
        %v3308 = vld [vmem:[#allocation9 + $0x388] sm:$0xff]
        %v3309 = vld [vmem:[#allocation9 + $0x390] sm:$0xff]
        %v3310 = vld [vmem:[#allocation9 + $0x398] sm:$0xff]
        %v3311 = vld [vmem:[#allocation9 + $0x3a0] sm:$0xff]
        %v3312 = vld [vmem:[#allocation9 + $0x3a8] sm:$0xff]
        %v3313 = vld [vmem:[#allocation9 + $0x3b0] sm:$0xff]
        %v3314 = vld [vmem:[#allocation9 + $0x3b8] sm:$0xff]
        %v3315 = vld [vmem:[#allocation9 + $0x3c0] sm:$0xff]
        %v3316 = vld [vmem:[#allocation9 + $0x3c8] sm:$0xff]
        %v3317 = vld [vmem:[#allocation9 + $0x3d0] sm:$0xff]
        %v3318 = vld [vmem:[#allocation9 + $0x3d8] sm:$0xff]
        %v3319 = vld [vmem:[#allocation9 + $0x3e0] sm:$0xff]
        %v3320 = vld [vmem:[#allocation9 + $0x3e8] sm:$0xff]
        %v3321 = vld [vmem:[#allocation9 + $0x3f0] sm:$0xff]
        %v3322 = vld [vmem:[#allocation9 + $0x3f8] sm:$0xff]
        %v3323 = vld [vmem:[#allocation9 + $0x400] sm:$0xff]
        %v3324 = vld [vmem:[#allocation9 + $0x408] sm:$0xff]
        %v3325 = vld [vmem:[#allocation9 + $0x410] sm:$0xff]
        %v3326 = vld [vmem:[#allocation9 + $0x418] sm:$0xff]
        %v3327 = vld [vmem:[#allocation9 + $0x420] sm:$0xff]
        %v3328 = vld [vmem:[#allocation9 + $0x428] sm:$0xff]
        %v3329 = vld [vmem:[#allocation9 + $0x430] sm:$0xff]
        %v3330 = vld [vmem:[#allocation9 + $0x438] sm:$0xff]
        %v3331 = vld [vmem:[#allocation9 + $0x440] sm:$0xff]
        %v3332 = vld [vmem:[#allocation9 + $0x448] sm:$0xff]
        %v3333 = vld [vmem:[#allocation9 + $0x450] sm:$0xff]
        %v3334 = vld [vmem:[#allocation9 + $0x458] sm:$0xff]
        %v3335 = vld [vmem:[#allocation9 + $0x460] sm:$0xff]
        %v3336 = vld [vmem:[#allocation9 + $0x468] sm:$0xff]
        %v3337 = vld [vmem:[#allocation9 + $0x470] sm:$0xff]
        %v3338 = vld [vmem:[#allocation9 + $0x478] sm:$0xff]
        %v3339 = vlaneseq
        %v3340 = vshrl.u32 %v3339, 7
        %v3341 = vsub.s32 4, %v3340
        %v3342 = vrot.slane %v245, %v3341
        %3343 = vmatprep.subr.mxu0 0.0
        %3344 = vmatpush1.msra.mxu0 %v3195
        %3345 = vmatprep.subr.mxu0 0.0
        %3346 = vmatpush1.msra.mxu0 %v3196
        %3347 = vmatprep.subr.mxu0 0.0
        %3348 = vmatpush1.msra.mxu0 %v3197
        %3349 = vmatprep.subr.mxu0 0.0
        %3350 = vmatpush1.msra.mxu0 %v3198
        %3351 = vmatprep.subr.mxu0 0.0
        %3352 = vmatpush1.msra.mxu0 %v3199
        %3353 = vmatprep.subr.mxu0 0.0
        %3354 = vmatpush1.msra.mxu0 %v3200
        %3355 = vmatprep.subr.mxu0 0.0
        %3356 = vmatpush1.msra.mxu0 %v3201
        %3357 = vmatprep.subr.mxu0 0.0
        %3358 = vmatpush1.msra.mxu0 %v3202
        %3359 = vmatprep.subr.mxu0 0.0
        %3360 = vmatpush1.msra.mxu0 %v3203
        %3361 = vmatprep.subr.mxu0 0.0
        %3362 = vmatpush1.msra.mxu0 %v3204
        %3363 = vmatprep.subr.mxu0 0.0
        %3364 = vmatpush1.msra.mxu0 %v3205
        %3365 = vmatprep.subr.mxu0 0.0
        %3366 = vmatpush1.msra.mxu0 %v3206
        %3367 = vmatprep.subr.mxu0 0.0
        %3368 = vmatpush1.msra.mxu0 %v3207
        %3369 = vmatprep.subr.mxu0 0.0
        %3370 = vmatpush1.msra.mxu0 %v3208
        %3371 = vmatprep.subr.mxu0 0.0
        %3372 = vmatpush1.msra.mxu0 %v3209
        %3373 = vmatprep.subr.mxu0 0.0
        %3374 = vmatpush1.msra.mxu0 %v3210
        %3375 = vmatprep.subr.mxu0 0.0
        %3376 = vmatpush1.msra.mxu0 %v3211
        %3377 = vmatprep.subr.mxu0 0.0
        %3378 = vmatpush1.msra.mxu0 %v3212
        %3379 = vmatprep.subr.mxu0 0.0
        %3380 = vmatpush1.msra.mxu0 %v3213
        %3381 = vmatprep.subr.mxu0 0.0
        %3382 = vmatpush1.msra.mxu0 %v3214
        %3383 = vmatprep.subr.mxu0 0.0
        %3384 = vmatpush1.msra.mxu0 %v3215
        %3385 = vmatprep.subr.mxu0 0.0
        %3386 = vmatpush1.msra.mxu0 %v3216
        %3387 = vmatprep.subr.mxu0 0.0
        %3388 = vmatpush1.msra.mxu0 %v3217
        %3389 = vmatprep.subr.mxu0 0.0
        %3390 = vmatpush1.msra.mxu0 %v3218
        %3391 = vmatprep.subr.mxu0 0.0
        %3392 = vmatpush1.msra.mxu0 %v3219
        %3393 = vmatprep.subr.mxu0 0.0
        %3394 = vmatpush1.msra.mxu0 %v3220
        %3395 = vmatprep.subr.mxu0 0.0
        %3396 = vmatpush1.msra.mxu0 %v3221
        %3397 = vmatprep.subr.mxu0 0.0
        %3398 = vmatpush1.msra.mxu0 %v3222
        %3399 = vmatprep.subr.mxu0 0.0
        %3400 = vmatpush1.msra.mxu0 %v3223
        %3401 = vmatprep.subr.mxu0 0.0
        %3402 = vmatpush1.msra.mxu0 %v3224
        %3403 = vmatprep.subr.mxu0 0.0
        %3404 = vmatpush1.msra.mxu0 %v3225
        %3405 = vmatprep.subr.mxu0 0.0
        %3406 = vmatpush1.msra.mxu0 %v3226
        %3407 = vmatprep.mubr.f32.mxu0 %v2908
        %3408 = vmatmul.mubr.f32.gmra.mrb[0].mxu0 %v2907
        %v3409 = vpop.f32.mrb[0].mxu0
        %v3410 = vadd.f32 %v3342, %v3409
        %v3411 = vpop.f32.mrb[0].mxu0
        %3412 = vmatprep.mubr.f32.mxu0 %v2917
        %3413 = vmatmul.mubr.f32.gmra.mrb[0].mxu0 %v2916
        %v3414 = vpop.f32.mrb[0].mxu0
        %v3415 = vadd.f32 %v3342, %v3414
        %v3416 = vpop.f32.mrb[0].mxu0
        %3417 = vmatprep.mubr.f32.mxu0 %v2926
        %3418 = vmatmul.mubr.f32.gmra.mrb[0].mxu0 %v2925
        %v3419 = vpop.f32.mrb[0].mxu0
        %v3420 = vadd.f32 %v3342, %v3419
        %v3421 = vpop.f32.mrb[0].mxu0
        %3422 = vmatprep.mubr.f32.mxu0 %v2935
        %3423 = vmatmul.mubr.f32.gmra.mrb[0].mxu0 %v2934
        %v3424 = vpop.f32.mrb[0].mxu0
        %v3425 = vadd.f32 %v3342, %v3424
        %v3426 = vpop.f32.mrb[0].mxu0
        %3427 = vmatprep.mubr.f32.mxu0 %v2944
        %3428 = vmatmul.mubr.f32.gmra.mrb[0].mxu0 %v2943
        %v3429 = vpop.f32.mrb[0].mxu0
        %v3430 = vadd.f32 %v3342, %v3429
        %v3431 = vpop.f32.mrb[0].mxu0
        %3432 = vmatprep.mubr.f32.mxu0 %v2953
        %3433 = vmatmul.mubr.f32.gmra.mrb[0].mxu0 %v2952
        %v3434 = vpop.f32.mrb[0].mxu0
        %v3435 = vadd.f32 %v3342, %v3434
        %v3436 = vpop.f32.mrb[0].mxu0
        %3437 = vmatprep.mubr.f32.mxu0 %v2962
        %3438 = vmatmul.mubr.f32.gmra.mrb[0].mxu0 %v2961
        %v3439 = vpop.f32.mrb[0].mxu0
        %v3440 = vadd.f32 %v3342, %v3439
        %v3441 = vpop.f32.mrb[0].mxu0
        %3442 = vmatprep.mubr.f32.mxu0 %v2971
        %3443 = vmatmul.mubr.f32.gmra.mrb[0].mxu0 %v2970
        %v3444 = vpop.f32.mrb[0].mxu0
        %v3445 = vadd.f32 %v3342, %v3444
        %v3446 = vpop.f32.mrb[0].mxu0
        %3447 = vmatprep.mubr.f32.mxu0 %v2980
        %3448 = vmatmul.mubr.f32.gmra.mrb[0].mxu0 %v2979
        %v3449 = vpop.f32.mrb[0].mxu0
        %v3450 = vadd.f32 %v3342, %v3449
        %v3451 = vpop.f32.mrb[0].mxu0
        %3452 = vmatprep.mubr.f32.mxu0 %v2989
        %3453 = vmatmul.mubr.f32.gmra.mrb[0].mxu0 %v2988
        %v3454 = vpop.f32.mrb[0].mxu0
        %v3455 = vadd.f32 %v3342, %v3454
        %v3456 = vpop.f32.mrb[0].mxu0
        %3457 = vmatprep.mubr.f32.mxu0 %v2998
        %3458 = vmatmul.mubr.f32.gmra.mrb[0].mxu0 %v2997
        %v3459 = vpop.f32.mrb[0].mxu0
        %v3460 = vadd.f32 %v3342, %v3459
        %v3461 = vpop.f32.mrb[0].mxu0
        %3462 = vmatprep.mubr.f32.mxu0 %v3007
        %3463 = vmatmul.mubr.f32.gmra.mrb[0].mxu0 %v3006
        %v3464 = vpop.f32.mrb[0].mxu0
        %v3465 = vadd.f32 %v3342, %v3464
        %v3466 = vpop.f32.mrb[0].mxu0
        %3467 = vmatprep.mubr.f32.mxu0 %v3016
        %3468 = vmatmul.mubr.f32.gmra.mrb[0].mxu0 %v3015
        %v3469 = vpop.f32.mrb[0].mxu0
        %v3470 = vadd.f32 %v3342, %v3469
        %v3471 = vpop.f32.mrb[0].mxu0
        %3472 = vmatprep.mubr.f32.mxu0 %v3025
        %3473 = vmatmul.mubr.f32.gmra.mrb[0].mxu0 %v3024
        %v3474 = vpop.f32.mrb[0].mxu0
        %v3475 = vadd.f32 %v3342, %v3474
        %v3476 = vpop.f32.mrb[0].mxu0
        %3477 = vmatprep.mubr.f32.mxu0 %v3034
        %3478 = vmatmul.mubr.f32.gmra.mrb[0].mxu0 %v3033
        %v3479 = vpop.f32.mrb[0].mxu0
        %v3480 = vadd.f32 %v3342, %v3479
        %v3481 = vpop.f32.mrb[0].mxu0
        %3482 = vmatprep.mubr.f32.mxu0 %v3043
        %3483 = vmatmul.mubr.f32.gmra.mrb[0].mxu0 %v3042
        %v3484 = vpop.f32.mrb[0].mxu0
        %v3485 = vadd.f32 %v3342, %v3484
        %v3486 = vpop.f32.mrb[0].mxu0
        %3487 = vmatprep.mubr.f32.mxu0 %v3052
        %3488 = vmatmul.mubr.f32.gmra.mrb[0].mxu0 %v3051
        %v3489 = vpop.f32.mrb[0].mxu0
        %v3490 = vadd.f32 %v3342, %v3489
        %v3491 = vpop.f32.mrb[0].mxu0
        %3492 = vmatprep.mubr.f32.mxu0 %v3061
        %3493 = vmatmul.mubr.f32.gmra.mrb[0].mxu0 %v3060
        %v3494 = vpop.f32.mrb[0].mxu0
        %v3495 = vadd.f32 %v3342, %v3494
        %v3496 = vpop.f32.mrb[0].mxu0
        %3497 = vmatprep.mubr.f32.mxu0 %v3070
        %3498 = vmatmul.mubr.f32.gmra.mrb[0].mxu0 %v3069
        %v3499 = vpop.f32.mrb[0].mxu0
        %v3500 = vadd.f32 %v3342, %v3499
        %v3501 = vpop.f32.mrb[0].mxu0
        %3502 = vmatprep.mubr.f32.mxu0 %v3079
        %3503 = vmatmul.mubr.f32.gmra.mrb[0].mxu0 %v3078
        %v3504 = vpop.f32.mrb[0].mxu0
        %v3505 = vadd.f32 %v3342, %v3504
        %v3506 = vpop.f32.mrb[0].mxu0
        %3507 = vmatprep.mubr.f32.mxu0 %v3088
        %3508 = vmatmul.mubr.f32.gmra.mrb[0].mxu0 %v3087
        %v3509 = vpop.f32.mrb[0].mxu0
        %v3510 = vadd.f32 %v3342, %v3509
        %v3511 = vpop.f32.mrb[0].mxu0
        %3512 = vmatprep.mubr.f32.mxu0 %v3097
        %3513 = vmatmul.mubr.f32.gmra.mrb[0].mxu0 %v3096
        %v3514 = vpop.f32.mrb[0].mxu0
        %v3515 = vadd.f32 %v3342, %v3514
        %v3516 = vpop.f32.mrb[0].mxu0
        %3517 = vmatprep.mubr.f32.mxu0 %v3106
        %3518 = vmatmul.mubr.f32.gmra.mrb[0].mxu0 %v3105
        %v3519 = vpop.f32.mrb[0].mxu0
        %v3520 = vadd.f32 %v3342, %v3519
        %v3521 = vpop.f32.mrb[0].mxu0
        %3522 = vmatprep.mubr.f32.mxu0 %v3115
        %3523 = vmatmul.mubr.f32.gmra.mrb[0].mxu0 %v3114
        %v3524 = vpop.f32.mrb[0].mxu0
        %v3525 = vadd.f32 %v3342, %v3524
        %v3526 = vpop.f32.mrb[0].mxu0
        %3527 = vmatprep.mubr.f32.mxu0 %v3124
        %3528 = vmatmul.mubr.f32.gmra.mrb[0].mxu0 %v3123
        %v3529 = vpop.f32.mrb[0].mxu0
        %v3530 = vadd.f32 %v3342, %v3529
        %v3531 = vpop.f32.mrb[0].mxu0
        %3532 = vmatprep.mubr.f32.mxu0 %v3133
        %3533 = vmatmul.mubr.f32.gmra.mrb[0].mxu0 %v3132
        %v3534 = vpop.f32.mrb[0].mxu0
        %v3535 = vadd.f32 %v3342, %v3534
        %v3536 = vpop.f32.mrb[0].mxu0
        %3537 = vmatprep.mubr.f32.mxu0 %v3142
        %3538 = vmatmul.mubr.f32.gmra.mrb[0].mxu0 %v3141
        %v3539 = vpop.f32.mrb[0].mxu0
        %v3540 = vadd.f32 %v3342, %v3539
        %v3541 = vpop.f32.mrb[0].mxu0
        %3542 = vmatprep.mubr.f32.mxu0 %v3151
        %3543 = vmatmul.mubr.f32.gmra.mrb[0].mxu0 %v3150
        %v3544 = vpop.f32.mrb[0].mxu0
        %v3545 = vadd.f32 %v3342, %v3544
        %v3546 = vpop.f32.mrb[0].mxu0
        %3547 = vmatprep.mubr.f32.mxu0 %v3160
        %3548 = vmatmul.mubr.f32.gmra.mrb[0].mxu0 %v3159
        %v3549 = vpop.f32.mrb[0].mxu0
        %v3550 = vadd.f32 %v3342, %v3549
        %v3551 = vpop.f32.mrb[0].mxu0
        %3552 = vmatprep.mubr.f32.mxu0 %v3169
        %3553 = vmatmul.mubr.f32.gmra.mrb[0].mxu0 %v3168
        %v3554 = vpop.f32.mrb[0].mxu0
        %v3555 = vadd.f32 %v3342, %v3554
        %v3556 = vpop.f32.mrb[0].mxu0
        %3557 = vmatprep.mubr.f32.mxu0 %v3178
        %3558 = vmatmul.mubr.f32.gmra.mrb[0].mxu0 %v3177
        %v3559 = vpop.f32.mrb[0].mxu0
        %v3560 = vadd.f32 %v3342, %v3559
        %v3561 = vpop.f32.mrb[0].mxu0
        %3562 = vmatprep.mubr.f32.mxu0 %v3187
        %3563 = vmatmul.mubr.f32.gmra.mrb[0].mxu0 %v3186
        %v3564 = vpop.f32.mrb[0].mxu0
        %v3565 = vadd.f32 %v3342, %v3564
        %v3566 = vpop.f32.mrb[0].mxu0
        %3567 = vdwg.mxu0
        %3568 = vmatprep.subr.mxu0 0.0
        %3569 = vmatpush1.msra.mxu0 %v3227
        %3570 = vmatprep.subr.mxu0 0.0
        %3571 = vmatpush1.msra.mxu0 %v3228
        %3572 = vmatprep.subr.mxu0 0.0
        %3573 = vmatpush1.msra.mxu0 %v3229
        %3574 = vmatprep.subr.mxu0 0.0
        %3575 = vmatpush1.msra.mxu0 %v3230
        %3576 = vmatprep.subr.mxu0 0.0
        %3577 = vmatpush1.msra.mxu0 %v3231
        %3578 = vmatprep.subr.mxu0 0.0
        %3579 = vmatpush1.msra.mxu0 %v3232
        %3580 = vmatprep.subr.mxu0 0.0
        %3581 = vmatpush1.msra.mxu0 %v3233
        %3582 = vmatprep.subr.mxu0 0.0
        %3583 = vmatpush1.msra.mxu0 %v3234
        %3584 = vmatprep.subr.mxu0 0.0
        %3585 = vmatpush1.msra.mxu0 %v3235
        %3586 = vmatprep.subr.mxu0 0.0
        %3587 = vmatpush1.msra.mxu0 %v3236
        %3588 = vmatprep.subr.mxu0 0.0
        %3589 = vmatpush1.msra.mxu0 %v3237
        %3590 = vmatprep.subr.mxu0 0.0
        %3591 = vmatpush1.msra.mxu0 %v3238
        %3592 = vmatprep.subr.mxu0 0.0
        %3593 = vmatpush1.msra.mxu0 %v3239
        %3594 = vmatprep.subr.mxu0 0.0
        %3595 = vmatpush1.msra.mxu0 %v3240
        %3596 = vmatprep.subr.mxu0 0.0
        %3597 = vmatpush1.msra.mxu0 %v3241
        %3598 = vmatprep.subr.mxu0 0.0
        %3599 = vmatpush1.msra.mxu0 %v3242
        %3600 = vmatprep.subr.mxu0 0.0
        %3601 = vmatpush1.msra.mxu0 %v3243
        %3602 = vmatprep.subr.mxu0 0.0
        %3603 = vmatpush1.msra.mxu0 %v3244
        %3604 = vmatprep.subr.mxu0 0.0
        %3605 = vmatpush1.msra.mxu0 %v3245
        %3606 = vmatprep.subr.mxu0 0.0
        %3607 = vmatpush1.msra.mxu0 %v3246
        %3608 = vmatprep.subr.mxu0 0.0
        %3609 = vmatpush1.msra.mxu0 %v3247
        %3610 = vmatprep.subr.mxu0 0.0
        %3611 = vmatpush1.msra.mxu0 %v3248
        %3612 = vmatprep.subr.mxu0 0.0
        %3613 = vmatpush1.msra.mxu0 %v3249
        %3614 = vmatprep.subr.mxu0 0.0
        %3615 = vmatpush1.msra.mxu0 %v3250
        %3616 = vmatprep.subr.mxu0 0.0
        %3617 = vmatpush1.msra.mxu0 %v3251
        %3618 = vmatprep.subr.mxu0 0.0
        %3619 = vmatpush1.msra.mxu0 %v3252
        %3620 = vmatprep.subr.mxu0 0.0
        %3621 = vmatpush1.msra.mxu0 %v3253
        %3622 = vmatprep.subr.mxu0 0.0
        %3623 = vmatpush1.msra.mxu0 %v3254
        %3624 = vmatprep.subr.mxu0 0.0
        %3625 = vmatpush1.msra.mxu0 %v3255
        %3626 = vmatprep.subr.mxu0 0.0
        %3627 = vmatpush1.msra.mxu0 %v3256
        %3628 = vmatprep.subr.mxu0 0.0
        %3629 = vmatpush1.msra.mxu0 %v3257
        %3630 = vmatprep.subr.mxu0 0.0
        %3631 = vmatpush1.msra.mxu0 %v3258
        %3632 = vmatprep.mubr.f32.mxu0 %v2910
        %3633 = vmatmul.mubr.f32.gmra.mrb[0].mxu0 %v2909
        %v3634 = vpop.f32.mrb[0].mxu0
        %v3635 = vadd.f32 %v3410, %v3634
        %v3636 = vpop.f32.mrb[0].mxu0
        %3637 = vmatprep.mubr.f32.mxu0 %v2919
        %3638 = vmatmul.mubr.f32.gmra.mrb[0].mxu0 %v2918
        %v3639 = vpop.f32.mrb[0].mxu0
        %v3640 = vadd.f32 %v3415, %v3639
        %v3641 = vpop.f32.mrb[0].mxu0
        %3642 = vmatprep.mubr.f32.mxu0 %v2928
        %3643 = vmatmul.mubr.f32.gmra.mrb[0].mxu0 %v2927
        %v3644 = vpop.f32.mrb[0].mxu0
        %v3645 = vadd.f32 %v3420, %v3644
        %v3646 = vpop.f32.mrb[0].mxu0
        %3647 = vmatprep.mubr.f32.mxu0 %v2937
        %3648 = vmatmul.mubr.f32.gmra.mrb[0].mxu0 %v2936
        %v3649 = vpop.f32.mrb[0].mxu0
        %v3650 = vadd.f32 %v3425, %v3649
        %v3651 = vpop.f32.mrb[0].mxu0
        %3652 = vmatprep.mubr.f32.mxu0 %v2946
        %3653 = vmatmul.mubr.f32.gmra.mrb[0].mxu0 %v2945
        %v3654 = vpop.f32.mrb[0].mxu0
        %v3655 = vadd.f32 %v3430, %v3654
        %v3656 = vpop.f32.mrb[0].mxu0
        %3657 = vmatprep.mubr.f32.mxu0 %v2955
        %3658 = vmatmul.mubr.f32.gmra.mrb[0].mxu0 %v2954
        %v3659 = vpop.f32.mrb[0].mxu0
        %v3660 = vadd.f32 %v3435, %v3659
        %v3661 = vpop.f32.mrb[0].mxu0
        %3662 = vmatprep.mubr.f32.mxu0 %v2964
        %3663 = vmatmul.mubr.f32.gmra.mrb[0].mxu0 %v2963
        %v3664 = vpop.f32.mrb[0].mxu0
        %v3665 = vadd.f32 %v3440, %v3664
        %v3666 = vpop.f32.mrb[0].mxu0
        %3667 = vmatprep.mubr.f32.mxu0 %v2973
        %3668 = vmatmul.mubr.f32.gmra.mrb[0].mxu0 %v2972
        %v3669 = vpop.f32.mrb[0].mxu0
        %v3670 = vadd.f32 %v3445, %v3669
        %v3671 = vpop.f32.mrb[0].mxu0
        %3672 = vmatprep.mubr.f32.mxu0 %v2982
        %3673 = vmatmul.mubr.f32.gmra.mrb[0].mxu0 %v2981
        %v3674 = vpop.f32.mrb[0].mxu0
        %v3675 = vadd.f32 %v3450, %v3674
        %v3676 = vpop.f32.mrb[0].mxu0
        %3677 = vmatprep.mubr.f32.mxu0 %v2991
        %3678 = vmatmul.mubr.f32.gmra.mrb[0].mxu0 %v2990
        %v3679 = vpop.f32.mrb[0].mxu0
        %v3680 = vadd.f32 %v3455, %v3679
        %v3681 = vpop.f32.mrb[0].mxu0
        %3682 = vmatprep.mubr.f32.mxu0 %v3000
        %3683 = vmatmul.mubr.f32.gmra.mrb[0].mxu0 %v2999
        %v3684 = vpop.f32.mrb[0].mxu0
        %v3685 = vadd.f32 %v3460, %v3684
        %v3686 = vpop.f32.mrb[0].mxu0
        %3687 = vmatprep.mubr.f32.mxu0 %v3009
        %3688 = vmatmul.mubr.f32.gmra.mrb[0].mxu0 %v3008
        %v3689 = vpop.f32.mrb[0].mxu0
        %v3690 = vadd.f32 %v3465, %v3689
        %v3691 = vpop.f32.mrb[0].mxu0
        %3692 = vmatprep.mubr.f32.mxu0 %v3018
        %3693 = vmatmul.mubr.f32.gmra.mrb[0].mxu0 %v3017
        %v3694 = vpop.f32.mrb[0].mxu0
        %v3695 = vadd.f32 %v3470, %v3694
        %v3696 = vpop.f32.mrb[0].mxu0
        %3697 = vmatprep.mubr.f32.mxu0 %v3027
        %3698 = vmatmul.mubr.f32.gmra.mrb[0].mxu0 %v3026
        %v3699 = vpop.f32.mrb[0].mxu0
        %v3700 = vadd.f32 %v3475, %v3699
        %v3701 = vpop.f32.mrb[0].mxu0
        %3702 = vmatprep.mubr.f32.mxu0 %v3036
        %3703 = vmatmul.mubr.f32.gmra.mrb[0].mxu0 %v3035
        %v3704 = vpop.f32.mrb[0].mxu0
        %v3705 = vadd.f32 %v3480, %v3704
        %v3706 = vpop.f32.mrb[0].mxu0
        %3707 = vmatprep.mubr.f32.mxu0 %v3045
        %3708 = vmatmul.mubr.f32.gmra.mrb[0].mxu0 %v3044
        %v3709 = vpop.f32.mrb[0].mxu0
        %v3710 = vadd.f32 %v3485, %v3709
        %v3711 = vpop.f32.mrb[0].mxu0
        %3712 = vmatprep.mubr.f32.mxu0 %v3054
        %3713 = vmatmul.mubr.f32.gmra.mrb[0].mxu0 %v3053
        %v3714 = vpop.f32.mrb[0].mxu0
        %v3715 = vadd.f32 %v3490, %v3714
        %v3716 = vpop.f32.mrb[0].mxu0
        %3717 = vmatprep.mubr.f32.mxu0 %v3063
        %3718 = vmatmul.mubr.f32.gmra.mrb[0].mxu0 %v3062
        %v3719 = vpop.f32.mrb[0].mxu0
        %v3720 = vadd.f32 %v3495, %v3719
        %v3721 = vpop.f32.mrb[0].mxu0
        %3722 = vmatprep.mubr.f32.mxu0 %v3072
        %3723 = vmatmul.mubr.f32.gmra.mrb[0].mxu0 %v3071
        %v3724 = vpop.f32.mrb[0].mxu0
        %v3725 = vadd.f32 %v3500, %v3724
        %v3726 = vpop.f32.mrb[0].mxu0
        %3727 = vmatprep.mubr.f32.mxu0 %v3081
        %3728 = vmatmul.mubr.f32.gmra.mrb[0].mxu0 %v3080
        %v3729 = vpop.f32.mrb[0].mxu0
        %v3730 = vadd.f32 %v3505, %v3729
        %v3731 = vpop.f32.mrb[0].mxu0
        %3732 = vmatprep.mubr.f32.mxu0 %v3090
        %3733 = vmatmul.mubr.f32.gmra.mrb[0].mxu0 %v3089
        %v3734 = vpop.f32.mrb[0].mxu0
        %v3735 = vadd.f32 %v3510, %v3734
        %v3736 = vpop.f32.mrb[0].mxu0
        %3737 = vmatprep.mubr.f32.mxu0 %v3099
        %3738 = vmatmul.mubr.f32.gmra.mrb[0].mxu0 %v3098
        %v3739 = vpop.f32.mrb[0].mxu0
        %v3740 = vadd.f32 %v3515, %v3739
        %v3741 = vpop.f32.mrb[0].mxu0
        %3742 = vmatprep.mubr.f32.mxu0 %v3108
        %3743 = vmatmul.mubr.f32.gmra.mrb[0].mxu0 %v3107
        %v3744 = vpop.f32.mrb[0].mxu0
        %v3745 = vadd.f32 %v3520, %v3744
        %v3746 = vpop.f32.mrb[0].mxu0
        %3747 = vmatprep.mubr.f32.mxu0 %v3117
        %3748 = vmatmul.mubr.f32.gmra.mrb[0].mxu0 %v3116
        %v3749 = vpop.f32.mrb[0].mxu0
        %v3750 = vadd.f32 %v3525, %v3749
        %v3751 = vpop.f32.mrb[0].mxu0
        %3752 = vmatprep.mubr.f32.mxu0 %v3126
        %3753 = vmatmul.mubr.f32.gmra.mrb[0].mxu0 %v3125
        %v3754 = vpop.f32.mrb[0].mxu0
        %v3755 = vadd.f32 %v3530, %v3754
        %v3756 = vpop.f32.mrb[0].mxu0
        %3757 = vmatprep.mubr.f32.mxu0 %v3135
        %3758 = vmatmul.mubr.f32.gmra.mrb[0].mxu0 %v3134
        %v3759 = vpop.f32.mrb[0].mxu0
        %v3760 = vadd.f32 %v3535, %v3759
        %v3761 = vpop.f32.mrb[0].mxu0
        %3762 = vmatprep.mubr.f32.mxu0 %v3144
        %3763 = vmatmul.mubr.f32.gmra.mrb[0].mxu0 %v3143
        %v3764 = vpop.f32.mrb[0].mxu0
        %v3765 = vadd.f32 %v3540, %v3764
        %v3766 = vpop.f32.mrb[0].mxu0
        %3767 = vmatprep.mubr.f32.mxu0 %v3153
        %3768 = vmatmul.mubr.f32.gmra.mrb[0].mxu0 %v3152
        %v3769 = vpop.f32.mrb[0].mxu0
        %v3770 = vadd.f32 %v3545, %v3769
        %v3771 = vpop.f32.mrb[0].mxu0
        %3772 = vmatprep.mubr.f32.mxu0 %v3162
        %3773 = vmatmul.mubr.f32.gmra.mrb[0].mxu0 %v3161
        %v3774 = vpop.f32.mrb[0].mxu0
        %v3775 = vadd.f32 %v3550, %v3774
        %v3776 = vpop.f32.mrb[0].mxu0
        %3777 = vmatprep.mubr.f32.mxu0 %v3171
        %3778 = vmatmul.mubr.f32.gmra.mrb[0].mxu0 %v3170
        %v3779 = vpop.f32.mrb[0].mxu0
        %v3780 = vadd.f32 %v3555, %v3779
        %v3781 = vpop.f32.mrb[0].mxu0
        %3782 = vmatprep.mubr.f32.mxu0 %v3180
        %3783 = vmatmul.mubr.f32.gmra.mrb[0].mxu0 %v3179
        %v3784 = vpop.f32.mrb[0].mxu0
        %v3785 = vadd.f32 %v3560, %v3784
        %v3786 = vpop.f32.mrb[0].mxu0
        %3787 = vmatprep.mubr.f32.mxu0 %v3189
        %3788 = vmatmul.mubr.f32.gmra.mrb[0].mxu0 %v3188
        %v3789 = vpop.f32.mrb[0].mxu0
        %v3790 = vadd.f32 %v3565, %v3789
        %v3791 = vpop.f32.mrb[0].mxu0
        %3792 = vdwg.mxu0
        %3793 = vmatprep.subr.mxu0 0.0
        %3794 = vmatpush1.msra.mxu0 %v3259
        %3795 = vmatprep.subr.mxu0 0.0
        %3796 = vmatpush1.msra.mxu0 %v3260
        %3797 = vmatprep.subr.mxu0 0.0
        %3798 = vmatpush1.msra.mxu0 %v3261
        %3799 = vmatprep.subr.mxu0 0.0
        %3800 = vmatpush1.msra.mxu0 %v3262
        %3801 = vmatprep.subr.mxu0 0.0
        %3802 = vmatpush1.msra.mxu0 %v3263
        %3803 = vmatprep.subr.mxu0 0.0
        %3804 = vmatpush1.msra.mxu0 %v3264
        %3805 = vmatprep.subr.mxu0 0.0
        %3806 = vmatpush1.msra.mxu0 %v3265
        %3807 = vmatprep.subr.mxu0 0.0
        %3808 = vmatpush1.msra.mxu0 %v3266
        %3809 = vmatprep.subr.mxu0 0.0
        %3810 = vmatpush1.msra.mxu0 %v3267
        %3811 = vmatprep.subr.mxu0 0.0
        %3812 = vmatpush1.msra.mxu0 %v3268
        %3813 = vmatprep.subr.mxu0 0.0
        %3814 = vmatpush1.msra.mxu0 %v3269
        %3815 = vmatprep.subr.mxu0 0.0
        %3816 = vmatpush1.msra.mxu0 %v3270
        %3817 = vmatprep.subr.mxu0 0.0
        %3818 = vmatpush1.msra.mxu0 %v3271
        %3819 = vmatprep.subr.mxu0 0.0
        %3820 = vmatpush1.msra.mxu0 %v3272
        %3821 = vmatprep.subr.mxu0 0.0
        %3822 = vmatpush1.msra.mxu0 %v3273
        %3823 = vmatprep.subr.mxu0 0.0
        %3824 = vmatpush1.msra.mxu0 %v3274
        %3825 = vmatprep.subr.mxu0 0.0
        %3826 = vmatpush1.msra.mxu0 %v3275
        %3827 = vmatprep.subr.mxu0 0.0
        %3828 = vmatpush1.msra.mxu0 %v3276
        %3829 = vmatprep.subr.mxu0 0.0
        %3830 = vmatpush1.msra.mxu0 %v3277
        %3831 = vmatprep.subr.mxu0 0.0
        %3832 = vmatpush1.msra.mxu0 %v3278
        %3833 = vmatprep.subr.mxu0 0.0
        %3834 = vmatpush1.msra.mxu0 %v3279
        %3835 = vmatprep.subr.mxu0 0.0
        %3836 = vmatpush1.msra.mxu0 %v3280
        %3837 = vmatprep.subr.mxu0 0.0
        %3838 = vmatpush1.msra.mxu0 %v3281
        %3839 = vmatprep.subr.mxu0 0.0
        %3840 = vmatpush1.msra.mxu0 %v3282
        %3841 = vmatprep.subr.mxu0 0.0
        %3842 = vmatpush1.msra.mxu0 %v3283
        %3843 = vmatprep.subr.mxu0 0.0
        %3844 = vmatpush1.msra.mxu0 %v3284
        %3845 = vmatprep.subr.mxu0 0.0
        %3846 = vmatpush1.msra.mxu0 %v3285
        %3847 = vmatprep.subr.mxu0 0.0
        %3848 = vmatpush1.msra.mxu0 %v3286
        %3849 = vmatprep.subr.mxu0 0.0
        %3850 = vmatpush1.msra.mxu0 %v3287
        %3851 = vmatprep.subr.mxu0 0.0
        %3852 = vmatpush1.msra.mxu0 %v3288
        %3853 = vmatprep.subr.mxu0 0.0
        %3854 = vmatpush1.msra.mxu0 %v3289
        %3855 = vmatprep.subr.mxu0 0.0
        %3856 = vmatpush1.msra.mxu0 %v3290
        %3857 = vmatprep.mubr.f32.mxu0 %v2912
        %3858 = vmatmul.mubr.f32.gmra.mrb[0].mxu0 %v2911
        %v3859 = vpop.f32.mrb[0].mxu0
        %v3860 = vadd.f32 %v3635, %v3859
        %v3861 = vpop.f32.mrb[0].mxu0
        %3862 = vmatprep.mubr.f32.mxu0 %v2921
        %3863 = vmatmul.mubr.f32.gmra.mrb[0].mxu0 %v2920
        %v3864 = vpop.f32.mrb[0].mxu0
        %v3865 = vadd.f32 %v3640, %v3864
        %v3866 = vpop.f32.mrb[0].mxu0
        %3867 = vmatprep.mubr.f32.mxu0 %v2930
        %3868 = vmatmul.mubr.f32.gmra.mrb[0].mxu0 %v2929
        %v3869 = vpop.f32.mrb[0].mxu0
        %v3870 = vadd.f32 %v3645, %v3869
        %v3871 = vpop.f32.mrb[0].mxu0
        %3872 = vmatprep.mubr.f32.mxu0 %v2939
        %3873 = vmatmul.mubr.f32.gmra.mrb[0].mxu0 %v2938
        %v3874 = vpop.f32.mrb[0].mxu0
        %v3875 = vadd.f32 %v3650, %v3874
        %v3876 = vpop.f32.mrb[0].mxu0
        %3877 = vmatprep.mubr.f32.mxu0 %v2948
        %3878 = vmatmul.mubr.f32.gmra.mrb[0].mxu0 %v2947
        %v3879 = vpop.f32.mrb[0].mxu0
        %v3880 = vadd.f32 %v3655, %v3879
        %v3881 = vpop.f32.mrb[0].mxu0
        %3882 = vmatprep.mubr.f32.mxu0 %v2957
        %3883 = vmatmul.mubr.f32.gmra.mrb[0].mxu0 %v2956
        %v3884 = vpop.f32.mrb[0].mxu0
        %v3885 = vadd.f32 %v3660, %v3884
        %v3886 = vpop.f32.mrb[0].mxu0
        %3887 = vmatprep.mubr.f32.mxu0 %v2966
        %3888 = vmatmul.mubr.f32.gmra.mrb[0].mxu0 %v2965
        %v3889 = vpop.f32.mrb[0].mxu0
        %v3890 = vadd.f32 %v3665, %v3889
        %v3891 = vpop.f32.mrb[0].mxu0
        %3892 = vmatprep.mubr.f32.mxu0 %v2975
        %3893 = vmatmul.mubr.f32.gmra.mrb[0].mxu0 %v2974
        %v3894 = vpop.f32.mrb[0].mxu0
        %v3895 = vadd.f32 %v3670, %v3894
        %v3896 = vpop.f32.mrb[0].mxu0
        %3897 = vmatprep.mubr.f32.mxu0 %v2984
        %3898 = vmatmul.mubr.f32.gmra.mrb[0].mxu0 %v2983
        %v3899 = vpop.f32.mrb[0].mxu0
        %v3900 = vadd.f32 %v3675, %v3899
        %v3901 = vpop.f32.mrb[0].mxu0
        %3902 = vmatprep.mubr.f32.mxu0 %v2993
        %3903 = vmatmul.mubr.f32.gmra.mrb[0].mxu0 %v2992
        %v3904 = vpop.f32.mrb[0].mxu0
        %v3905 = vadd.f32 %v3680, %v3904
        %v3906 = vpop.f32.mrb[0].mxu0
        %3907 = vmatprep.mubr.f32.mxu0 %v3002
        %3908 = vmatmul.mubr.f32.gmra.mrb[0].mxu0 %v3001
        %v3909 = vpop.f32.mrb[0].mxu0
        %v3910 = vadd.f32 %v3685, %v3909
        %v3911 = vpop.f32.mrb[0].mxu0
        %3912 = vmatprep.mubr.f32.mxu0 %v3011
        %3913 = vmatmul.mubr.f32.gmra.mrb[0].mxu0 %v3010
        %v3914 = vpop.f32.mrb[0].mxu0
        %v3915 = vadd.f32 %v3690, %v3914
        %v3916 = vpop.f32.mrb[0].mxu0
        %3917 = vmatprep.mubr.f32.mxu0 %v3020
        %3918 = vmatmul.mubr.f32.gmra.mrb[0].mxu0 %v3019
        %v3919 = vpop.f32.mrb[0].mxu0
        %v3920 = vadd.f32 %v3695, %v3919
        %v3921 = vpop.f32.mrb[0].mxu0
        %3922 = vmatprep.mubr.f32.mxu0 %v3029
        %3923 = vmatmul.mubr.f32.gmra.mrb[0].mxu0 %v3028
        %v3924 = vpop.f32.mrb[0].mxu0
        %v3925 = vadd.f32 %v3700, %v3924
        %v3926 = vpop.f32.mrb[0].mxu0
        %3927 = vmatprep.mubr.f32.mxu0 %v3038
        %3928 = vmatmul.mubr.f32.gmra.mrb[0].mxu0 %v3037
        %v3929 = vpop.f32.mrb[0].mxu0
        %v3930 = vadd.f32 %v3705, %v3929
        %v3931 = vpop.f32.mrb[0].mxu0
        %3932 = vmatprep.mubr.f32.mxu0 %v3047
        %3933 = vmatmul.mubr.f32.gmra.mrb[0].mxu0 %v3046
        %v3934 = vpop.f32.mrb[0].mxu0
        %v3935 = vadd.f32 %v3710, %v3934
        %v3936 = vpop.f32.mrb[0].mxu0
        %3937 = vmatprep.mubr.f32.mxu0 %v3056
        %3938 = vmatmul.mubr.f32.gmra.mrb[0].mxu0 %v3055
        %v3939 = vpop.f32.mrb[0].mxu0
        %v3940 = vadd.f32 %v3715, %v3939
        %v3941 = vpop.f32.mrb[0].mxu0
        %3942 = vmatprep.mubr.f32.mxu0 %v3065
        %3943 = vmatmul.mubr.f32.gmra.mrb[0].mxu0 %v3064
        %v3944 = vpop.f32.mrb[0].mxu0
        %v3945 = vadd.f32 %v3720, %v3944
        %v3946 = vpop.f32.mrb[0].mxu0
        %3947 = vmatprep.mubr.f32.mxu0 %v3074
        %3948 = vmatmul.mubr.f32.gmra.mrb[0].mxu0 %v3073
        %v3949 = vpop.f32.mrb[0].mxu0
        %v3950 = vadd.f32 %v3725, %v3949
        %v3951 = vpop.f32.mrb[0].mxu0
        %3952 = vmatprep.mubr.f32.mxu0 %v3083
        %3953 = vmatmul.mubr.f32.gmra.mrb[0].mxu0 %v3082
        %v3954 = vpop.f32.mrb[0].mxu0
        %v3955 = vadd.f32 %v3730, %v3954
        %v3956 = vpop.f32.mrb[0].mxu0
        %3957 = vmatprep.mubr.f32.mxu0 %v3092
        %3958 = vmatmul.mubr.f32.gmra.mrb[0].mxu0 %v3091
        %v3959 = vpop.f32.mrb[0].mxu0
        %v3960 = vadd.f32 %v3735, %v3959
        %v3961 = vpop.f32.mrb[0].mxu0
        %3962 = vmatprep.mubr.f32.mxu0 %v3101
        %3963 = vmatmul.mubr.f32.gmra.mrb[0].mxu0 %v3100
        %v3964 = vpop.f32.mrb[0].mxu0
        %v3965 = vadd.f32 %v3740, %v3964
        %v3966 = vpop.f32.mrb[0].mxu0
        %3967 = vmatprep.mubr.f32.mxu0 %v3110
        %3968 = vmatmul.mubr.f32.gmra.mrb[0].mxu0 %v3109
        %v3969 = vpop.f32.mrb[0].mxu0
        %v3970 = vadd.f32 %v3745, %v3969
        %v3971 = vpop.f32.mrb[0].mxu0
        %3972 = vmatprep.mubr.f32.mxu0 %v3119
        %3973 = vmatmul.mubr.f32.gmra.mrb[0].mxu0 %v3118
        %v3974 = vpop.f32.mrb[0].mxu0
        %v3975 = vadd.f32 %v3750, %v3974
        %v3976 = vpop.f32.mrb[0].mxu0
        %3977 = vmatprep.mubr.f32.mxu0 %v3128
        %3978 = vmatmul.mubr.f32.gmra.mrb[0].mxu0 %v3127
        %v3979 = vpop.f32.mrb[0].mxu0
        %v3980 = vadd.f32 %v3755, %v3979
        %v3981 = vpop.f32.mrb[0].mxu0
        %3982 = vmatprep.mubr.f32.mxu0 %v3137
        %3983 = vmatmul.mubr.f32.gmra.mrb[0].mxu0 %v3136
        %v3984 = vpop.f32.mrb[0].mxu0
        %v3985 = vadd.f32 %v3760, %v3984
        %v3986 = vpop.f32.mrb[0].mxu0
        %3987 = vmatprep.mubr.f32.mxu0 %v3146
        %3988 = vmatmul.mubr.f32.gmra.mrb[0].mxu0 %v3145
        %v3989 = vpop.f32.mrb[0].mxu0
        %v3990 = vadd.f32 %v3765, %v3989
        %v3991 = vpop.f32.mrb[0].mxu0
        %3992 = vmatprep.mubr.f32.mxu0 %v3155
        %3993 = vmatmul.mubr.f32.gmra.mrb[0].mxu0 %v3154
        %v3994 = vpop.f32.mrb[0].mxu0
        %v3995 = vadd.f32 %v3770, %v3994
        %v3996 = vpop.f32.mrb[0].mxu0
        %3997 = vmatprep.mubr.f32.mxu0 %v3164
        %3998 = vmatmul.mubr.f32.gmra.mrb[0].mxu0 %v3163
        %v3999 = vpop.f32.mrb[0].mxu0
        %v4000 = vadd.f32 %v3775, %v3999
        %v4001 = vpop.f32.mrb[0].mxu0
        %4002 = vmatprep.mubr.f32.mxu0 %v3173
        %4003 = vmatmul.mubr.f32.gmra.mrb[0].mxu0 %v3172
        %v4004 = vpop.f32.mrb[0].mxu0
        %v4005 = vadd.f32 %v3780, %v4004
        %v4006 = vpop.f32.mrb[0].mxu0
        %4007 = vmatprep.mubr.f32.mxu0 %v3182
        %4008 = vmatmul.mubr.f32.gmra.mrb[0].mxu0 %v3181
        %v4009 = vpop.f32.mrb[0].mxu0
        %v4010 = vadd.f32 %v3785, %v4009
        %v4011 = vpop.f32.mrb[0].mxu0
        %4012 = vmatprep.mubr.f32.mxu0 %v3191
        %4013 = vmatmul.mubr.f32.gmra.mrb[0].mxu0 %v3190
        %v4014 = vpop.f32.mrb[0].mxu0
        %v4015 = vadd.f32 %v3790, %v4014
        %v4016 = vpop.f32.mrb[0].mxu0
        %4017 = vdwg.mxu0
        %4018 = vmatprep.subr.mxu0 0.0
        %4019 = vmatpush1.msra.mxu0 %v3291
        %4020 = vmatprep.subr.mxu0 0.0
        %4021 = vmatpush1.msra.mxu0 %v3292
        %4022 = vmatprep.subr.mxu0 0.0
        %4023 = vmatpush1.msra.mxu0 %v3293
        %4024 = vmatprep.subr.mxu0 0.0
        %4025 = vmatpush1.msra.mxu0 %v3294
        %4026 = vmatprep.subr.mxu0 0.0
        %4027 = vmatpush1.msra.mxu0 %v3295
        %4028 = vmatprep.subr.mxu0 0.0
        %4029 = vmatpush1.msra.mxu0 %v3296
        %4030 = vmatprep.subr.mxu0 0.0
        %4031 = vmatpush1.msra.mxu0 %v3297
        %4032 = vmatprep.subr.mxu0 0.0
        %4033 = vmatpush1.msra.mxu0 %v3298
        %4034 = vmatprep.subr.mxu0 0.0
        %4035 = vmatpush1.msra.mxu0 %v3299
        %4036 = vmatprep.subr.mxu0 0.0
        %4037 = vmatpush1.msra.mxu0 %v3300
        %4038 = vmatprep.subr.mxu0 0.0
        %4039 = vmatpush1.msra.mxu0 %v3301
        %4040 = vmatprep.subr.mxu0 0.0
        %4041 = vmatpush1.msra.mxu0 %v3302
        %4042 = vmatprep.subr.mxu0 0.0
        %4043 = vmatpush1.msra.mxu0 %v3303
        %4044 = vmatprep.subr.mxu0 0.0
        %4045 = vmatpush1.msra.mxu0 %v3304
        %4046 = vmatprep.subr.mxu0 0.0
        %4047 = vmatpush1.msra.mxu0 %v3305
        %4048 = vmatprep.subr.mxu0 0.0
        %4049 = vmatpush1.msra.mxu0 %v3306
        %4050 = vmatprep.subr.mxu0 0.0
        %4051 = vmatpush1.msra.mxu0 %v3307
        %4052 = vmatprep.subr.mxu0 0.0
        %4053 = vmatpush1.msra.mxu0 %v3308
        %4054 = vmatprep.subr.mxu0 0.0
        %4055 = vmatpush1.msra.mxu0 %v3309
        %4056 = vmatprep.subr.mxu0 0.0
        %4057 = vmatpush1.msra.mxu0 %v3310
        %4058 = vmatprep.subr.mxu0 0.0
        %4059 = vmatpush1.msra.mxu0 %v3311
        %4060 = vmatprep.subr.mxu0 0.0
        %4061 = vmatpush1.msra.mxu0 %v3312
        %4062 = vmatprep.subr.mxu0 0.0
        %4063 = vmatpush1.msra.mxu0 %v3313
        %4064 = vmatprep.subr.mxu0 0.0
        %4065 = vmatpush1.msra.mxu0 %v3314
        %4066 = vmatprep.subr.mxu0 0.0
        %4067 = vmatpush1.msra.mxu0 %v3315
        %4068 = vmatprep.subr.mxu0 0.0
        %4069 = vmatpush1.msra.mxu0 %v3316
        %4070 = vmatprep.subr.mxu0 0.0
        %4071 = vmatpush1.msra.mxu0 %v3317
        %4072 = vmatprep.subr.mxu0 0.0
        %4073 = vmatpush1.msra.mxu0 %v3318
        %4074 = vmatprep.subr.mxu0 0.0
        %4075 = vmatpush1.msra.mxu0 %v3319
        %4076 = vmatprep.subr.mxu0 0.0
        %4077 = vmatpush1.msra.mxu0 %v3320
        %4078 = vmatprep.subr.mxu0 0.0
        %4079 = vmatpush1.msra.mxu0 %v3321
        %4080 = vmatprep.subr.mxu0 0.0
        %4081 = vmatpush1.msra.mxu0 %v3322
        %4082 = vmatprep.mubr.f32.mxu0 %v2914
        %4083 = vmatmul.mubr.f32.gmra.mrb[0].mxu0 %v2913
        %v4084 = vpop.f32.mrb[0].mxu0
        %v4085 = vadd.f32 %v3860, %v4084
        %v4086 = vpop.f32.mrb[0].mxu0
        %4087 = vmatprep.mubr.f32.mxu0 %v2923
        %4088 = vmatmul.mubr.f32.gmra.mrb[0].mxu0 %v2922
        %v4089 = vpop.f32.mrb[0].mxu0
        %v4090 = vadd.f32 %v3865, %v4089
        %v4091 = vpop.f32.mrb[0].mxu0
        %4092 = vmatprep.mubr.f32.mxu0 %v2932
        %4093 = vmatmul.mubr.f32.gmra.mrb[0].mxu0 %v2931
        %v4094 = vpop.f32.mrb[0].mxu0
        %v4095 = vadd.f32 %v3870, %v4094
        %v4096 = vpop.f32.mrb[0].mxu0
        %4097 = vmatprep.mubr.f32.mxu0 %v2941
        %4098 = vmatmul.mubr.f32.gmra.mrb[0].mxu0 %v2940
        %v4099 = vpop.f32.mrb[0].mxu0
        %v4100 = vadd.f32 %v3875, %v4099
        %v4101 = vpop.f32.mrb[0].mxu0
        %4102 = vmatprep.mubr.f32.mxu0 %v2950
        %4103 = vmatmul.mubr.f32.gmra.mrb[0].mxu0 %v2949
        %v4104 = vpop.f32.mrb[0].mxu0
        %v4105 = vadd.f32 %v3880, %v4104
        %v4106 = vpop.f32.mrb[0].mxu0
        %4107 = vmatprep.mubr.f32.mxu0 %v2959
        %4108 = vmatmul.mubr.f32.gmra.mrb[0].mxu0 %v2958
        %v4109 = vpop.f32.mrb[0].mxu0
        %v4110 = vadd.f32 %v3885, %v4109
        %v4111 = vpop.f32.mrb[0].mxu0
        %4112 = vmatprep.mubr.f32.mxu0 %v2968
        %4113 = vmatmul.mubr.f32.gmra.mrb[0].mxu0 %v2967
        %v4114 = vpop.f32.mrb[0].mxu0
        %v4115 = vadd.f32 %v3890, %v4114
        %v4116 = vpop.f32.mrb[0].mxu0
        %4117 = vmatprep.mubr.f32.mxu0 %v2977
        %4118 = vmatmul.mubr.f32.gmra.mrb[0].mxu0 %v2976
        %v4119 = vpop.f32.mrb[0].mxu0
        %v4120 = vadd.f32 %v3895, %v4119
        %v4121 = vpop.f32.mrb[0].mxu0
        %4122 = vmatprep.mubr.f32.mxu0 %v2986
        %4123 = vmatmul.mubr.f32.gmra.mrb[0].mxu0 %v2985
        %v4124 = vpop.f32.mrb[0].mxu0
        %v4125 = vadd.f32 %v3900, %v4124
        %v4126 = vpop.f32.mrb[0].mxu0
        %4127 = vmatprep.mubr.f32.mxu0 %v2995
        %4128 = vmatmul.mubr.f32.gmra.mrb[0].mxu0 %v2994
        %v4129 = vpop.f32.mrb[0].mxu0
        %v4130 = vadd.f32 %v3905, %v4129
        %v4131 = vpop.f32.mrb[0].mxu0
        %4132 = vmatprep.mubr.f32.mxu0 %v3004
        %4133 = vmatmul.mubr.f32.gmra.mrb[0].mxu0 %v3003
        %v4134 = vpop.f32.mrb[0].mxu0
        %v4135 = vadd.f32 %v3910, %v4134
        %v4136 = vpop.f32.mrb[0].mxu0
        %4137 = vmatprep.mubr.f32.mxu0 %v3013
        %4138 = vmatmul.mubr.f32.gmra.mrb[0].mxu0 %v3012
        %v4139 = vpop.f32.mrb[0].mxu0
        %v4140 = vadd.f32 %v3915, %v4139
        %v4141 = vpop.f32.mrb[0].mxu0
        %4142 = vmatprep.mubr.f32.mxu0 %v3022
        %4143 = vmatmul.mubr.f32.gmra.mrb[0].mxu0 %v3021
        %v4144 = vpop.f32.mrb[0].mxu0
        %v4145 = vadd.f32 %v3920, %v4144
        %v4146 = vpop.f32.mrb[0].mxu0
        %4147 = vmatprep.mubr.f32.mxu0 %v3031
        %4148 = vmatmul.mubr.f32.gmra.mrb[0].mxu0 %v3030
        %v4149 = vpop.f32.mrb[0].mxu0
        %v4150 = vadd.f32 %v3925, %v4149
        %v4151 = vpop.f32.mrb[0].mxu0
        %4152 = vmatprep.mubr.f32.mxu0 %v3040
        %4153 = vmatmul.mubr.f32.gmra.mrb[0].mxu0 %v3039
        %v4154 = vpop.f32.mrb[0].mxu0
        %v4155 = vadd.f32 %v3930, %v4154
        %v4156 = vpop.f32.mrb[0].mxu0
        %4157 = vmatprep.mubr.f32.mxu0 %v3049
        %4158 = vmatmul.mubr.f32.gmra.mrb[0].mxu0 %v3048
        %v4159 = vpop.f32.mrb[0].mxu0
        %v4160 = vadd.f32 %v3935, %v4159
        %v4161 = vpop.f32.mrb[0].mxu0
        %4162 = vmatprep.mubr.f32.mxu0 %v3058
        %4163 = vmatmul.mubr.f32.gmra.mrb[0].mxu0 %v3057
        %v4164 = vpop.f32.mrb[0].mxu0
        %v4165 = vadd.f32 %v3940, %v4164
        %v4166 = vpop.f32.mrb[0].mxu0
        %4167 = vmatprep.mubr.f32.mxu0 %v3067
        %4168 = vmatmul.mubr.f32.gmra.mrb[0].mxu0 %v3066
        %v4169 = vpop.f32.mrb[0].mxu0
        %v4170 = vadd.f32 %v3945, %v4169
        %v4171 = vpop.f32.mrb[0].mxu0
        %4172 = vmatprep.mubr.f32.mxu0 %v3076
        %4173 = vmatmul.mubr.f32.gmra.mrb[0].mxu0 %v3075
        %v4174 = vpop.f32.mrb[0].mxu0
        %v4175 = vadd.f32 %v3950, %v4174
        %v4176 = vpop.f32.mrb[0].mxu0
        %4177 = vmatprep.mubr.f32.mxu0 %v3085
        %4178 = vmatmul.mubr.f32.gmra.mrb[0].mxu0 %v3084
        %v4179 = vpop.f32.mrb[0].mxu0
        %v4180 = vadd.f32 %v3955, %v4179
        %v4181 = vpop.f32.mrb[0].mxu0
        %4182 = vmatprep.mubr.f32.mxu0 %v3094
        %4183 = vmatmul.mubr.f32.gmra.mrb[0].mxu0 %v3093
        %v4184 = vpop.f32.mrb[0].mxu0
        %v4185 = vadd.f32 %v3960, %v4184
        %v4186 = vpop.f32.mrb[0].mxu0
        %4187 = vmatprep.mubr.f32.mxu0 %v3103
        %4188 = vmatmul.mubr.f32.gmra.mrb[0].mxu0 %v3102
        %v4189 = vpop.f32.mrb[0].mxu0
        %v4190 = vadd.f32 %v3965, %v4189
        %v4191 = vpop.f32.mrb[0].mxu0
        %4192 = vmatprep.mubr.f32.mxu0 %v3112
        %4193 = vmatmul.mubr.f32.gmra.mrb[0].mxu0 %v3111
        %v4194 = vpop.f32.mrb[0].mxu0
        %v4195 = vadd.f32 %v3970, %v4194
        %v4196 = vpop.f32.mrb[0].mxu0
        %4197 = vmatprep.mubr.f32.mxu0 %v3121
        %4198 = vmatmul.mubr.f32.gmra.mrb[0].mxu0 %v3120
        %v4199 = vpop.f32.mrb[0].mxu0
        %v4200 = vadd.f32 %v3975, %v4199
        %v4201 = vpop.f32.mrb[0].mxu0
        %4202 = vmatprep.mubr.f32.mxu0 %v3130
        %4203 = vmatmul.mubr.f32.gmra.mrb[0].mxu0 %v3129
        %v4204 = vpop.f32.mrb[0].mxu0
        %v4205 = vadd.f32 %v3980, %v4204
        %v4206 = vpop.f32.mrb[0].mxu0
        %4207 = vmatprep.mubr.f32.mxu0 %v3139
        %4208 = vmatmul.mubr.f32.gmra.mrb[0].mxu0 %v3138
        %v4209 = vpop.f32.mrb[0].mxu0
        %v4210 = vadd.f32 %v3985, %v4209
        %v4211 = vpop.f32.mrb[0].mxu0
        %4212 = vmatprep.mubr.f32.mxu0 %v3148
        %4213 = vmatmul.mubr.f32.gmra.mrb[0].mxu0 %v3147
        %v4214 = vpop.f32.mrb[0].mxu0
        %v4215 = vadd.f32 %v3990, %v4214
        %v4216 = vpop.f32.mrb[0].mxu0
        %4217 = vmatprep.mubr.f32.mxu0 %v3157
        %4218 = vmatmul.mubr.f32.gmra.mrb[0].mxu0 %v3156
        %v4219 = vpop.f32.mrb[0].mxu0
        %v4220 = vadd.f32 %v3995, %v4219
        %v4221 = vpop.f32.mrb[0].mxu0
        %4222 = vmatprep.mubr.f32.mxu0 %v3166
        %4223 = vmatmul.mubr.f32.gmra.mrb[0].mxu0 %v3165
        %v4224 = vpop.f32.mrb[0].mxu0
        %v4225 = vadd.f32 %v4000, %v4224
        %v4226 = vpop.f32.mrb[0].mxu0
        %4227 = vmatprep.mubr.f32.mxu0 %v3175
        %4228 = vmatmul.mubr.f32.gmra.mrb[0].mxu0 %v3174
        %v4229 = vpop.f32.mrb[0].mxu0
        %v4230 = vadd.f32 %v4005, %v4229
        %v4231 = vpop.f32.mrb[0].mxu0
        %4232 = vmatprep.mubr.f32.mxu0 %v3184
        %4233 = vmatmul.mubr.f32.gmra.mrb[0].mxu0 %v3183
        %v4234 = vpop.f32.mrb[0].mxu0
        %v4235 = vadd.f32 %v4010, %v4234
        %v4236 = vpop.f32.mrb[0].mxu0
        %4237 = vmatprep.mubr.f32.mxu0 %v3193
        %4238 = vmatmul.mubr.f32.gmra.mrb[0].mxu0 %v3192
        %v4239 = vpop.f32.mrb[0].mxu0
        %v4240 = vadd.f32 %v4015, %v4239
        %v4241 = vpop.f32.mrb[0].mxu0
        %4242 = vdwg.mxu0
        %4243 = vmatprep.subr.mxu0 0.0
        %4244 = vmatpush1.msra.mxu0 %v3323
        %4245 = vmatprep.subr.mxu0 0.0
        %4246 = vmatpush1.msra.mxu0 %v3324
        %4247 = vmatprep.subr.mxu0 0.0
        %4248 = vmatpush1.msra.mxu0 %v3325
        %4249 = vmatprep.subr.mxu0 0.0
        %4250 = vmatpush1.msra.mxu0 %v3326
        %4251 = vmatprep.subr.mxu0 0.0
        %4252 = vmatpush1.msra.mxu0 %v3327
        %4253 = vmatprep.subr.mxu0 0.0
        %4254 = vmatpush1.msra.mxu0 %v3328
        %4255 = vmatprep.subr.mxu0 0.0
        %4256 = vmatpush1.msra.mxu0 %v3329
        %4257 = vmatprep.subr.mxu0 0.0
        %4258 = vmatpush1.msra.mxu0 %v3330
        %4259 = vmatprep.subr.mxu0 0.0
        %4260 = vmatpush1.msra.mxu0 %v3331
        %4261 = vmatprep.subr.mxu0 0.0
        %4262 = vmatpush1.msra.mxu0 %v3332
        %4263 = vmatprep.subr.mxu0 0.0
        %4264 = vmatpush1.msra.mxu0 %v3333
        %4265 = vmatprep.subr.mxu0 0.0
        %4266 = vmatpush1.msra.mxu0 %v3334
        %4267 = vmatprep.subr.mxu0 0.0
        %4268 = vmatpush1.msra.mxu0 %v3335
        %4269 = vmatprep.subr.mxu0 0.0
        %4270 = vmatpush1.msra.mxu0 %v3336
        %4271 = vmatprep.subr.mxu0 0.0
        %4272 = vmatpush1.msra.mxu0 %v3337
        %4273 = vmatprep.subr.mxu0 0.0
        %4274 = vmatpush1.msra.mxu0 %v3338
        %4275 = vmatprep.subr.mxu0 0.0
        %4276 = vmatpush1.msra.mxu0 0.0
        %4277 = vmatprep.subr.mxu0 0.0
        %4278 = vmatpush1.msra.mxu0 0.0
        %4279 = vmatprep.subr.mxu0 0.0
        %4280 = vmatpush1.msra.mxu0 0.0
        %4281 = vmatprep.subr.mxu0 0.0
        %4282 = vmatpush1.msra.mxu0 0.0
        %4283 = vmatprep.subr.mxu0 0.0
        %4284 = vmatpush1.msra.mxu0 0.0
        %4285 = vmatprep.subr.mxu0 0.0
        %4286 = vmatpush1.msra.mxu0 0.0
        %4287 = vmatprep.subr.mxu0 0.0
        %4288 = vmatpush1.msra.mxu0 0.0
        %4289 = vmatprep.subr.mxu0 0.0
        %4290 = vmatpush1.msra.mxu0 0.0
        %4291 = vmatprep.subr.mxu0 0.0
        %4292 = vmatpush1.msra.mxu0 0.0
        %4293 = vmatprep.subr.mxu0 0.0
        %4294 = vmatpush1.msra.mxu0 0.0
        %4295 = vmatprep.subr.mxu0 0.0
        %4296 = vmatpush1.msra.mxu0 0.0
        %4297 = vmatprep.subr.mxu0 0.0
        %4298 = vmatpush1.msra.mxu0 0.0
        %4299 = vmatprep.subr.mxu0 0.0
        %4300 = vmatpush1.msra.mxu0 0.0
        %4301 = vmatprep.subr.mxu0 0.0
        %4302 = vmatpush1.msra.mxu0 0.0
        %4303 = vmatprep.subr.mxu0 0.0
        %4304 = vmatpush1.msra.mxu0 0.0
        %4305 = vmatprep.subr.mxu0 0.0
        %4306 = vmatpush1.msra.mxu0 0.0
        %4307 = vmatprep.mubr.f32.mxu0 0.0
        %4308 = vmatmul.mubr.f32.gmra.mrb[0].mxu0 %v2915
        %v4309 = vpop.f32.mrb[0].mxu0
        %v4310 = vadd.f32 %v4085, %v4309
        %v4311 = vpop.f32.mrb[0].mxu0
        %4312 = vmatprep.mubr.f32.mxu0 0.0
        %4313 = vmatmul.mubr.f32.gmra.mrb[0].mxu0 %v2924
        %v4314 = vpop.f32.mrb[0].mxu0
        %v4315 = vadd.f32 %v4090, %v4314
        %v4316 = vpop.f32.mrb[0].mxu0
        %4317 = vmatprep.mubr.f32.mxu0 0.0
        %4318 = vmatmul.mubr.f32.gmra.mrb[0].mxu0 %v2933
        %v4319 = vpop.f32.mrb[0].mxu0
        %v4320 = vadd.f32 %v4095, %v4319
        %v4321 = vpop.f32.mrb[0].mxu0
        %4322 = vmatprep.mubr.f32.mxu0 0.0
        %4323 = vmatmul.mubr.f32.gmra.mrb[0].mxu0 %v2942
        %v4324 = vpop.f32.mrb[0].mxu0
        %v4325 = vadd.f32 %v4100, %v4324
        %v4326 = vpop.f32.mrb[0].mxu0
        %4327 = vmatprep.mubr.f32.mxu0 0.0
        %4328 = vmatmul.mubr.f32.gmra.mrb[0].mxu0 %v2951
        %v4329 = vpop.f32.mrb[0].mxu0
        %v4330 = vadd.f32 %v4105, %v4329
        %v4331 = vpop.f32.mrb[0].mxu0
        %4332 = vmatprep.mubr.f32.mxu0 0.0
        %4333 = vmatmul.mubr.f32.gmra.mrb[0].mxu0 %v2960
        %v4334 = vpop.f32.mrb[0].mxu0
        %v4335 = vadd.f32 %v4110, %v4334
        %v4336 = vpop.f32.mrb[0].mxu0
        %4337 = vmatprep.mubr.f32.mxu0 0.0
        %4338 = vmatmul.mubr.f32.gmra.mrb[0].mxu0 %v2969
        %v4339 = vpop.f32.mrb[0].mxu0
        %v4340 = vadd.f32 %v4115, %v4339
        %v4341 = vpop.f32.mrb[0].mxu0
        %4342 = vmatprep.mubr.f32.mxu0 0.0
        %4343 = vmatmul.mubr.f32.gmra.mrb[0].mxu0 %v2978
        %v4344 = vpop.f32.mrb[0].mxu0
        %v4345 = vadd.f32 %v4120, %v4344
        %v4346 = vpop.f32.mrb[0].mxu0
        %4347 = vmatprep.mubr.f32.mxu0 0.0
        %4348 = vmatmul.mubr.f32.gmra.mrb[0].mxu0 %v2987
        %v4349 = vpop.f32.mrb[0].mxu0
        %v4350 = vadd.f32 %v4125, %v4349
        %v4351 = vpop.f32.mrb[0].mxu0
        %4352 = vmatprep.mubr.f32.mxu0 0.0
        %4353 = vmatmul.mubr.f32.gmra.mrb[0].mxu0 %v2996
        %v4354 = vpop.f32.mrb[0].mxu0
        %v4355 = vadd.f32 %v4130, %v4354
        %v4356 = vpop.f32.mrb[0].mxu0
        %4357 = vmatprep.mubr.f32.mxu0 0.0
        %4358 = vmatmul.mubr.f32.gmra.mrb[0].mxu0 %v3005
        %v4359 = vpop.f32.mrb[0].mxu0
        %v4360 = vadd.f32 %v4135, %v4359
        %v4361 = vpop.f32.mrb[0].mxu0
        %4362 = vmatprep.mubr.f32.mxu0 0.0
        %4363 = vmatmul.mubr.f32.gmra.mrb[0].mxu0 %v3014
        %v4364 = vpop.f32.mrb[0].mxu0
        %v4365 = vadd.f32 %v4140, %v4364
        %v4366 = vpop.f32.mrb[0].mxu0
        %4367 = vmatprep.mubr.f32.mxu0 0.0
        %4368 = vmatmul.mubr.f32.gmra.mrb[0].mxu0 %v3023
        %v4369 = vpop.f32.mrb[0].mxu0
        %v4370 = vadd.f32 %v4145, %v4369
        %v4371 = vpop.f32.mrb[0].mxu0
        %4372 = vmatprep.mubr.f32.mxu0 0.0
        %4373 = vmatmul.mubr.f32.gmra.mrb[0].mxu0 %v3032
        %v4374 = vpop.f32.mrb[0].mxu0
        %v4375 = vadd.f32 %v4150, %v4374
        %v4376 = vpop.f32.mrb[0].mxu0
        %4377 = vmatprep.mubr.f32.mxu0 0.0
        %4378 = vmatmul.mubr.f32.gmra.mrb[0].mxu0 %v3041
        %v4379 = vpop.f32.mrb[0].mxu0
        %v4380 = vadd.f32 %v4155, %v4379
        %v4381 = vpop.f32.mrb[0].mxu0
        %4382 = vmatprep.mubr.f32.mxu0 0.0
        %4383 = vmatmul.mubr.f32.gmra.mrb[0].mxu0 %v3050
        %v4384 = vpop.f32.mrb[0].mxu0
        %v4385 = vadd.f32 %v4160, %v4384
        %v4386 = vpop.f32.mrb[0].mxu0
        %4387 = vmatprep.mubr.f32.mxu0 0.0
        %4388 = vmatmul.mubr.f32.gmra.mrb[0].mxu0 %v3059
        %v4389 = vpop.f32.mrb[0].mxu0
        %v4390 = vadd.f32 %v4165, %v4389
        %v4391 = vpop.f32.mrb[0].mxu0
        %4392 = vmatprep.mubr.f32.mxu0 0.0
        %4393 = vmatmul.mubr.f32.gmra.mrb[0].mxu0 %v3068
        %v4394 = vpop.f32.mrb[0].mxu0
        %v4395 = vadd.f32 %v4170, %v4394
        %v4396 = vpop.f32.mrb[0].mxu0
        %4397 = vmatprep.mubr.f32.mxu0 0.0
        %4398 = vmatmul.mubr.f32.gmra.mrb[0].mxu0 %v3077
        %v4399 = vpop.f32.mrb[0].mxu0
        %v4400 = vadd.f32 %v4175, %v4399
        %v4401 = vpop.f32.mrb[0].mxu0
        %4402 = vmatprep.mubr.f32.mxu0 0.0
        %4403 = vmatmul.mubr.f32.gmra.mrb[0].mxu0 %v3086
        %v4404 = vpop.f32.mrb[0].mxu0
        %v4405 = vadd.f32 %v4180, %v4404
        %v4406 = vpop.f32.mrb[0].mxu0
        %4407 = vmatprep.mubr.f32.mxu0 0.0
        %4408 = vmatmul.mubr.f32.gmra.mrb[0].mxu0 %v3095
        %v4409 = vpop.f32.mrb[0].mxu0
        %v4410 = vadd.f32 %v4185, %v4409
        %v4411 = vpop.f32.mrb[0].mxu0
        %4412 = vmatprep.mubr.f32.mxu0 0.0
        %4413 = vmatmul.mubr.f32.gmra.mrb[0].mxu0 %v3104
        %v4414 = vpop.f32.mrb[0].mxu0
        %v4415 = vadd.f32 %v4190, %v4414
        %v4416 = vpop.f32.mrb[0].mxu0
        %4417 = vmatprep.mubr.f32.mxu0 0.0
        %4418 = vmatmul.mubr.f32.gmra.mrb[0].mxu0 %v3113
        %v4419 = vpop.f32.mrb[0].mxu0
        %v4420 = vadd.f32 %v4195, %v4419
        %v4421 = vpop.f32.mrb[0].mxu0
        %4422 = vmatprep.mubr.f32.mxu0 0.0
        %4423 = vmatmul.mubr.f32.gmra.mrb[0].mxu0 %v3122
        %v4424 = vpop.f32.mrb[0].mxu0
        %v4425 = vadd.f32 %v4200, %v4424
        %v4426 = vpop.f32.mrb[0].mxu0
        %4427 = vmatprep.mubr.f32.mxu0 0.0
        %4428 = vmatmul.mubr.f32.gmra.mrb[0].mxu0 %v3131
        %v4429 = vpop.f32.mrb[0].mxu0
        %v4430 = vadd.f32 %v4205, %v4429
        %v4431 = vpop.f32.mrb[0].mxu0
        %4432 = vmatprep.mubr.f32.mxu0 0.0
        %4433 = vmatmul.mubr.f32.gmra.mrb[0].mxu0 %v3140
        %v4434 = vpop.f32.mrb[0].mxu0
        %v4435 = vadd.f32 %v4210, %v4434
        %v4436 = vpop.f32.mrb[0].mxu0
        %4437 = vmatprep.mubr.f32.mxu0 0.0
        %4438 = vmatmul.mubr.f32.gmra.mrb[0].mxu0 %v3149
        %v4439 = vpop.f32.mrb[0].mxu0
        %v4440 = vadd.f32 %v4215, %v4439
        %v4441 = vpop.f32.mrb[0].mxu0
        %4442 = vmatprep.mubr.f32.mxu0 0.0
        %4443 = vmatmul.mubr.f32.gmra.mrb[0].mxu0 %v3158
        %v4444 = vpop.f32.mrb[0].mxu0
        %v4445 = vadd.f32 %v4220, %v4444
        %v4446 = vpop.f32.mrb[0].mxu0
        %4447 = vmatprep.mubr.f32.mxu0 0.0
        %4448 = vmatmul.mubr.f32.gmra.mrb[0].mxu0 %v3167
        %v4449 = vpop.f32.mrb[0].mxu0
        %v4450 = vadd.f32 %v4225, %v4449
        %v4451 = vpop.f32.mrb[0].mxu0
        %4452 = vmatprep.mubr.f32.mxu0 0.0
        %4453 = vmatmul.mubr.f32.gmra.mrb[0].mxu0 %v3176
        %v4454 = vpop.f32.mrb[0].mxu0
        %v4455 = vadd.f32 %v4230, %v4454
        %v4456 = vpop.f32.mrb[0].mxu0
        %4457 = vmatprep.mubr.f32.mxu0 0.0
        %4458 = vmatmul.mubr.f32.gmra.mrb[0].mxu0 %v3185
        %v4459 = vpop.f32.mrb[0].mxu0
        %v4460 = vadd.f32 %v4235, %v4459
        %v4461 = vpop.f32.mrb[0].mxu0
        %4462 = vmatprep.mubr.f32.mxu0 0.0
        %4463 = vmatmul.mubr.f32.gmra.mrb[0].mxu0 %v3194
        %v4464 = vpop.f32.mrb[0].mxu0
        %v4465 = vadd.f32 %v4240, %v4464
        %v4466 = vpop.f32.mrb[0].mxu0
        %4467 = vdwg.mxu0
        %v4468 = vadd.f32 %v4310, %v286
        %v4469 = vadd.f32 %v4315, %v287
        %v4470 = vadd.f32 %v4320, %v288
        %v4471 = vadd.f32 %v4325, %v289
        %v4472 = vadd.f32 %v4330, %v290
        %v4473 = vadd.f32 %v4335, %v291
        %v4474 = vadd.f32 %v4340, %v292
        %v4475 = vadd.f32 %v4345, %v293
        %v4476 = vadd.f32 %v4350, %v294
        %v4477 = vadd.f32 %v4355, %v295
        %v4478 = vadd.f32 %v4360, %v296
        %v4479 = vadd.f32 %v4365, %v297
        %v4480 = vadd.f32 %v4370, %v298
        %v4481 = vadd.f32 %v4375, %v299
        %v4482 = vadd.f32 %v4380, %v300
        %v4483 = vadd.f32 %v4385, %v301
        %v4484 = vadd.f32 %v4390, %v302
        %v4485 = vadd.f32 %v4395, %v303
        %v4486 = vadd.f32 %v4400, %v304
        %v4487 = vadd.f32 %v4405, %v305
        %v4488 = vadd.f32 %v4410, %v306
        %v4489 = vadd.f32 %v4415, %v307
        %v4490 = vadd.f32 %v4420, %v308
        %v4491 = vadd.f32 %v4425, %v309
        %v4492 = vadd.f32 %v4430, %v310
        %v4493 = vadd.f32 %v4435, %v311
        %v4494 = vadd.f32 %v4440, %v312
        %v4495 = vadd.f32 %v4445, %v313
        %v4496 = vadd.f32 %v4450, %v314
        %v4497 = vadd.f32 %v4455, %v315
        %v4498 = vadd.f32 %v4460, %v316
        %v4499 = vadd.f32 %v4465, %v317
        %4500 = vst [vmem:[%s244] sm:$0xff] %v4468
        %4501 = vst [vmem:[%s244 + $0x8] sm:$0xff] %v4469
        %4502 = vst [vmem:[%s244 + $0x10] sm:$0xff] %v4470
        %4503 = vst [vmem:[%s244 + $0x18] sm:$0xff] %v4471
        %4504 = vst [vmem:[%s244 + $0x20] sm:$0xff] %v4472
        %4505 = vst [vmem:[%s244 + $0x28] sm:$0xff] %v4473
        %4506 = vst [vmem:[%s244 + $0x30] sm:$0xff] %v4474
        %4507 = vst [vmem:[%s244 + $0x38] sm:$0xff] %v4475
        %4508 = vst [vmem:[%s244 + $0x40] sm:$0xff] %v4476
        %4509 = vst [vmem:[%s244 + $0x48] sm:$0xff] %v4477
        %4510 = vst [vmem:[%s244 + $0x50] sm:$0xff] %v4478
        %4511 = vst [vmem:[%s244 + $0x58] sm:$0xff] %v4479
        %4512 = vst [vmem:[%s244 + $0x60] sm:$0xff] %v4480
        %4513 = vst [vmem:[%s244 + $0x68] sm:$0xff] %v4481
        %4514 = vst [vmem:[%s244 + $0x70] sm:$0xff] %v4482
        %4515 = vst [vmem:[%s244 + $0x78] sm:$0xff] %v4483
        %4516 = vst [vmem:[%s244 + $0x80] sm:$0xff] %v4484
        %4517 = vst [vmem:[%s244 + $0x88] sm:$0xff] %v4485
        %4518 = vst [vmem:[%s244 + $0x90] sm:$0xff] %v4486
        %4519 = vst [vmem:[%s244 + $0x98] sm:$0xff] %v4487
        %4520 = vst [vmem:[%s244 + $0xa0] sm:$0xff] %v4488
        %4521 = vst [vmem:[%s244 + $0xa8] sm:$0xff] %v4489
        %4522 = vst [vmem:[%s244 + $0xb0] sm:$0xff] %v4490
        %4523 = vst [vmem:[%s244 + $0xb8] sm:$0xff] %v4491
        %4524 = vst [vmem:[%s244 + $0xc0] sm:$0xff] %v4492
        %4525 = vst [vmem:[%s244 + $0xc8] sm:$0xff] %v4493
        %4526 = vst [vmem:[%s244 + $0xd0] sm:$0xff] %v4494
        %4527 = vst [vmem:[%s244 + $0xd8] sm:$0xff] %v4495
        %4528 = vst [vmem:[%s244 + $0xe0] sm:$0xff] %v4496
        %4529 = vst [vmem:[%s244 + $0xe8] sm:$0xff] %v4497
        %4530 = vst [vmem:[%s244 + $0xf0] sm:$0xff] %v4498
        %4531 = vst [vmem:[%s244 + $0xf8] sm:$0xff] %v4499
        %s4532 = sand.u32 %s119, 1
        %s4533 = scalar_lea.sflag [#allocation6], %s4532
        %s4534 = sand.u32 %s119, 1
        %s4535 = smul.addr %s4534, 256
        %s4536 = scalar_lea.vmem [#allocation10], %s4535
        // Predicated region
        $region49: #{tpu_custom_call.1} parent=35 // pred_check
          %p4537 = pneg %p129
        $region50: #{tpu_custom_call.1} parent=35 // pred_check_branch
          %4539 = sbr.rel (%p4537) target = $region52
        $region51: #{tpu_custom_call.1} parent=35 // pred_region
          %s4541 = ssub.s32 4096, 4096
          %4542 = vsyncadd %s4533, %s4541
          %s4543 = smul.addr %s22, 32
          %s4544 = smul.addr %s4543, 128
          %s4545 = scalar_lea.hbm %s4, %s4544
          %s4546 = sshll.u32 %s4536, 4
          %s4547 = int_to_ptr.vmem [resolvable:$true] %s4546
          %4552 = dma.vmem_to_hbm [thread:$0]  %s4547, 4096, %s4545, %s4533, 128, 128, 8
        $region52: #{tpu_custom_call.1} parent=35 // pred_fallthru
          _
      $region36: #{tpu_custom_call.1} parent=5 // pred_fallthru
        _
      %p4553 = scmp.le.s32.totalorder 2, %s17
      // Predicated region
      $region53: #{tpu_custom_call.1} parent=5 // pred_check
        %p4554 = pneg %p4553
      $region54: #{tpu_custom_call.1} parent=5 // pred_check_branch
        %4556 = sbr.rel (%p4554) target = $region56
      $region55: #{tpu_custom_call.1} parent=5 // pred_region
        %s4557 = ssub.s32 %s17, 2
        // Predicated region
        $region57: #{tpu_custom_call.1} parent=55 // pred_check
          %p4558 = pneg %p135
        $region58: #{tpu_custom_call.1} parent=55 // pred_check_branch
          %4560 = sbr.rel (%p4558) target = $region60
        $region59: #{tpu_custom_call.1} parent=55 // pred_region
          %s4561 = sand.u32 %s120, 1
          %s4562 = scalar_lea.sflag [#allocation6], %s4561
          %s4563 = sand.u32 %s120, 1
          %s4564 = smul.addr %s4563, 256
          %s4565 = scalar_lea.vmem [#allocation10], %s4564
          %4566 = dma.done %s4562, 4096
        $region60: #{tpu_custom_call.1} parent=55 // pred_fallthru
          _
      $region56: #{tpu_custom_call.1} parent=5 // pred_fallthru
        _
    $region6: #{tpu_custom_call.1} parent=1 // loop_footer
      %s21 = sadd.s32 1, %s17
    $region7: #{tpu_custom_call.1} parent=1 // loop_footer_branch
      %16 = sbr.rel target = $region3
    $region8: #{tpu_custom_call.1} parent=1 // loop_exit
      _
    %4567 = vsyncpa [#allocation5], 1
    %s4568 = scalar_lea.sflag [#allocation5], 1
    %4569 = vsyncpa %s4568, 1
    %4570 = vsyncpa [#allocation8], 1
    %4571 = vsyncpa [#allocation6], 1
    %s4572 = scalar_lea.sflag [#allocation6], 1
    %4573 = vsyncpa %s4572, 1

</llo_original>
